<compile_context>
chip_gen: v5e
topology: v5e:2x2
jax: 0.10.0
libtpu: 0.0.40
codegen_flags: <defaults>
</compile_context>

<pallas_src>
import jax
import jax.numpy as jnp
from jax import lax
from jax.experimental import pallas as pl
from jax.experimental.pallas import tpu as pltpu

LANE = 128
SUBLANE = 8
# 48 MiB is safe on every generation (v7x: 64 MiB/TC physical); raise to
# ~96 MiB on v5e/v6e (128 MiB physical) when sweeping larger t_blk.
_VMEM_LIMIT_BYTES = 48 * 1024 * 1024


def _round_up(x, m):
    return (x + m - 1) // m * m


# ----------------------------------------------------------------------------
# Fused multi-layer LSTM + MLP-head kernel (time-tiled, h/c carried in VMEM)
# ----------------------------------------------------------------------------
def _make_fused_kernel(num_layers, t_blk, bp, hp, op, din):
    """Builds the fused kernel for static (L, T_BLK, BP_BLK, HP, OP, Din)."""
    G = 4 * hp
    unroll = t_blk if t_blk <= 16 else 8
    bf = jnp.bfloat16

    def kernel(*refs):
        if num_layers > 1:
            (alpha_ref, x_ref, w_ih0_ref, w_ihr_ref, w_hh_ref, b_ref,
             w1_ref, b1_ref, w2_ref, b2_ref, out_ref,
             h_scr, c_scr, seq_scr, xg_scr) = refs
        else:
            (alpha_ref, x_ref, w_ih0_ref, w_hh_ref, b_ref,
             w1_ref, b1_ref, w2_ref, b2_ref, out_ref,
             h_scr, c_scr, seq_scr, xg_scr) = refs
            w_ihr_ref = None

        # zero the recurrent carry at the first time tile of each batch block
        @pl.when(pl.program_id(1) == 0)
        def _init():
            h_scr[...] = jnp.zeros_like(h_scr)
            c_scr[...] = jnp.zeros_like(c_scr)

        def run_layer(layer, x_flat_bf16):
            # hoisted input projection: one big MXU matmul per (layer, tile)
            w_ih = w_ih0_ref[...] if layer == 0 else w_ihr_ref[layer - 1]
            xg = jnp.dot(x_flat_bf16, w_ih, preferred_element_type=jnp.float32)
            xg = xg + b_ref[layer]                               # (t_blk*bp, 4HP) f32
            xg_scr[...] = xg.reshape(t_blk, bp, G)

            w_hh = w_hh_ref[layer]                               # (HP, 4HP) bf16, resident

            def step(t, carry):
                h_prev = h_scr[layer]                            # (bp, HP) f32
                gates = xg_scr[t] + jnp.dot(
                    h_prev.astype(bf), w_hh,
                    preferred_element_type=jnp.float32)          # (bp, 4HP) f32
                # lane-aligned gate slices (HP is a multiple of 128)
                i = jax.nn.sigmoid(gates[:, 0 * hp:1 * hp])
                f = jax.nn.sigmoid(gates[:, 1 * hp:2 * hp])
                g = jnp.tanh(gates[:, 2 * hp:3 * hp])
                o = jax.nn.sigmoid(gates[:, 3 * hp:4 * hp])
                c = f * c_scr[layer] + i * g
                h = o * jnp.tanh(c)
                c_scr[layer] = c
                h_scr[layer] = h
                seq_scr[t] = h                                   # lane-dense store
                return carry

            lax.fori_loop(0, t_blk, step, 0, unroll=unroll)

        # layer 0 consumes the input tile; deeper layers consume seq_scr
        run_layer(0, x_ref[...].reshape(t_blk * bp, din).astype(bf))
        for l in range(1, num_layers):
            run_layer(l, seq_scr[...].reshape(t_blk * bp, hp).astype(bf))

        # fused MLP head on the VMEM-resident tile of final hidden states
        a = alpha_ref[0]
        hb = seq_scr[...].reshape(t_blk * bp, hp).astype(bf)
        h1 = jnp.dot(hb, w1_ref[...], preferred_element_type=jnp.float32) + b1_ref[...]
        h1 = jnp.maximum(h1, 0.0) + a * jnp.minimum(h1, 0.0)
        y = jnp.dot(h1.astype(bf), w2_ref[...],
                    preferred_element_type=jnp.float32) + b2_ref[...]
        y = jnp.maximum(y, 0.0) + a * jnp.minimum(y, 0.0)
        out_ref[...] = y.reshape(t_blk, bp, op)

    return kernel


def fused_lstm_mlp_pallas(x_tbd, kp, *, t_blk, bp_blk):
    """x_tbd: (T_pad, BP, Din) f32 time-major; BP % bp_blk == 0, T_pad % t_blk == 0."""
    T_pad, BP, Din = x_tbd.shape
    HP, OP, L = kp["HP"], kp["OP"], kp["L"]
    G = 4 * HP
    assert T_pad % t_blk == 0 and BP % bp_blk == 0 and bp_blk % SUBLANE == 0

    kernel = _make_fused_kernel(L, t_blk, bp_blk, HP, OP, Din)

    def _resident(shape):
        # constant-index block -> single-buffered (no pointless double buffer)
        if len(shape) == 2:
            return pl.BlockSpec(shape, lambda b, tb: (0, 0),
                                pipeline_mode=pl.Buffered(1))
        return pl.BlockSpec(shape, lambda b, tb: (0, 0, 0),
                            pipeline_mode=pl.Buffered(1))

    in_specs = [
        pl.BlockSpec(memory_space=pltpu.MemorySpace.SMEM),               # PReLU alpha
        pl.BlockSpec((t_blk, bp_blk, Din), lambda b, tb: (tb, b, 0)),    # x tile
        _resident((Din, G)),                                             # W_ih layer 0
    ]
    args = [kp["prelu"], x_tbd, kp["w_ih0"]]
    if L > 1:
        in_specs.append(_resident((L - 1, HP, G)))                       # W_ih layers>=1
        args.append(kp["w_ihr"])
    in_specs += [_resident((L, HP, G)),                                  # W_hh (all layers)
                 _resident((L, 1, G)),                                   # LSTM bias
                 _resident((HP, 1024)), _resident((1, 1024)),            # head layer1
                 _resident((1024, OP)), _resident((1, OP))]              # head layer2
    args += [kp["w_hh"], kp["b"], kp["w1"], kp["b1"], kp["w2"], kp["b2"]]

    return pl.pallas_call(
        kernel,
        out_shape=jax.ShapeDtypeStruct((T_pad, BP, OP), jnp.float32),
        grid=(BP // bp_blk, T_pad // t_blk),
        in_specs=in_specs,
        out_specs=pl.BlockSpec((t_blk, bp_blk, OP), lambda b, tb: (tb, b, 0)),
        scratch_shapes=[
            pltpu.VMEM((L, bp_blk, HP), jnp.float32),          # h carry
            pltpu.VMEM((L, bp_blk, HP), jnp.float32),          # c carry
            pltpu.VMEM((t_blk, bp_blk, HP), jnp.float32),      # per-tile hidden states
            pltpu.VMEM((t_blk, bp_blk, G), jnp.float32),       # hoisted x-projection
        ],
        compiler_params=pltpu.CompilerParams(
            dimension_semantics=("parallel", "arbitrary"),     # batch || ; time sequential
            vmem_limit_bytes=_VMEM_LIMIT_BYTES,
        ),
    )(*args)


# ----------------------------------------------------------------------------
# Full model forward (PyTorch batch_first convention at the boundary)
# ----------------------------------------------------------------------------
def lstm_model_forward(x_btd, kp, *, t_blk=None, bp_blk=None):
    B, T, _ = x_btd.shape
    O = kp["output_dim"]

    BP = _round_up(B, SUBLANE)
    if t_blk is None:
        t_blk = min(T, 32)                 # sweep 32-64 on v5e/v6e; keep modest on v7x
    T_pad = _round_up(T, t_blk)
    if bp_blk is None:
        bp_blk = BP // 2 if BP % 16 == 0 else BP   # 2 batch blocks -> 2 TCs on v7x

    # TODO(synk): fold this transpose+pad into the kernel's x BlockSpec instead
    # of paying an HBM read+write before the kernel starts.
    x = jnp.transpose(x_btd, (1, 0, 2))                               # (T, B, Din)
    x = jnp.pad(x, ((0, T_pad - T), (0, BP - B), (0, 0)))             # (T_pad, BP, Din)

    y = fused_lstm_mlp_pallas(x, kp, t_blk=t_blk, bp_blk=bp_blk)      # (T_pad, BP, OP)

    y = y[:T, :B, :O]                                                 # drop all padding
    return jnp.transpose(y, (1, 0, 2))                                # (B, T, O)


# ----------------------------------------------------------------------------
# Parameters: raw (PyTorch-like, f32) and padded/bf16 kernel parameters
# ----------------------------------------------------------------------------
def make_params(key, input_dim, hidden_dim, layer_dim, output_dim):
    params = {"hidden_dim": hidden_dim, "layer_dim": layer_dim,
              "input_dim": input_dim, "output_dim": output_dim}
    k = 1.0 / jnp.sqrt(hidden_dim)
    lstm = []
    for layer in range(layer_dim):
        d_in = input_dim if layer == 0 else hidden_dim
        key, k1, k2, k3, k4 = jax.random.split(key, 5)
        w_ih = jax.random.uniform(k1, (d_in, 4 * hidden_dim), jnp.float32, -k, k)
        w_hh = jax.random.uniform(k2, (hidden_dim, 4 * hidden_dim), jnp.float32, -k, k)
        b_ih = jax.random.uniform(k3, (4 * hidden_dim,), jnp.float32, -k, k)
        b_hh = jax.random.uniform(k4, (4 * hidden_dim,), jnp.float32, -k, k)
        lstm.append((w_ih, w_hh, b_ih + b_hh))        # combined bias, gate order i|f|g|o
    params["lstm"] = lstm

    key, k1, k2, k3, k4 = jax.random.split(key, 5)
    k1v = 1.0 / jnp.sqrt(hidden_dim)
    k2v = 1.0 / jnp.sqrt(1024.0)
    params["w1"] = jax.random.uniform(k1, (hidden_dim, 1024), jnp.float32, -k1v, k1v)
    params["b1"] = jax.random.uniform(k2, (1024,), jnp.float32, -k1v, k1v)
    params["w2"] = jax.random.uniform(k3, (1024, output_dim), jnp.float32, -k2v, k2v)
    params["b2"] = jax.random.uniform(k4, (output_dim,), jnp.float32, -k2v, k2v)
    params["prelu"] = jnp.array([0.25], dtype=jnp.float32)            # nn.PReLU default
    return params


def _pad_gates(w, H, HP):
    """Zero-pad each of the 4 gate blocks along the hidden axis: (..., 4H)->(..., 4HP)."""
    lead = w.shape[:-1]
    w = w.reshape(*lead, 4, H)
    w = jnp.pad(w, [(0, 0)] * len(lead) + [(0, 0), (0, HP - H)])
    return w.reshape(*lead, 4 * HP)


def _pad_rows(w, H, HP):
    return jnp.pad(w, [(0, HP - H)] + [(0, 0)] * (w.ndim - 1))


def prepare_kernel_params(params):
    H, L = params["hidden_dim"], params["layer_dim"]
    O = params["output_dim"]
    HP = _round_up(H, LANE)
    OP = _round_up(O, LANE)
    kp = {"HP": HP, "OP": OP, "L": L, "output_dim": O}

    w_ih0, _, _ = params["lstm"][0]
    kp["w_ih0"] = _pad_gates(w_ih0, H, HP).astype(jnp.bfloat16)       # (Din, 4HP)

    w_hh_all, b_all, w_ihr_all = [], [], []
    for l in range(L):
        w_ih, w_hh, b = params["lstm"][l]
        w_hh_all.append(_pad_gates(_pad_rows(w_hh, H, HP), H, HP))    # (HP, 4HP)
        b_all.append(_pad_gates(b, H, HP))                            # (4HP,)
        if l >= 1:
            w_ihr_all.append(_pad_gates(_pad_rows(w_ih, H, HP), H, HP))
    kp["w_hh"] = jnp.stack(w_hh_all).astype(jnp.bfloat16)             # (L, HP, 4HP)
    kp["b"] = jnp.stack(b_all)[:, None, :].astype(jnp.float32)        # (L, 1, 4HP)
    if L > 1:
        kp["w_ihr"] = jnp.stack(w_ihr_all).astype(jnp.bfloat16)       # (L-1, HP, 4HP)

    kp["w1"] = _pad_rows(params["w1"], H, HP).astype(jnp.bfloat16)    # (HP, 1024)
    kp["b1"] = params["b1"][None, :].astype(jnp.float32)              # (1, 1024)
    kp["w2"] = jnp.pad(params["w2"], ((0, 0), (0, OP - O))).astype(jnp.bfloat16)
    kp["b2"] = jnp.pad(params["b2"], (0, OP - O))[None, :].astype(jnp.float32)
    kp["prelu"] = params["prelu"].astype(jnp.float32)                 # (1,)
    return kp


# ----------------------------------------------------------------------------
# Pure-JAX reference (mirrors bf16 matmul operands with f32 accumulation)
# ----------------------------------------------------------------------------
def reference_forward(x_btd, params):
    B, T, _ = x_btd.shape
    H = params["hidden_dim"]
    bf = jnp.bfloat16
    h_seq = x_btd
    for (w_ih, w_hh, b) in params["lstm"]:
        wi = w_ih.astype(bf)
        wh = w_hh.astype(bf)

        def cell(carry, x_t, wi=wi, wh=wh, b=b):
            h, c = carry
            gates = (jnp.dot(x_t.astype(bf), wi, preferred_element_type=jnp.float32)
                     + jnp.dot(h.astype(bf), wh, preferred_element_type=jnp.float32)
                     + b)
            i = jax.nn.sigmoid(gates[:, 0:H])
            f = jax.nn.sigmoid(gates[:, H:2 * H])
            g = jnp.tanh(gates[:, 2 * H:3 * H])
            o = jax.nn.sigmoid(gates[:, 3 * H:4 * H])
            c = f * c + i * g
            h = o * jnp.tanh(c)
            return (h, c), h

        init = (jnp.zeros((B, H), jnp.float32), jnp.zeros((B, H), jnp.float32))
        _, ys = lax.scan(cell, init, jnp.transpose(h_seq, (1, 0, 2)))
        h_seq = jnp.transpose(ys, (1, 0, 2))

    a = params["prelu"][0]
    prelu = lambda v: jnp.maximum(v, 0.0) + a * jnp.minimum(v, 0.0)
    y = prelu(jnp.dot(h_seq.reshape(B * T, H).astype(bf), params["w1"].astype(bf),
                      preferred_element_type=jnp.float32) + params["b1"])
    y = prelu(jnp.dot(y.astype(bf), params["w2"].astype(bf),
                      preferred_element_type=jnp.float32) + params["b2"])
    return y.reshape(B, T, -1)


# ----------------------------------------------------------------------------
if __name__ == "__main__":
    # Small shapes consistent with the module's forward (batch_first input).
    batch, seq_dim, input_dim = 2, 8, 16
    hidden_dim, layer_dim, output_dim = 32, 2, 16

    key = jax.random.PRNGKey(0)
    key, kx = jax.random.split(key)
    x = jax.random.normal(kx, (batch, seq_dim, input_dim), dtype=jnp.float32)

    params = make_params(key, input_dim, hidden_dim, layer_dim, output_dim)
    kp = prepare_kernel_params(params)

    # t_blk=4 -> two time tiles, exercising the cross-tile h/c carry.
    out = lstm_model_forward(x, kp, t_blk=4)
    out = jax.block_until_ready(out)

    ref = jax.block_until_ready(reference_forward(x, params))
    assert out.shape == (batch, seq_dim, output_dim)
    max_diff = jnp.max(jnp.abs(out - ref))
    assert jnp.allclose(out, ref, rtol=2e-2, atol=2e-2), (
        f"mismatch vs reference, max abs diff = {max_diff}")

    print("KERNEL_OK")
</pallas_src>

<mosaic_0001>
module attributes {stable_mosaic.version = 11 : i64} {
  func.func @kernel(%arg0: i32, %arg1: i32, %arg2: memref<1xf32, #tpu.memory_space<smem>>, %arg3: memref<4x8x16xf32, #tpu.memory_space<vmem>>, %arg4: memref<16x512xbf16, #tpu.memory_space<vmem>>, %arg5: memref<1x128x512xbf16, #tpu.memory_space<vmem>>, %arg6: memref<2x128x512xbf16, #tpu.memory_space<vmem>>, %arg7: memref<2x1x512xf32, #tpu.memory_space<vmem>>, %arg8: memref<128x1024xbf16, #tpu.memory_space<vmem>>, %arg9: memref<1x1024xf32, #tpu.memory_space<vmem>>, %arg10: memref<1024x128xbf16, #tpu.memory_space<vmem>>, %arg11: memref<1x128xf32, #tpu.memory_space<vmem>>, %arg12: memref<4x8x128xf32, #tpu.memory_space<vmem>>, %arg13: memref<2x8x128xf32, #tpu.memory_space<vmem>>, %arg14: memref<2x8x128xf32, #tpu.memory_space<vmem>>, %arg15: memref<4x8x128xf32, #tpu.memory_space<vmem>>, %arg16: memref<4x8x512xf32, #tpu.memory_space<vmem>>) attributes {dimension_semantics = [#tpu.dimension_semantics<parallel>, #tpu.dimension_semantics<arbitrary>], iteration_bounds = array<i64: 1, 2>, scalar_prefetch = 0 : i64, scratch_operands = 4 : i64, tpu.core_type = #tpu.core_type<tc>, window_params = [{transform_indices = @transform_0, window_bounds = array<i64: 1>}, {transform_indices = @transform_1, window_bounds = array<i64: 4, 8, 16>}, {pipeline_mode = #tpu.pipeline_mode<synchronous>, transform_indices = @transform_2, window_bounds = array<i64: 16, 512>}, {pipeline_mode = #tpu.pipeline_mode<synchronous>, transform_indices = @transform_3, window_bounds = array<i64: 1, 128, 512>}, {pipeline_mode = #tpu.pipeline_mode<synchronous>, transform_indices = @transform_4, window_bounds = array<i64: 2, 128, 512>}, {pipeline_mode = #tpu.pipeline_mode<synchronous>, transform_indices = @transform_5, window_bounds = array<i64: 2, 1, 512>}, {pipeline_mode = #tpu.pipeline_mode<synchronous>, transform_indices = @transform_6, window_bounds = array<i64: 128, 1024>}, {pipeline_mode = #tpu.pipeline_mode<synchronous>, transform_indices = @transform_7, window_bounds = array<i64: 1, 1024>}, {pipeline_mode = #tpu.pipeline_mode<synchronous>, transform_indices = @transform_8, window_bounds = array<i64: 1024, 128>}, {pipeline_mode = #tpu.pipeline_mode<synchronous>, transform_indices = @transform_9, window_bounds = array<i64: 1, 128>}, {transform_indices = @transform_10, window_bounds = array<i64: 4, 8, 128>}]} {
    %c0_i32 = arith.constant 0 : i32
    %0 = arith.cmpi eq, %arg1, %c0_i32 : i32
    %1 = arith.extui %0 : i1 to i32
    %c0_i32_0 = arith.constant 0 : i32
    %2 = arith.cmpi ne, %1, %c0_i32_0 : i32
    scf.if %2 {
      %cst_216 = arith.constant 0.000000e+00 : f32
      %421 = vector.broadcast %cst_216 : f32 to vector<2x8x128xf32>
      %c0_217 = arith.constant 0 : index
      %c0_218 = arith.constant 0 : index
      %c0_219 = arith.constant 0 : index
      %422 = vector.load %arg13[%c0_217, %c0_218, %c0_219] : memref<2x8x128xf32, #tpu.memory_space<vmem>>, vector<2x8x128xf32>
      tpu.vector_store %arg13[%c0_217, %c0_218, %c0_219], %421 {strides = array<i32>} : memref<2x8x128xf32, #tpu.memory_space<vmem>>, vector<2x8x128xf32>,
      %cst_220 = arith.constant 0.000000e+00 : f32
      %423 = vector.broadcast %cst_220 : f32 to vector<2x8x128xf32>
      %c0_221 = arith.constant 0 : index
      %c0_222 = arith.constant 0 : index
      %c0_223 = arith.constant 0 : index
      %424 = vector.load %arg14[%c0_221, %c0_222, %c0_223] : memref<2x8x128xf32, #tpu.memory_space<vmem>>, vector<2x8x128xf32>
      tpu.vector_store %arg14[%c0_221, %c0_222, %c0_223], %423 {strides = array<i32>} : memref<2x8x128xf32, #tpu.memory_space<vmem>>, vector<2x8x128xf32>,
    } else {
    }
    %c0 = arith.constant 0 : index
    %c0_1 = arith.constant 0 : index
    %c0_2 = arith.constant 0 : index
    %3 = vector.load %arg3[%c0, %c0_1, %c0_2] : memref<4x8x16xf32, #tpu.memory_space<vmem>>, vector<4x8x16xf32>
    %4 = vector.shape_cast %3 : vector<4x8x16xf32> to vector<32x16xf32>
    %5 = arith.truncf %4 : vector<32x16xf32> to vector<32x16xbf16>
    %c0_3 = arith.constant 0 : index
    %c0_4 = arith.constant 0 : index
    %6 = vector.load %arg4[%c0_3, %c0_4] : memref<16x512xbf16, #tpu.memory_space<vmem>>, vector<16x512xbf16>
    %cst = arith.constant dense<0.000000e+00> : vector<32x512xf32>
    %7 = tpu.matmul %5, %6, %cst {dimension_numbers = #tpu.dot_dimension_numbers<[1], [0], [0], [1], [0, 0, 1, 1], [], []>} : vector<32x16xbf16>, vector<16x512xbf16>, vector<32x512xf32> -> vector<32x512xf32>
    %c0_5 = arith.constant 0 : index
    %c0_6 = arith.constant 0 : index
    %c0_7 = arith.constant 0 : index
    %8 = vector.load %arg7[%c0_5, %c0_6, %c0_7] : memref<2x1x512xf32, #tpu.memory_space<vmem>>, vector<1x1x512xf32>
    %9 = vector.shape_cast %8 : vector<1x1x512xf32> to vector<1x512xf32>
    %10 = vector.broadcast %9 : vector<1x512xf32> to vector<32x512xf32>
    %11 = arith.addf %7, %10 : vector<32x512xf32>
    %12 = vector.shape_cast %11 : vector<32x512xf32> to vector<4x8x512xf32>
    %c0_8 = arith.constant 0 : index
    %c0_9 = arith.constant 0 : index
    %c0_10 = arith.constant 0 : index
    %13 = vector.load %arg16[%c0_8, %c0_9, %c0_10] : memref<4x8x512xf32, #tpu.memory_space<vmem>>, vector<4x8x512xf32>
    tpu.vector_store %arg16[%c0_8, %c0_9, %c0_10], %12 {strides = array<i32>} : memref<4x8x512xf32, #tpu.memory_space<vmem>>, vector<4x8x512xf32>,
    %c0_11 = arith.constant 0 : index
    %c0_12 = arith.constant 0 : index
    %c0_13 = arith.constant 0 : index
    %14 = vector.load %arg6[%c0_11, %c0_12, %c0_13] : memref<2x128x512xbf16, #tpu.memory_space<vmem>>, vector<1x128x512xbf16>
    %15 = vector.shape_cast %14 : vector<1x128x512xbf16> to vector<128x512xbf16>
    %c0_i32_14 = arith.constant 0 : i32
    %c0_15 = arith.constant 0 : index
    %c0_16 = arith.constant 0 : index
    %c0_17 = arith.constant 0 : index
    %16 = vector.load %arg13[%c0_15, %c0_16, %c0_17] : memref<2x8x128xf32, #tpu.memory_space<vmem>>, vector<1x8x128xf32>
    %17 = vector.shape_cast %16 : vector<1x8x128xf32> to vector<8x128xf32>
    %18 = arith.index_cast %c0_i32_14 : i32 to index
    %c0_18 = arith.constant 0 : index
    %c0_19 = arith.constant 0 : index
    %19 = vector.load %arg16[%18, %c0_18, %c0_19] : memref<4x8x512xf32, #tpu.memory_space<vmem>>, vector<1x8x512xf32>
    %20 = vector.shape_cast %19 : vector<1x8x512xf32> to vector<8x512xf32>
    %21 = arith.truncf %17 : vector<8x128xf32> to vector<8x128xbf16>
    %cst_20 = arith.constant dense<0.000000e+00> : vector<8x512xf32>
    %22 = tpu.matmul %21, %15, %cst_20 {dimension_numbers = #tpu.dot_dimension_numbers<[1], [0], [0], [1], [0, 0, 1, 1], [], []>} : vector<8x128xbf16>, vector<128x512xbf16>, vector<8x512xf32> -> vector<8x512xf32>
    %23 = arith.addf %20, %22 : vector<8x512xf32>
    %24 = vector.extract_strided_slice %23 {offsets = [0, 0], sizes = [8, 128], strides = [1, 1]} : vector<8x512xf32> to vector<8x128xf32>
    %25 = arith.negf %24 : vector<8x128xf32>
    %26 = math.exp %25 : vector<8x128xf32>
    %cst_21 = arith.constant 1.000000e+00 : f32
    %27 = vector.broadcast %cst_21 : f32 to vector<8x128xf32>
    %28 = arith.addf %27, %26 : vector<8x128xf32>
    %29 = arith.divf %27, %28 : vector<8x128xf32>
    %30 = vector.extract_strided_slice %23 {offsets = [0, 128], sizes = [8, 128], strides = [1, 1]} : vector<8x512xf32> to vector<8x128xf32>
    %31 = arith.negf %30 : vector<8x128xf32>
    %32 = math.exp %31 : vector<8x128xf32>
    %cst_22 = arith.constant 1.000000e+00 : f32
    %33 = vector.broadcast %cst_22 : f32 to vector<8x128xf32>
    %34 = arith.addf %33, %32 : vector<8x128xf32>
    %35 = arith.divf %33, %34 : vector<8x128xf32>
    %36 = vector.extract_strided_slice %23 {offsets = [0, 256], sizes = [8, 128], strides = [1, 1]} : vector<8x512xf32> to vector<8x128xf32>
    %37 = math.tanh %36 : vector<8x128xf32>
    %38 = vector.extract_strided_slice %23 {offsets = [0, 384], sizes = [8, 128], strides = [1, 1]} : vector<8x512xf32> to vector<8x128xf32>
    %39 = arith.negf %38 : vector<8x128xf32>
    %40 = math.exp %39 : vector<8x128xf32>
    %cst_23 = arith.constant 1.000000e+00 : f32
    %41 = vector.broadcast %cst_23 : f32 to vector<8x128xf32>
    %42 = arith.addf %41, %40 : vector<8x128xf32>
    %43 = arith.divf %41, %42 : vector<8x128xf32>
    %c0_24 = arith.constant 0 : index
    %c0_25 = arith.constant 0 : index
    %c0_26 = arith.constant 0 : index
    %44 = vector.load %arg14[%c0_24, %c0_25, %c0_26] : memref<2x8x128xf32, #tpu.memory_space<vmem>>, vector<1x8x128xf32>
    %45 = vector.shape_cast %44 : vector<1x8x128xf32> to vector<8x128xf32>
    %46 = arith.mulf %35, %45 : vector<8x128xf32>
    %47 = arith.mulf %29, %37 : vector<8x128xf32>
    %48 = arith.addf %46, %47 : vector<8x128xf32>
    %49 = math.tanh %48 : vector<8x128xf32>
    %50 = arith.mulf %43, %49 : vector<8x128xf32>
    %c0_27 = arith.constant 0 : index
    %c0_28 = arith.constant 0 : index
    %c0_29 = arith.constant 0 : index
    %51 = vector.load %arg14[%c0_27, %c0_28, %c0_29] : memref<2x8x128xf32, #tpu.memory_space<vmem>>, vector<1x8x128xf32>
    %52 = vector.shape_cast %51 : vector<1x8x128xf32> to vector<8x128xf32>
    %53 = vector.shape_cast %48 : vector<8x128xf32> to vector<1x8x128xf32>
    tpu.vector_store %arg14[%c0_27, %c0_28, %c0_29], %53 {strides = array<i32>} : memref<2x8x128xf32, #tpu.memory_space<vmem>>, vector<1x8x128xf32>,
    %c0_30 = arith.constant 0 : index
    %c0_31 = arith.constant 0 : index
    %c0_32 = arith.constant 0 : index
    %54 = vector.load %arg13[%c0_30, %c0_31, %c0_32] : memref<2x8x128xf32, #tpu.memory_space<vmem>>, vector<1x8x128xf32>
    %55 = vector.shape_cast %54 : vector<1x8x128xf32> to vector<8x128xf32>
    %56 = vector.shape_cast %50 : vector<8x128xf32> to vector<1x8x128xf32>
    tpu.vector_store %arg13[%c0_30, %c0_31, %c0_32], %56 {strides = array<i32>} : memref<2x8x128xf32, #tpu.memory_space<vmem>>, vector<1x8x128xf32>,
    %57 = arith.index_cast %c0_i32_14 : i32 to index
    %c0_33 = arith.constant 0 : index
    %c0_34 = arith.constant 0 : index
    %58 = vector.load %arg15[%57, %c0_33, %c0_34] : memref<4x8x128xf32, #tpu.memory_space<vmem>>, vector<1x8x128xf32>
    %59 = vector.shape_cast %58 : vector<1x8x128xf32> to vector<8x128xf32>
    %60 = vector.shape_cast %50 : vector<8x128xf32> to vector<1x8x128xf32>
    tpu.vector_store %arg15[%57, %c0_33, %c0_34], %60 {strides = array<i32>} : memref<4x8x128xf32, #tpu.memory_space<vmem>>, vector<1x8x128xf32>,
    %c1_i32 = arith.constant 1 : i32
    %c0_35 = arith.constant 0 : index
    %c0_36 = arith.constant 0 : index
    %c0_37 = arith.constant 0 : index
    %61 = vector.load %arg13[%c0_35, %c0_36, %c0_37] : memref<2x8x128xf32, #tpu.memory_space<vmem>>, vector<1x8x128xf32>
    %62 = vector.shape_cast %61 : vector<1x8x128xf32> to vector<8x128xf32>
    %63 = arith.index_cast %c1_i32 : i32 to index
    %c0_38 = arith.constant 0 : index
    %c0_39 = arith.constant 0 : index
    %64 = vector.load %arg16[%63, %c0_38, %c0_39] : memref<4x8x512xf32, #tpu.memory_space<vmem>>, vector<1x8x512xf32>
    %65 = vector.shape_cast %64 : vector<1x8x512xf32> to vector<8x512xf32>
    %66 = arith.truncf %62 : vector<8x128xf32> to vector<8x128xbf16>
    %cst_40 = arith.constant dense<0.000000e+00> : vector<8x512xf32>
    %67 = tpu.matmul %66, %15, %cst_40 {dimension_numbers = #tpu.dot_dimension_numbers<[1], [0], [0], [1], [0, 0, 1, 1], [], []>} : vector<8x128xbf16>, vector<128x512xbf16>, vector<8x512xf32> -> vector<8x512xf32>
    %68 = arith.addf %65, %67 : vector<8x512xf32>
    %69 = vector.extract_strided_slice %68 {offsets = [0, 0], sizes = [8, 128], strides = [1, 1]} : vector<8x512xf32> to vector<8x128xf32>
    %70 = arith.negf %69 : vector<8x128xf32>
    %71 = math.exp %70 : vector<8x128xf32>
    %cst_41 = arith.constant 1.000000e+00 : f32
    %72 = vector.broadcast %cst_41 : f32 to vector<8x128xf32>
    %73 = arith.addf %72, %71 : vector<8x128xf32>
    %74 = arith.divf %72, %73 : vector<8x128xf32>
    %75 = vector.extract_strided_slice %68 {offsets = [0, 128], sizes = [8, 128], strides = [1, 1]} : vector<8x512xf32> to vector<8x128xf32>
    %76 = arith.negf %75 : vector<8x128xf32>
    %77 = math.exp %76 : vector<8x128xf32>
    %cst_42 = arith.constant 1.000000e+00 : f32
    %78 = vector.broadcast %cst_42 : f32 to vector<8x128xf32>
    %79 = arith.addf %78, %77 : vector<8x128xf32>
    %80 = arith.divf %78, %79 : vector<8x128xf32>
    %81 = vector.extract_strided_slice %68 {offsets = [0, 256], sizes = [8, 128], strides = [1, 1]} : vector<8x512xf32> to vector<8x128xf32>
    %82 = math.tanh %81 : vector<8x128xf32>
    %83 = vector.extract_strided_slice %68 {offsets = [0, 384], sizes = [8, 128], strides = [1, 1]} : vector<8x512xf32> to vector<8x128xf32>
    %84 = arith.negf %83 : vector<8x128xf32>
    %85 = math.exp %84 : vector<8x128xf32>
    %cst_43 = arith.constant 1.000000e+00 : f32
    %86 = vector.broadcast %cst_43 : f32 to vector<8x128xf32>
    %87 = arith.addf %86, %85 : vector<8x128xf32>
    %88 = arith.divf %86, %87 : vector<8x128xf32>
    %c0_44 = arith.constant 0 : index
    %c0_45 = arith.constant 0 : index
    %c0_46 = arith.constant 0 : index
    %89 = vector.load %arg14[%c0_44, %c0_45, %c0_46] : memref<2x8x128xf32, #tpu.memory_space<vmem>>, vector<1x8x128xf32>
    %90 = vector.shape_cast %89 : vector<1x8x128xf32> to vector<8x128xf32>
    %91 = arith.mulf %80, %90 : vector<8x128xf32>
    %92 = arith.mulf %74, %82 : vector<8x128xf32>
    %93 = arith.addf %91, %92 : vector<8x128xf32>
    %94 = math.tanh %93 : vector<8x128xf32>
    %95 = arith.mulf %88, %94 : vector<8x128xf32>
    %c0_47 = arith.constant 0 : index
    %c0_48 = arith.constant 0 : index
    %c0_49 = arith.constant 0 : index
    %96 = vector.load %arg14[%c0_47, %c0_48, %c0_49] : memref<2x8x128xf32, #tpu.memory_space<vmem>>, vector<1x8x128xf32>
    %97 = vector.shape_cast %96 : vector<1x8x128xf32> to vector<8x128xf32>
    %98 = vector.shape_cast %93 : vector<8x128xf32> to vector<1x8x128xf32>
    tpu.vector_store %arg14[%c0_47, %c0_48, %c0_49], %98 {strides = array<i32>} : memref<2x8x128xf32, #tpu.memory_space<vmem>>, vector<1x8x128xf32>,
    %c0_50 = arith.constant 0 : index
    %c0_51 = arith.constant 0 : index
    %c0_52 = arith.constant 0 : index
    %99 = vector.load %arg13[%c0_50, %c0_51, %c0_52] : memref<2x8x128xf32, #tpu.memory_space<vmem>>, vector<1x8x128xf32>
    %100 = vector.shape_cast %99 : vector<1x8x128xf32> to vector<8x128xf32>
    %101 = vector.shape_cast %95 : vector<8x128xf32> to vector<1x8x128xf32>
    tpu.vector_store %arg13[%c0_50, %c0_51, %c0_52], %101 {strides = array<i32>} : memref<2x8x128xf32, #tpu.memory_space<vmem>>, vector<1x8x128xf32>,
    %102 = arith.index_cast %c1_i32 : i32 to index
    %c0_53 = arith.constant 0 : index
    %c0_54 = arith.constant 0 : index
    %103 = vector.load %arg15[%102, %c0_53, %c0_54] : memref<4x8x128xf32, #tpu.memory_space<vmem>>, vector<1x8x128xf32>
    %104 = vector.shape_cast %103 : vector<1x8x128xf32> to vector<8x128xf32>
    %105 = vector.shape_cast %95 : vector<8x128xf32> to vector<1x8x128xf32>
    tpu.vector_store %arg15[%102, %c0_53, %c0_54], %105 {strides = array<i32>} : memref<4x8x128xf32, #tpu.memory_space<vmem>>, vector<1x8x128xf32>,
    %c2_i32 = arith.constant 2 : i32
    %c0_55 = arith.constant 0 : index
    %c0_56 = arith.constant 0 : index
    %c0_57 = arith.constant 0 : index
    %106 = vector.load %arg13[%c0_55, %c0_56, %c0_57] : memref<2x8x128xf32, #tpu.memory_space<vmem>>, vector<1x8x128xf32>
    %107 = vector.shape_cast %106 : vector<1x8x128xf32> to vector<8x128xf32>
    %108 = arith.index_cast %c2_i32 : i32 to index
    %c0_58 = arith.constant 0 : index
    %c0_59 = arith.constant 0 : index
    %109 = vector.load %arg16[%108, %c0_58, %c0_59] : memref<4x8x512xf32, #tpu.memory_space<vmem>>, vector<1x8x512xf32>
    %110 = vector.shape_cast %109 : vector<1x8x512xf32> to vector<8x512xf32>
    %111 = arith.truncf %107 : vector<8x128xf32> to vector<8x128xbf16>
    %cst_60 = arith.constant dense<0.000000e+00> : vector<8x512xf32>
    %112 = tpu.matmul %111, %15, %cst_60 {dimension_numbers = #tpu.dot_dimension_numbers<[1], [0], [0], [1], [0, 0, 1, 1], [], []>} : vector<8x128xbf16>, vector<128x512xbf16>, vector<8x512xf32> -> vector<8x512xf32>
    %113 = arith.addf %110, %112 : vector<8x512xf32>
    %114 = vector.extract_strided_slice %113 {offsets = [0, 0], sizes = [8, 128], strides = [1, 1]} : vector<8x512xf32> to vector<8x128xf32>
    %115 = arith.negf %114 : vector<8x128xf32>
    %116 = math.exp %115 : vector<8x128xf32>
    %cst_61 = arith.constant 1.000000e+00 : f32
    %117 = vector.broadcast %cst_61 : f32 to vector<8x128xf32>
    %118 = arith.addf %117, %116 : vector<8x128xf32>
    %119 = arith.divf %117, %118 : vector<8x128xf32>
    %120 = vector.extract_strided_slice %113 {offsets = [0, 128], sizes = [8, 128], strides = [1, 1]} : vector<8x512xf32> to vector<8x128xf32>
    %121 = arith.negf %120 : vector<8x128xf32>
    %122 = math.exp %121 : vector<8x128xf32>
    %cst_62 = arith.constant 1.000000e+00 : f32
    %123 = vector.broadcast %cst_62 : f32 to vector<8x128xf32>
    %124 = arith.addf %123, %122 : vector<8x128xf32>
    %125 = arith.divf %123, %124 : vector<8x128xf32>
    %126 = vector.extract_strided_slice %113 {offsets = [0, 256], sizes = [8, 128], strides = [1, 1]} : vector<8x512xf32> to vector<8x128xf32>
    %127 = math.tanh %126 : vector<8x128xf32>
    %128 = vector.extract_strided_slice %113 {offsets = [0, 384], sizes = [8, 128], strides = [1, 1]} : vector<8x512xf32> to vector<8x128xf32>
    %129 = arith.negf %128 : vector<8x128xf32>
    %130 = math.exp %129 : vector<8x128xf32>
    %cst_63 = arith.constant 1.000000e+00 : f32
    %131 = vector.broadcast %cst_63 : f32 to vector<8x128xf32>
    %132 = arith.addf %131, %130 : vector<8x128xf32>
    %133 = arith.divf %131, %132 : vector<8x128xf32>
    %c0_64 = arith.constant 0 : index
    %c0_65 = arith.constant 0 : index
    %c0_66 = arith.constant 0 : index
    %134 = vector.load %arg14[%c0_64, %c0_65, %c0_66] : memref<2x8x128xf32, #tpu.memory_space<vmem>>, vector<1x8x128xf32>
    %135 = vector.shape_cast %134 : vector<1x8x128xf32> to vector<8x128xf32>
    %136 = arith.mulf %125, %135 : vector<8x128xf32>
    %137 = arith.mulf %119, %127 : vector<8x128xf32>
    %138 = arith.addf %136, %137 : vector<8x128xf32>
    %139 = math.tanh %138 : vector<8x128xf32>
    %140 = arith.mulf %133, %139 : vector<8x128xf32>
    %c0_67 = arith.constant 0 : index
    %c0_68 = arith.constant 0 : index
    %c0_69 = arith.constant 0 : index
    %141 = vector.load %arg14[%c0_67, %c0_68, %c0_69] : memref<2x8x128xf32, #tpu.memory_space<vmem>>, vector<1x8x128xf32>
    %142 = vector.shape_cast %141 : vector<1x8x128xf32> to vector<8x128xf32>
    %143 = vector.shape_cast %138 : vector<8x128xf32> to vector<1x8x128xf32>
    tpu.vector_store %arg14[%c0_67, %c0_68, %c0_69], %143 {strides = array<i32>} : memref<2x8x128xf32, #tpu.memory_space<vmem>>, vector<1x8x128xf32>,
    %c0_70 = arith.constant 0 : index
    %c0_71 = arith.constant 0 : index
    %c0_72 = arith.constant 0 : index
    %144 = vector.load %arg13[%c0_70, %c0_71, %c0_72] : memref<2x8x128xf32, #tpu.memory_space<vmem>>, vector<1x8x128xf32>
    %145 = vector.shape_cast %144 : vector<1x8x128xf32> to vector<8x128xf32>
    %146 = vector.shape_cast %140 : vector<8x128xf32> to vector<1x8x128xf32>
    tpu.vector_store %arg13[%c0_70, %c0_71, %c0_72], %146 {strides = array<i32>} : memref<2x8x128xf32, #tpu.memory_space<vmem>>, vector<1x8x128xf32>,
    %147 = arith.index_cast %c2_i32 : i32 to index
    %c0_73 = arith.constant 0 : index
    %c0_74 = arith.constant 0 : index
    %148 = vector.load %arg15[%147, %c0_73, %c0_74] : memref<4x8x128xf32, #tpu.memory_space<vmem>>, vector<1x8x128xf32>
    %149 = vector.shape_cast %148 : vector<1x8x128xf32> to vector<8x128xf32>
    %150 = vector.shape_cast %140 : vector<8x128xf32> to vector<1x8x128xf32>
    tpu.vector_store %arg15[%147, %c0_73, %c0_74], %150 {strides = array<i32>} : memref<4x8x128xf32, #tpu.memory_space<vmem>>, vector<1x8x128xf32>,
    %c3_i32 = arith.constant 3 : i32
    %c0_75 = arith.constant 0 : index
    %c0_76 = arith.constant 0 : index
    %c0_77 = arith.constant 0 : index
    %151 = vector.load %arg13[%c0_75, %c0_76, %c0_77] : memref<2x8x128xf32, #tpu.memory_space<vmem>>, vector<1x8x128xf32>
    %152 = vector.shape_cast %151 : vector<1x8x128xf32> to vector<8x128xf32>
    %153 = arith.index_cast %c3_i32 : i32 to index
    %c0_78 = arith.constant 0 : index
    %c0_79 = arith.constant 0 : index
    %154 = vector.load %arg16[%153, %c0_78, %c0_79] : memref<4x8x512xf32, #tpu.memory_space<vmem>>, vector<1x8x512xf32>
    %155 = vector.shape_cast %154 : vector<1x8x512xf32> to vector<8x512xf32>
    %156 = arith.truncf %152 : vector<8x128xf32> to vector<8x128xbf16>
    %cst_80 = arith.constant dense<0.000000e+00> : vector<8x512xf32>
    %157 = tpu.matmul %156, %15, %cst_80 {dimension_numbers = #tpu.dot_dimension_numbers<[1], [0], [0], [1], [0, 0, 1, 1], [], []>} : vector<8x128xbf16>, vector<128x512xbf16>, vector<8x512xf32> -> vector<8x512xf32>
    %158 = arith.addf %155, %157 : vector<8x512xf32>
    %159 = vector.extract_strided_slice %158 {offsets = [0, 0], sizes = [8, 128], strides = [1, 1]} : vector<8x512xf32> to vector<8x128xf32>
    %160 = arith.negf %159 : vector<8x128xf32>
    %161 = math.exp %160 : vector<8x128xf32>
    %cst_81 = arith.constant 1.000000e+00 : f32
    %162 = vector.broadcast %cst_81 : f32 to vector<8x128xf32>
    %163 = arith.addf %162, %161 : vector<8x128xf32>
    %164 = arith.divf %162, %163 : vector<8x128xf32>
    %165 = vector.extract_strided_slice %158 {offsets = [0, 128], sizes = [8, 128], strides = [1, 1]} : vector<8x512xf32> to vector<8x128xf32>
    %166 = arith.negf %165 : vector<8x128xf32>
    %167 = math.exp %166 : vector<8x128xf32>
    %cst_82 = arith.constant 1.000000e+00 : f32
    %168 = vector.broadcast %cst_82 : f32 to vector<8x128xf32>
    %169 = arith.addf %168, %167 : vector<8x128xf32>
    %170 = arith.divf %168, %169 : vector<8x128xf32>
    %171 = vector.extract_strided_slice %158 {offsets = [0, 256], sizes = [8, 128], strides = [1, 1]} : vector<8x512xf32> to vector<8x128xf32>
    %172 = math.tanh %171 : vector<8x128xf32>
    %173 = vector.extract_strided_slice %158 {offsets = [0, 384], sizes = [8, 128], strides = [1, 1]} : vector<8x512xf32> to vector<8x128xf32>
    %174 = arith.negf %173 : vector<8x128xf32>
    %175 = math.exp %174 : vector<8x128xf32>
    %cst_83 = arith.constant 1.000000e+00 : f32
    %176 = vector.broadcast %cst_83 : f32 to vector<8x128xf32>
    %177 = arith.addf %176, %175 : vector<8x128xf32>
    %178 = arith.divf %176, %177 : vector<8x128xf32>
    %c0_84 = arith.constant 0 : index
    %c0_85 = arith.constant 0 : index
    %c0_86 = arith.constant 0 : index
    %179 = vector.load %arg14[%c0_84, %c0_85, %c0_86] : memref<2x8x128xf32, #tpu.memory_space<vmem>>, vector<1x8x128xf32>
    %180 = vector.shape_cast %179 : vector<1x8x128xf32> to vector<8x128xf32>
    %181 = arith.mulf %170, %180 : vector<8x128xf32>
    %182 = arith.mulf %164, %172 : vector<8x128xf32>
    %183 = arith.addf %181, %182 : vector<8x128xf32>
    %184 = math.tanh %183 : vector<8x128xf32>
    %185 = arith.mulf %178, %184 : vector<8x128xf32>
    %c0_87 = arith.constant 0 : index
    %c0_88 = arith.constant 0 : index
    %c0_89 = arith.constant 0 : index
    %186 = vector.load %arg14[%c0_87, %c0_88, %c0_89] : memref<2x8x128xf32, #tpu.memory_space<vmem>>, vector<1x8x128xf32>
    %187 = vector.shape_cast %186 : vector<1x8x128xf32> to vector<8x128xf32>
    %188 = vector.shape_cast %183 : vector<8x128xf32> to vector<1x8x128xf32>
    tpu.vector_store %arg14[%c0_87, %c0_88, %c0_89], %188 {strides = array<i32>} : memref<2x8x128xf32, #tpu.memory_space<vmem>>, vector<1x8x128xf32>,
    %c0_90 = arith.constant 0 : index
    %c0_91 = arith.constant 0 : index
    %c0_92 = arith.constant 0 : index
    %189 = vector.load %arg13[%c0_90, %c0_91, %c0_92] : memref<2x8x128xf32, #tpu.memory_space<vmem>>, vector<1x8x128xf32>
    %190 = vector.shape_cast %189 : vector<1x8x128xf32> to vector<8x128xf32>
    %191 = vector.shape_cast %185 : vector<8x128xf32> to vector<1x8x128xf32>
    tpu.vector_store %arg13[%c0_90, %c0_91, %c0_92], %191 {strides = array<i32>} : memref<2x8x128xf32, #tpu.memory_space<vmem>>, vector<1x8x128xf32>,
    %192 = arith.index_cast %c3_i32 : i32 to index
    %c0_93 = arith.constant 0 : index
    %c0_94 = arith.constant 0 : index
    %193 = vector.load %arg15[%192, %c0_93, %c0_94] : memref<4x8x128xf32, #tpu.memory_space<vmem>>, vector<1x8x128xf32>
    %194 = vector.shape_cast %193 : vector<1x8x128xf32> to vector<8x128xf32>
    %195 = vector.shape_cast %185 : vector<8x128xf32> to vector<1x8x128xf32>
    tpu.vector_store %arg15[%192, %c0_93, %c0_94], %195 {strides = array<i32>} : memref<4x8x128xf32, #tpu.memory_space<vmem>>, vector<1x8x128xf32>,
    %c4_i32 = arith.constant 4 : i32
    %c0_95 = arith.constant 0 : index
    %c0_96 = arith.constant 0 : index
    %c0_97 = arith.constant 0 : index
    %196 = vector.load %arg15[%c0_95, %c0_96, %c0_97] : memref<4x8x128xf32, #tpu.memory_space<vmem>>, vector<4x8x128xf32>
    %197 = vector.shape_cast %196 : vector<4x8x128xf32> to vector<32x128xf32>
    %198 = arith.truncf %197 : vector<32x128xf32> to vector<32x128xbf16>
    %c0_98 = arith.constant 0 : index
    %c0_99 = arith.constant 0 : index
    %c0_100 = arith.constant 0 : index
    %199 = vector.load %arg5[%c0_98, %c0_99, %c0_100] : memref<1x128x512xbf16, #tpu.memory_space<vmem>>, vector<1x128x512xbf16>
    %200 = vector.shape_cast %199 : vector<1x128x512xbf16> to vector<128x512xbf16>
    %cst_101 = arith.constant dense<0.000000e+00> : vector<32x512xf32>
    %201 = tpu.matmul %198, %200, %cst_101 {dimension_numbers = #tpu.dot_dimension_numbers<[1], [0], [0], [1], [0, 0, 1, 1], [], []>} : vector<32x128xbf16>, vector<128x512xbf16>, vector<32x512xf32> -> vector<32x512xf32>
    %c1 = arith.constant 1 : index
    %c0_102 = arith.constant 0 : index
    %c0_103 = arith.constant 0 : index
    %202 = vector.load %arg7[%c1, %c0_102, %c0_103] : memref<2x1x512xf32, #tpu.memory_space<vmem>>, vector<1x1x512xf32>
    %203 = vector.shape_cast %202 : vector<1x1x512xf32> to vector<1x512xf32>
    %204 = vector.broadcast %203 : vector<1x512xf32> to vector<32x512xf32>
    %205 = arith.addf %201, %204 : vector<32x512xf32>
    %206 = vector.shape_cast %205 : vector<32x512xf32> to vector<4x8x512xf32>
    %c0_104 = arith.constant 0 : index
    %c0_105 = arith.constant 0 : index
    %c0_106 = arith.constant 0 : index
    %207 = vector.load %arg16[%c0_104, %c0_105, %c0_106] : memref<4x8x512xf32, #tpu.memory_space<vmem>>, vector<4x8x512xf32>
    tpu.vector_store %arg16[%c0_104, %c0_105, %c0_106], %206 {strides = array<i32>} : memref<4x8x512xf32, #tpu.memory_space<vmem>>, vector<4x8x512xf32>,
    %c1_107 = arith.constant 1 : index
    %c0_108 = arith.constant 0 : index
    %c0_109 = arith.constant 0 : index
    %208 = vector.load %arg6[%c1_107, %c0_108, %c0_109] : memref<2x128x512xbf16, #tpu.memory_space<vmem>>, vector<1x128x512xbf16>
    %209 = vector.shape_cast %208 : vector<1x128x512xbf16> to vector<128x512xbf16>
    %c0_i32_110 = arith.constant 0 : i32
    %c1_111 = arith.constant 1 : index
    %c0_112 = arith.constant 0 : index
    %c0_113 = arith.constant 0 : index
    %210 = vector.load %arg13[%c1_111, %c0_112, %c0_113] : memref<2x8x128xf32, #tpu.memory_space<vmem>>, vector<1x8x128xf32>
    %211 = vector.shape_cast %210 : vector<1x8x128xf32> to vector<8x128xf32>
    %212 = arith.index_cast %c0_i32_110 : i32 to index
    %c0_114 = arith.constant 0 : index
    %c0_115 = arith.constant 0 : index
    %213 = vector.load %arg16[%212, %c0_114, %c0_115] : memref<4x8x512xf32, #tpu.memory_space<vmem>>, vector<1x8x512xf32>
    %214 = vector.shape_cast %213 : vector<1x8x512xf32> to vector<8x512xf32>
    %215 = arith.truncf %211 : vector<8x128xf32> to vector<8x128xbf16>
    %cst_116 = arith.constant dense<0.000000e+00> : vector<8x512xf32>
    %216 = tpu.matmul %215, %209, %cst_116 {dimension_numbers = #tpu.dot_dimension_numbers<[1], [0], [0], [1], [0, 0, 1, 1], [], []>} : vector<8x128xbf16>, vector<128x512xbf16>, vector<8x512xf32> -> vector<8x512xf32>
    %217 = arith.addf %214, %216 : vector<8x512xf32>
    %218 = vector.extract_strided_slice %217 {offsets = [0, 0], sizes = [8, 128], strides = [1, 1]} : vector<8x512xf32> to vector<8x128xf32>
    %219 = arith.negf %218 : vector<8x128xf32>
    %220 = math.exp %219 : vector<8x128xf32>
    %cst_117 = arith.constant 1.000000e+00 : f32
    %221 = vector.broadcast %cst_117 : f32 to vector<8x128xf32>
    %222 = arith.addf %221, %220 : vector<8x128xf32>
    %223 = arith.divf %221, %222 : vector<8x128xf32>
    %224 = vector.extract_strided_slice %217 {offsets = [0, 128], sizes = [8, 128], strides = [1, 1]} : vector<8x512xf32> to vector<8x128xf32>
    %225 = arith.negf %224 : vector<8x128xf32>
    %226 = math.exp %225 : vector<8x128xf32>
    %cst_118 = arith.constant 1.000000e+00 : f32
    %227 = vector.broadcast %cst_118 : f32 to vector<8x128xf32>
    %228 = arith.addf %227, %226 : vector<8x128xf32>
    %229 = arith.divf %227, %228 : vector<8x128xf32>
    %230 = vector.extract_strided_slice %217 {offsets = [0, 256], sizes = [8, 128], strides = [1, 1]} : vector<8x512xf32> to vector<8x128xf32>
    %231 = math.tanh %230 : vector<8x128xf32>
    %232 = vector.extract_strided_slice %217 {offsets = [0, 384], sizes = [8, 128], strides = [1, 1]} : vector<8x512xf32> to vector<8x128xf32>
    %233 = arith.negf %232 : vector<8x128xf32>
    %234 = math.exp %233 : vector<8x128xf32>
    %cst_119 = arith.constant 1.000000e+00 : f32
    %235 = vector.broadcast %cst_119 : f32 to vector<8x128xf32>
    %236 = arith.addf %235, %234 : vector<8x128xf32>
    %237 = arith.divf %235, %236 : vector<8x128xf32>
    %c1_120 = arith.constant 1 : index
    %c0_121 = arith.constant 0 : index
    %c0_122 = arith.constant 0 : index
    %238 = vector.load %arg14[%c1_120, %c0_121, %c0_122] : memref<2x8x128xf32, #tpu.memory_space<vmem>>, vector<1x8x128xf32>
    %239 = vector.shape_cast %238 : vector<1x8x128xf32> to vector<8x128xf32>
    %240 = arith.mulf %229, %239 : vector<8x128xf32>
    %241 = arith.mulf %223, %231 : vector<8x128xf32>
    %242 = arith.addf %240, %241 : vector<8x128xf32>
    %243 = math.tanh %242 : vector<8x128xf32>
    %244 = arith.mulf %237, %243 : vector<8x128xf32>
    %c1_123 = arith.constant 1 : index
    %c0_124 = arith.constant 0 : index
    %c0_125 = arith.constant 0 : index
    %245 = vector.load %arg14[%c1_123, %c0_124, %c0_125] : memref<2x8x128xf32, #tpu.memory_space<vmem>>, vector<1x8x128xf32>
    %246 = vector.shape_cast %245 : vector<1x8x128xf32> to vector<8x128xf32>
    %247 = vector.shape_cast %242 : vector<8x128xf32> to vector<1x8x128xf32>
    tpu.vector_store %arg14[%c1_123, %c0_124, %c0_125], %247 {strides = array<i32>} : memref<2x8x128xf32, #tpu.memory_space<vmem>>, vector<1x8x128xf32>,
    %c1_126 = arith.constant 1 : index
    %c0_127 = arith.constant 0 : index
    %c0_128 = arith.constant 0 : index
    %248 = vector.load %arg13[%c1_126, %c0_127, %c0_128] : memref<2x8x128xf32, #tpu.memory_space<vmem>>, vector<1x8x128xf32>
    %249 = vector.shape_cast %248 : vector<1x8x128xf32> to vector<8x128xf32>
    %250 = vector.shape_cast %244 : vector<8x128xf32> to vector<1x8x128xf32>
    tpu.vector_store %arg13[%c1_126, %c0_127, %c0_128], %250 {strides = array<i32>} : memref<2x8x128xf32, #tpu.memory_space<vmem>>, vector<1x8x128xf32>,
    %251 = arith.index_cast %c0_i32_110 : i32 to index
    %c0_129 = arith.constant 0 : index
    %c0_130 = arith.constant 0 : index
    %252 = vector.load %arg15[%251, %c0_129, %c0_130] : memref<4x8x128xf32, #tpu.memory_space<vmem>>, vector<1x8x128xf32>
    %253 = vector.shape_cast %252 : vector<1x8x128xf32> to vector<8x128xf32>
    %254 = vector.shape_cast %244 : vector<8x128xf32> to vector<1x8x128xf32>
    tpu.vector_store %arg15[%251, %c0_129, %c0_130], %254 {strides = array<i32>} : memref<4x8x128xf32, #tpu.memory_space<vmem>>, vector<1x8x128xf32>,
    %c1_i32_131 = arith.constant 1 : i32
    %c1_132 = arith.constant 1 : index
    %c0_133 = arith.constant 0 : index
    %c0_134 = arith.constant 0 : index
    %255 = vector.load %arg13[%c1_132, %c0_133, %c0_134] : memref<2x8x128xf32, #tpu.memory_space<vmem>>, vector<1x8x128xf32>
    %256 = vector.shape_cast %255 : vector<1x8x128xf32> to vector<8x128xf32>
    %257 = arith.index_cast %c1_i32_131 : i32 to index
    %c0_135 = arith.constant 0 : index
    %c0_136 = arith.constant 0 : index
    %258 = vector.load %arg16[%257, %c0_135, %c0_136] : memref<4x8x512xf32, #tpu.memory_space<vmem>>, vector<1x8x512xf32>
    %259 = vector.shape_cast %258 : vector<1x8x512xf32> to vector<8x512xf32>
    %260 = arith.truncf %256 : vector<8x128xf32> to vector<8x128xbf16>
    %cst_137 = arith.constant dense<0.000000e+00> : vector<8x512xf32>
    %261 = tpu.matmul %260, %209, %cst_137 {dimension_numbers = #tpu.dot_dimension_numbers<[1], [0], [0], [1], [0, 0, 1, 1], [], []>} : vector<8x128xbf16>, vector<128x512xbf16>, vector<8x512xf32> -> vector<8x512xf32>
    %262 = arith.addf %259, %261 : vector<8x512xf32>
    %263 = vector.extract_strided_slice %262 {offsets = [0, 0], sizes = [8, 128], strides = [1, 1]} : vector<8x512xf32> to vector<8x128xf32>
    %264 = arith.negf %263 : vector<8x128xf32>
    %265 = math.exp %264 : vector<8x128xf32>
    %cst_138 = arith.constant 1.000000e+00 : f32
    %266 = vector.broadcast %cst_138 : f32 to vector<8x128xf32>
    %267 = arith.addf %266, %265 : vector<8x128xf32>
    %268 = arith.divf %266, %267 : vector<8x128xf32>
    %269 = vector.extract_strided_slice %262 {offsets = [0, 128], sizes = [8, 128], strides = [1, 1]} : vector<8x512xf32> to vector<8x128xf32>
    %270 = arith.negf %269 : vector<8x128xf32>
    %271 = math.exp %270 : vector<8x128xf32>
    %cst_139 = arith.constant 1.000000e+00 : f32
    %272 = vector.broadcast %cst_139 : f32 to vector<8x128xf32>
    %273 = arith.addf %272, %271 : vector<8x128xf32>
    %274 = arith.divf %272, %273 : vector<8x128xf32>
    %275 = vector.extract_strided_slice %262 {offsets = [0, 256], sizes = [8, 128], strides = [1, 1]} : vector<8x512xf32> to vector<8x128xf32>
    %276 = math.tanh %275 : vector<8x128xf32>
    %277 = vector.extract_strided_slice %262 {offsets = [0, 384], sizes = [8, 128], strides = [1, 1]} : vector<8x512xf32> to vector<8x128xf32>
    %278 = arith.negf %277 : vector<8x128xf32>
    %279 = math.exp %278 : vector<8x128xf32>
    %cst_140 = arith.constant 1.000000e+00 : f32
    %280 = vector.broadcast %cst_140 : f32 to vector<8x128xf32>
    %281 = arith.addf %280, %279 : vector<8x128xf32>
    %282 = arith.divf %280, %281 : vector<8x128xf32>
    %c1_141 = arith.constant 1 : index
    %c0_142 = arith.constant 0 : index
    %c0_143 = arith.constant 0 : index
    %283 = vector.load %arg14[%c1_141, %c0_142, %c0_143] : memref<2x8x128xf32, #tpu.memory_space<vmem>>, vector<1x8x128xf32>
    %284 = vector.shape_cast %283 : vector<1x8x128xf32> to vector<8x128xf32>
    %285 = arith.mulf %274, %284 : vector<8x128xf32>
    %286 = arith.mulf %268, %276 : vector<8x128xf32>
    %287 = arith.addf %285, %286 : vector<8x128xf32>
    %288 = math.tanh %287 : vector<8x128xf32>
    %289 = arith.mulf %282, %288 : vector<8x128xf32>
    %c1_144 = arith.constant 1 : index
    %c0_145 = arith.constant 0 : index
    %c0_146 = arith.constant 0 : index
    %290 = vector.load %arg14[%c1_144, %c0_145, %c0_146] : memref<2x8x128xf32, #tpu.memory_space<vmem>>, vector<1x8x128xf32>
    %291 = vector.shape_cast %290 : vector<1x8x128xf32> to vector<8x128xf32>
    %292 = vector.shape_cast %287 : vector<8x128xf32> to vector<1x8x128xf32>
    tpu.vector_store %arg14[%c1_144, %c0_145, %c0_146], %292 {strides = array<i32>} : memref<2x8x128xf32, #tpu.memory_space<vmem>>, vector<1x8x128xf32>,
    %c1_147 = arith.constant 1 : index
    %c0_148 = arith.constant 0 : index
    %c0_149 = arith.constant 0 : index
    %293 = vector.load %arg13[%c1_147, %c0_148, %c0_149] : memref<2x8x128xf32, #tpu.memory_space<vmem>>, vector<1x8x128xf32>
    %294 = vector.shape_cast %293 : vector<1x8x128xf32> to vector<8x128xf32>
    %295 = vector.shape_cast %289 : vector<8x128xf32> to vector<1x8x128xf32>
    tpu.vector_store %arg13[%c1_147, %c0_148, %c0_149], %295 {strides = array<i32>} : memref<2x8x128xf32, #tpu.memory_space<vmem>>, vector<1x8x128xf32>,
    %296 = arith.index_cast %c1_i32_131 : i32 to index
    %c0_150 = arith.constant 0 : index
    %c0_151 = arith.constant 0 : index
    %297 = vector.load %arg15[%296, %c0_150, %c0_151] : memref<4x8x128xf32, #tpu.memory_space<vmem>>, vector<1x8x128xf32>
    %298 = vector.shape_cast %297 : vector<1x8x128xf32> to vector<8x128xf32>
    %299 = vector.shape_cast %289 : vector<8x128xf32> to vector<1x8x128xf32>
    tpu.vector_store %arg15[%296, %c0_150, %c0_151], %299 {strides = array<i32>} : memref<4x8x128xf32, #tpu.memory_space<vmem>>, vector<1x8x128xf32>,
    %c2_i32_152 = arith.constant 2 : i32
    %c1_153 = arith.constant 1 : index
    %c0_154 = arith.constant 0 : index
    %c0_155 = arith.constant 0 : index
    %300 = vector.load %arg13[%c1_153, %c0_154, %c0_155] : memref<2x8x128xf32, #tpu.memory_space<vmem>>, vector<1x8x128xf32>
    %301 = vector.shape_cast %300 : vector<1x8x128xf32> to vector<8x128xf32>
    %302 = arith.index_cast %c2_i32_152 : i32 to index
    %c0_156 = arith.constant 0 : index
    %c0_157 = arith.constant 0 : index
    %303 = vector.load %arg16[%302, %c0_156, %c0_157] : memref<4x8x512xf32, #tpu.memory_space<vmem>>, vector<1x8x512xf32>
    %304 = vector.shape_cast %303 : vector<1x8x512xf32> to vector<8x512xf32>
    %305 = arith.truncf %301 : vector<8x128xf32> to vector<8x128xbf16>
    %cst_158 = arith.constant dense<0.000000e+00> : vector<8x512xf32>
    %306 = tpu.matmul %305, %209, %cst_158 {dimension_numbers = #tpu.dot_dimension_numbers<[1], [0], [0], [1], [0, 0, 1, 1], [], []>} : vector<8x128xbf16>, vector<128x512xbf16>, vector<8x512xf32> -> vector<8x512xf32>
    %307 = arith.addf %304, %306 : vector<8x512xf32>
    %308 = vector.extract_strided_slice %307 {offsets = [0, 0], sizes = [8, 128], strides = [1, 1]} : vector<8x512xf32> to vector<8x128xf32>
    %309 = arith.negf %308 : vector<8x128xf32>
    %310 = math.exp %309 : vector<8x128xf32>
    %cst_159 = arith.constant 1.000000e+00 : f32
    %311 = vector.broadcast %cst_159 : f32 to vector<8x128xf32>
    %312 = arith.addf %311, %310 : vector<8x128xf32>
    %313 = arith.divf %311, %312 : vector<8x128xf32>
    %314 = vector.extract_strided_slice %307 {offsets = [0, 128], sizes = [8, 128], strides = [1, 1]} : vector<8x512xf32> to vector<8x128xf32>
    %315 = arith.negf %314 : vector<8x128xf32>
    %316 = math.exp %315 : vector<8x128xf32>
    %cst_160 = arith.constant 1.000000e+00 : f32
    %317 = vector.broadcast %cst_160 : f32 to vector<8x128xf32>
    %318 = arith.addf %317, %316 : vector<8x128xf32>
    %319 = arith.divf %317, %318 : vector<8x128xf32>
    %320 = vector.extract_strided_slice %307 {offsets = [0, 256], sizes = [8, 128], strides = [1, 1]} : vector<8x512xf32> to vector<8x128xf32>
    %321 = math.tanh %320 : vector<8x128xf32>
    %322 = vector.extract_strided_slice %307 {offsets = [0, 384], sizes = [8, 128], strides = [1, 1]} : vector<8x512xf32> to vector<8x128xf32>
    %323 = arith.negf %322 : vector<8x128xf32>
    %324 = math.exp %323 : vector<8x128xf32>
    %cst_161 = arith.constant 1.000000e+00 : f32
    %325 = vector.broadcast %cst_161 : f32 to vector<8x128xf32>
    %326 = arith.addf %325, %324 : vector<8x128xf32>
    %327 = arith.divf %325, %326 : vector<8x128xf32>
    %c1_162 = arith.constant 1 : index
    %c0_163 = arith.constant 0 : index
    %c0_164 = arith.constant 0 : index
    %328 = vector.load %arg14[%c1_162, %c0_163, %c0_164] : memref<2x8x128xf32, #tpu.memory_space<vmem>>, vector<1x8x128xf32>
    %329 = vector.shape_cast %328 : vector<1x8x128xf32> to vector<8x128xf32>
    %330 = arith.mulf %319, %329 : vector<8x128xf32>
    %331 = arith.mulf %313, %321 : vector<8x128xf32>
    %332 = arith.addf %330, %331 : vector<8x128xf32>
    %333 = math.tanh %332 : vector<8x128xf32>
    %334 = arith.mulf %327, %333 : vector<8x128xf32>
    %c1_165 = arith.constant 1 : index
    %c0_166 = arith.constant 0 : index
    %c0_167 = arith.constant 0 : index
    %335 = vector.load %arg14[%c1_165, %c0_166, %c0_167] : memref<2x8x128xf32, #tpu.memory_space<vmem>>, vector<1x8x128xf32>
    %336 = vector.shape_cast %335 : vector<1x8x128xf32> to vector<8x128xf32>
    %337 = vector.shape_cast %332 : vector<8x128xf32> to vector<1x8x128xf32>
    tpu.vector_store %arg14[%c1_165, %c0_166, %c0_167], %337 {strides = array<i32>} : memref<2x8x128xf32, #tpu.memory_space<vmem>>, vector<1x8x128xf32>,
    %c1_168 = arith.constant 1 : index
    %c0_169 = arith.constant 0 : index
    %c0_170 = arith.constant 0 : index
    %338 = vector.load %arg13[%c1_168, %c0_169, %c0_170] : memref<2x8x128xf32, #tpu.memory_space<vmem>>, vector<1x8x128xf32>
    %339 = vector.shape_cast %338 : vector<1x8x128xf32> to vector<8x128xf32>
    %340 = vector.shape_cast %334 : vector<8x128xf32> to vector<1x8x128xf32>
    tpu.vector_store %arg13[%c1_168, %c0_169, %c0_170], %340 {strides = array<i32>} : memref<2x8x128xf32, #tpu.memory_space<vmem>>, vector<1x8x128xf32>,
    %341 = arith.index_cast %c2_i32_152 : i32 to index
    %c0_171 = arith.constant 0 : index
    %c0_172 = arith.constant 0 : index
    %342 = vector.load %arg15[%341, %c0_171, %c0_172] : memref<4x8x128xf32, #tpu.memory_space<vmem>>, vector<1x8x128xf32>
    %343 = vector.shape_cast %342 : vector<1x8x128xf32> to vector<8x128xf32>
    %344 = vector.shape_cast %334 : vector<8x128xf32> to vector<1x8x128xf32>
    tpu.vector_store %arg15[%341, %c0_171, %c0_172], %344 {strides = array<i32>} : memref<4x8x128xf32, #tpu.memory_space<vmem>>, vector<1x8x128xf32>,
    %c3_i32_173 = arith.constant 3 : i32
    %c1_174 = arith.constant 1 : index
    %c0_175 = arith.constant 0 : index
    %c0_176 = arith.constant 0 : index
    %345 = vector.load %arg13[%c1_174, %c0_175, %c0_176] : memref<2x8x128xf32, #tpu.memory_space<vmem>>, vector<1x8x128xf32>
    %346 = vector.shape_cast %345 : vector<1x8x128xf32> to vector<8x128xf32>
    %347 = arith.index_cast %c3_i32_173 : i32 to index
    %c0_177 = arith.constant 0 : index
    %c0_178 = arith.constant 0 : index
    %348 = vector.load %arg16[%347, %c0_177, %c0_178] : memref<4x8x512xf32, #tpu.memory_space<vmem>>, vector<1x8x512xf32>
    %349 = vector.shape_cast %348 : vector<1x8x512xf32> to vector<8x512xf32>
    %350 = arith.truncf %346 : vector<8x128xf32> to vector<8x128xbf16>
    %cst_179 = arith.constant dense<0.000000e+00> : vector<8x512xf32>
    %351 = tpu.matmul %350, %209, %cst_179 {dimension_numbers = #tpu.dot_dimension_numbers<[1], [0], [0], [1], [0, 0, 1, 1], [], []>} : vector<8x128xbf16>, vector<128x512xbf16>, vector<8x512xf32> -> vector<8x512xf32>
    %352 = arith.addf %349, %351 : vector<8x512xf32>
    %353 = vector.extract_strided_slice %352 {offsets = [0, 0], sizes = [8, 128], strides = [1, 1]} : vector<8x512xf32> to vector<8x128xf32>
    %354 = arith.negf %353 : vector<8x128xf32>
    %355 = math.exp %354 : vector<8x128xf32>
    %cst_180 = arith.constant 1.000000e+00 : f32
    %356 = vector.broadcast %cst_180 : f32 to vector<8x128xf32>
    %357 = arith.addf %356, %355 : vector<8x128xf32>
    %358 = arith.divf %356, %357 : vector<8x128xf32>
    %359 = vector.extract_strided_slice %352 {offsets = [0, 128], sizes = [8, 128], strides = [1, 1]} : vector<8x512xf32> to vector<8x128xf32>
    %360 = arith.negf %359 : vector<8x128xf32>
    %361 = math.exp %360 : vector<8x128xf32>
    %cst_181 = arith.constant 1.000000e+00 : f32
    %362 = vector.broadcast %cst_181 : f32 to vector<8x128xf32>
    %363 = arith.addf %362, %361 : vector<8x128xf32>
    %364 = arith.divf %362, %363 : vector<8x128xf32>
    %365 = vector.extract_strided_slice %352 {offsets = [0, 256], sizes = [8, 128], strides = [1, 1]} : vector<8x512xf32> to vector<8x128xf32>
    %366 = math.tanh %365 : vector<8x128xf32>
    %367 = vector.extract_strided_slice %352 {offsets = [0, 384], sizes = [8, 128], strides = [1, 1]} : vector<8x512xf32> to vector<8x128xf32>
    %368 = arith.negf %367 : vector<8x128xf32>
    %369 = math.exp %368 : vector<8x128xf32>
    %cst_182 = arith.constant 1.000000e+00 : f32
    %370 = vector.broadcast %cst_182 : f32 to vector<8x128xf32>
    %371 = arith.addf %370, %369 : vector<8x128xf32>
    %372 = arith.divf %370, %371 : vector<8x128xf32>
    %c1_183 = arith.constant 1 : index
    %c0_184 = arith.constant 0 : index
    %c0_185 = arith.constant 0 : index
    %373 = vector.load %arg14[%c1_183, %c0_184, %c0_185] : memref<2x8x128xf32, #tpu.memory_space<vmem>>, vector<1x8x128xf32>
    %374 = vector.shape_cast %373 : vector<1x8x128xf32> to vector<8x128xf32>
    %375 = arith.mulf %364, %374 : vector<8x128xf32>
    %376 = arith.mulf %358, %366 : vector<8x128xf32>
    %377 = arith.addf %375, %376 : vector<8x128xf32>
    %378 = math.tanh %377 : vector<8x128xf32>
    %379 = arith.mulf %372, %378 : vector<8x128xf32>
    %c1_186 = arith.constant 1 : index
    %c0_187 = arith.constant 0 : index
    %c0_188 = arith.constant 0 : index
    %380 = vector.load %arg14[%c1_186, %c0_187, %c0_188] : memref<2x8x128xf32, #tpu.memory_space<vmem>>, vector<1x8x128xf32>
    %381 = vector.shape_cast %380 : vector<1x8x128xf32> to vector<8x128xf32>
    %382 = vector.shape_cast %377 : vector<8x128xf32> to vector<1x8x128xf32>
    tpu.vector_store %arg14[%c1_186, %c0_187, %c0_188], %382 {strides = array<i32>} : memref<2x8x128xf32, #tpu.memory_space<vmem>>, vector<1x8x128xf32>,
    %c1_189 = arith.constant 1 : index
    %c0_190 = arith.constant 0 : index
    %c0_191 = arith.constant 0 : index
    %383 = vector.load %arg13[%c1_189, %c0_190, %c0_191] : memref<2x8x128xf32, #tpu.memory_space<vmem>>, vector<1x8x128xf32>
    %384 = vector.shape_cast %383 : vector<1x8x128xf32> to vector<8x128xf32>
    %385 = vector.shape_cast %379 : vector<8x128xf32> to vector<1x8x128xf32>
    tpu.vector_store %arg13[%c1_189, %c0_190, %c0_191], %385 {strides = array<i32>} : memref<2x8x128xf32, #tpu.memory_space<vmem>>, vector<1x8x128xf32>,
    %386 = arith.index_cast %c3_i32_173 : i32 to index
    %c0_192 = arith.constant 0 : index
    %c0_193 = arith.constant 0 : index
    %387 = vector.load %arg15[%386, %c0_192, %c0_193] : memref<4x8x128xf32, #tpu.memory_space<vmem>>, vector<1x8x128xf32>
    %388 = vector.shape_cast %387 : vector<1x8x128xf32> to vector<8x128xf32>
    %389 = vector.shape_cast %379 : vector<8x128xf32> to vector<1x8x128xf32>
    tpu.vector_store %arg15[%386, %c0_192, %c0_193], %389 {strides = array<i32>} : memref<4x8x128xf32, #tpu.memory_space<vmem>>, vector<1x8x128xf32>,
    %c4_i32_194 = arith.constant 4 : i32
    %c0_195 = arith.constant 0 : index
    %390 = memref.load %arg2[%c0_195] : memref<1xf32, #tpu.memory_space<smem>>
    %c0_196 = arith.constant 0 : index
    %c0_197 = arith.constant 0 : index
    %c0_198 = arith.constant 0 : index
    %391 = vector.load %arg15[%c0_196, %c0_197, %c0_198] : memref<4x8x128xf32, #tpu.memory_space<vmem>>, vector<4x8x128xf32>
    %392 = vector.shape_cast %391 : vector<4x8x128xf32> to vector<32x128xf32>
    %393 = arith.truncf %392 : vector<32x128xf32> to vector<32x128xbf16>
    %c0_199 = arith.constant 0 : index
    %c0_200 = arith.constant 0 : index
    %394 = vector.load %arg8[%c0_199, %c0_200] : memref<128x1024xbf16, #tpu.memory_space<vmem>>, vector<128x1024xbf16>
    %cst_201 = arith.constant dense<0.000000e+00> : vector<32x1024xf32>
    %395 = tpu.matmul %393, %394, %cst_201 {dimension_numbers = #tpu.dot_dimension_numbers<[1], [0], [0], [1], [0, 0, 1, 1], [], []>} : vector<32x128xbf16>, vector<128x1024xbf16>, vector<32x1024xf32> -> vector<32x1024xf32>
    %c0_202 = arith.constant 0 : index
    %c0_203 = arith.constant 0 : index
    %396 = vector.load %arg9[%c0_202, %c0_203] : memref<1x1024xf32, #tpu.memory_space<vmem>>, vector<1x1024xf32>
    %397 = vector.broadcast %396 : vector<1x1024xf32> to vector<32x1024xf32>
    %398 = arith.addf %395, %397 : vector<32x1024xf32>
    %cst_204 = arith.constant 0.000000e+00 : f32
    %399 = vector.broadcast %cst_204 : f32 to vector<32x1024xf32>
    %400 = arith.maximumf %398, %399 : vector<32x1024xf32>
    %cst_205 = arith.constant 0.000000e+00 : f32
    %401 = vector.broadcast %cst_205 : f32 to vector<32x1024xf32>
    %402 = arith.minimumf %398, %401 : vector<32x1024xf32>
    %403 = vector.broadcast %390 : f32 to vector<32x1024xf32>
    %404 = arith.mulf %403, %402 : vector<32x1024xf32>
    %405 = arith.addf %400, %404 : vector<32x1024xf32>
    %406 = arith.truncf %405 : vector<32x1024xf32> to vector<32x1024xbf16>
    %c0_206 = arith.constant 0 : index
    %c0_207 = arith.constant 0 : index
    %407 = vector.load %arg10[%c0_206, %c0_207] : memref<1024x128xbf16, #tpu.memory_space<vmem>>, vector<1024x128xbf16>
    %cst_208 = arith.constant dense<0.000000e+00> : vector<32x128xf32>
    %408 = tpu.matmul %406, %407, %cst_208 {dimension_numbers = #tpu.dot_dimension_numbers<[1], [0], [0], [1], [0, 0, 1, 1], [], []>} : vector<32x1024xbf16>, vector<1024x128xbf16>, vector<32x128xf32> -> vector<32x128xf32>
    %c0_209 = arith.constant 0 : index
    %c0_210 = arith.constant 0 : index
    %409 = vector.load %arg11[%c0_209, %c0_210] : memref<1x128xf32, #tpu.memory_space<vmem>>, vector<1x128xf32>
    %410 = vector.broadcast %409 : vector<1x128xf32> to vector<32x128xf32>
    %411 = arith.addf %408, %410 : vector<32x128xf32>
    %cst_211 = arith.constant 0.000000e+00 : f32
    %412 = vector.broadcast %cst_211 : f32 to vector<32x128xf32>
    %413 = arith.maximumf %411, %412 : vector<32x128xf32>
    %cst_212 = arith.constant 0.000000e+00 : f32
    %414 = vector.broadcast %cst_212 : f32 to vector<32x128xf32>
    %415 = arith.minimumf %411, %414 : vector<32x128xf32>
    %416 = vector.broadcast %390 : f32 to vector<32x128xf32>
    %417 = arith.mulf %416, %415 : vector<32x128xf32>
    %418 = arith.addf %413, %417 : vector<32x128xf32>
    %419 = vector.shape_cast %418 : vector<32x128xf32> to vector<4x8x128xf32>
    %c0_213 = arith.constant 0 : index
    %c0_214 = arith.constant 0 : index
    %c0_215 = arith.constant 0 : index
    %420 = vector.load %arg12[%c0_213, %c0_214, %c0_215] : memref<4x8x128xf32, #tpu.memory_space<vmem>>, vector<4x8x128xf32>
    tpu.vector_store %arg12[%c0_213, %c0_214, %c0_215], %419 {strides = array<i32>} : memref<4x8x128xf32, #tpu.memory_space<vmem>>, vector<4x8x128xf32>,
    return
  }
  func.func @transform_0(%arg0: i32, %arg1: i32) -> i32 {
    %c0_i32 = arith.constant 0 : i32
    %c0_i32_0 = arith.constant 0 : i32
    return %c0_i32 : i32
  }
  func.func @transform_1(%arg0: i32, %arg1: i32) -> (i32, i32, i32) {
    %c0_i32 = arith.constant 0 : i32
    %c0_i32_0 = arith.constant 0 : i32
    return %arg1, %arg0, %c0_i32 : i32, i32, i32
  }
  func.func @transform_2(%arg0: i32, %arg1: i32) -> (i32, i32) {
    %c0_i32 = arith.constant 0 : i32
    %c0_i32_0 = arith.constant 0 : i32
    %c0_i32_1 = arith.constant 0 : i32
    return %c0_i32, %c0_i32_0 : i32, i32
  }
  func.func @transform_3(%arg0: i32, %arg1: i32) -> (i32, i32, i32) {
    %c0_i32 = arith.constant 0 : i32
    %c0_i32_0 = arith.constant 0 : i32
    %c0_i32_1 = arith.constant 0 : i32
    %c0_i32_2 = arith.constant 0 : i32
    return %c0_i32, %c0_i32_0, %c0_i32_1 : i32, i32, i32
  }
  func.func @transform_4(%arg0: i32, %arg1: i32) -> (i32, i32, i32) {
    %c0_i32 = arith.constant 0 : i32
    %c0_i32_0 = arith.constant 0 : i32
    %c0_i32_1 = arith.constant 0 : i32
    %c0_i32_2 = arith.constant 0 : i32
    return %c0_i32, %c0_i32_0, %c0_i32_1 : i32, i32, i32
  }
  func.func @transform_5(%arg0: i32, %arg1: i32) -> (i32, i32, i32) {
    %c0_i32 = arith.constant 0 : i32
    %c0_i32_0 = arith.constant 0 : i32
    %c0_i32_1 = arith.constant 0 : i32
    %c0_i32_2 = arith.constant 0 : i32
    return %c0_i32, %c0_i32_0, %c0_i32_1 : i32, i32, i32
  }
  func.func @transform_6(%arg0: i32, %arg1: i32) -> (i32, i32) {
    %c0_i32 = arith.constant 0 : i32
    %c0_i32_0 = arith.constant 0 : i32
    %c0_i32_1 = arith.constant 0 : i32
    return %c0_i32, %c0_i32_0 : i32, i32
  }
  func.func @transform_7(%arg0: i32, %arg1: i32) -> (i32, i32) {
    %c0_i32 = arith.constant 0 : i32
    %c0_i32_0 = arith.constant 0 : i32
    %c0_i32_1 = arith.constant 0 : i32
    return %c0_i32, %c0_i32_0 : i32, i32
  }
  func.func @transform_8(%arg0: i32, %arg1: i32) -> (i32, i32) {
    %c0_i32 = arith.constant 0 : i32
    %c0_i32_0 = arith.constant 0 : i32
    %c0_i32_1 = arith.constant 0 : i32
    return %c0_i32, %c0_i32_0 : i32, i32
  }
  func.func @transform_9(%arg0: i32, %arg1: i32) -> (i32, i32) {
    %c0_i32 = arith.constant 0 : i32
    %c0_i32_0 = arith.constant 0 : i32
    %c0_i32_1 = arith.constant 0 : i32
    return %c0_i32, %c0_i32_0 : i32, i32
  }
  func.func @transform_10(%arg0: i32, %arg1: i32) -> (i32, i32, i32) {
    %c0_i32 = arith.constant 0 : i32
    %c0_i32_0 = arith.constant 0 : i32
    return %arg1, %arg0, %c0_i32 : i32, i32, i32
  }
}

</mosaic_0001>

<llo_original>
// kernel: tpu_custom_call.1
$region0: #{tpu_custom_call.1}
  #allocation0 [shape = 'u32[]', space=smem, size = 0x4, offset = 0x4, fixed_abs, tag = 'smem constant byte address 0x4 - core index']
  #allocation1 [shape = 'u32[72,128]{1,0:T(1,128)}', space=vmem, size = 0x9000, scoped, tag = 'internal scratch']
  #allocation2 [shape = 'f32[2,8,128]{2,1,0:T(8,128)}', space=vmem, size = 0x2000, scoped, tag = 'scratch operand']
  #allocation3 [shape = 'f32[2,8,128]{2,1,0:T(8,128)}', space=vmem, size = 0x2000, scoped, tag = 'scratch operand']
  #allocation4 [shape = 'f32[4,8,128]{2,1,0:T(8,128)}', space=vmem, size = 0x4000, scoped, tag = 'scratch operand']
  #allocation5 [shape = 'f32[4,8,512]{2,1,0:T(8,128)}', space=vmem, size = 0x10000, scoped, tag = 'scratch operand']
  #allocation6 [shape = 'f32[1]{0:T(128)S(6)}', space=smem, size = 0x200, scoped, tag = 'scoped memory for tpu_custom_call.1']
  %s0 = inlined_call_operand.<no memory space> [shape: f32[1], index: 0, kind: input, shape index: {}]
  %s1 = inlined_call_operand.hbm [shape: f32[8,8,16], index: 1, kind: input, shape index: {}]
  %s2 = inlined_call_operand.hbm [shape: bf16[16,512], index: 2, kind: input, shape index: {}]
  %s3 = inlined_call_operand.hbm [shape: bf16[1,128,512], index: 3, kind: input, shape index: {}]
  %s4 = inlined_call_operand.hbm [shape: bf16[2,128,512], index: 4, kind: input, shape index: {}]
  %s5 = inlined_call_operand.hbm [shape: f32[2,1,512], index: 5, kind: input, shape index: {}]
  %s6 = inlined_call_operand.hbm [shape: bf16[128,1024], index: 6, kind: input, shape index: {}]
  %s7 = inlined_call_operand.hbm [shape: f32[1,1024], index: 7, kind: input, shape index: {}]
  %s8 = inlined_call_operand.hbm [shape: bf16[1024,128], index: 8, kind: input, shape index: {}]
  %s9 = inlined_call_operand.vmem [shape: f32[1,128], index: 9, kind: input, shape index: {}]
  %s10 = inlined_call_operand.hbm [shape: f32[8,8,128], index: 10, kind: output, shape index: {}]
  %s11 = sld [smem:[#allocation0]]
  $region109: #{tpu_custom_call.1} parent=0
    _
  %s13 = ssub.s32 1, %s11
  %s14 = scalar_select 0, %s13, %s11
  %15 = sst [smem:[#allocation6]] %s0
  $region1: #{tpu_custom_call.1} parent=0
    #allocation7 [shape = 'u8[32768]{0}', space=vmem, size = 0x8000, scoped, tag = 'input window, operand 1']
    #allocation8 [shape = 's32[2]{0}', space=sflag, size = 0x8, scoped, tag = 'scoped memory for tpu_custom_call.1']
    #allocation9 [shape = 's32[2]{0}', space=sflag, size = 0x8, scoped, tag = 'scoped memory for tpu_custom_call.1']
    #allocation10 [shape = 'u8[16384]{0}', space=vmem, size = 0x4000, scoped, tag = 'input window, operand 2, single buffered']
    #allocation11 [shape = 's32[1]{0}', space=sflag, size = 0x4, scoped, tag = 'scoped memory for tpu_custom_call.1']
    #allocation12 [shape = 'u8[131072]{0}', space=vmem, size = 0x20000, scoped, tag = 'input window, operand 3, single buffered']
    #allocation13 [shape = 'u8[262144]{0}', space=vmem, size = 0x40000, scoped, tag = 'input window, operand 4, single buffered']
    #allocation14 [shape = 's32[1]{0}', space=sflag, size = 0x4, scoped, tag = 'scoped memory for tpu_custom_call.1']
    #allocation15 [shape = 'u8[4096]{0}', space=vmem, size = 0x1000, scoped, tag = 'input window, operand 5, single buffered']
    #allocation16 [shape = 'u8[262144]{0}', space=vmem, size = 0x40000, scoped, tag = 'input window, operand 6, single buffered']
    #allocation17 [shape = 's32[1]{0}', space=sflag, size = 0x4, scoped, tag = 'scoped memory for tpu_custom_call.1']
    #allocation18 [shape = 'u8[4096]{0}', space=vmem, size = 0x1000, scoped, tag = 'input window, operand 7, single buffered']
    #allocation19 [shape = 'u8[262144]{0}', space=vmem, size = 0x40000, scoped, tag = 'input window, operand 8, single buffered']
    #allocation20 [shape = 's32[1]{0}', space=sflag, size = 0x4, scoped, tag = 'scoped memory for tpu_custom_call.1']
    #allocation21 [shape = 'u8[32768]{0}', space=vmem, size = 0x8000, scoped, tag = 'output window, operand 0']
    %16 = vsyncpa [#allocation8], 0
    %s17 = scalar_lea.sflag [#allocation8], 1
    %18 = vsyncpa %s17, 0
    %19 = vsyncpa [#allocation11], 0
    %20 = vsyncpa [#allocation14], 0
    %21 = vsyncpa [#allocation17], 0
    %22 = vsyncpa [#allocation20], 0
    %23 = vsyncpa [#allocation9], 0
    %s24 = scalar_lea.sflag [#allocation9], 1
    %25 = vsyncpa %s24, 0
    loop: start=0, step=1, limit=4
    $region2: #{tpu_custom_call.1} parent=1 // loop_pre_header
      _
    $region3: #{tpu_custom_call.1} parent=1 // loop_header
      %s27 = sphi 0, %s31
      %p28 = scmp.ge.s32.totalorder %s27, 4
      %s34 = sphi 0, %s46
      %s35 = sphi 0, %s42
      %s36 = sphi 0, %s34
      %s37 = sphi 0, %s35
      %s38 = sphi 0, %s36
      %s39 = sphi 0, %s37
      %s47 = sphi 0, %s47
      %s49 = sphi 0, %s47
      %s50 = sphi 0, %s49
      %s64 = sphi 0, %s50
      %s72 = sphi 0, %s74
      %s75 = sphi 0, %s72
      %s76 = sphi 0, %s75
      %s92 = sphi 0, %s76
      %s96 = sphi 0, %s96
      %s98 = sphi 0, %s96
      %s99 = sphi 0, %s98
      %s113 = sphi 0, %s99
      %s117 = sphi 0, %s117
      %s119 = sphi 0, %s117
      %s120 = sphi 0, %s119
      %s134 = sphi 0, %s120
      %s138 = sphi 0, %s138
      %s140 = sphi 0, %s138
      %s141 = sphi 0, %s140
      %s155 = sphi 0, %s141
      %s159 = sphi 0, %s159
      %s161 = sphi 0, %s159
      %s162 = sphi 0, %s161
      %s176 = sphi 0, %s162
      %s180 = sphi 0, %s180
      %s182 = sphi 0, %s180
      %s183 = sphi 0, %s182
      %s197 = sphi 0, %s183
      %s201 = sphi 0, %s201
      %s203 = sphi 0, %s201
      %s204 = sphi 0, %s203
      %s218 = sphi 0, %s204
      %s222 = sphi 0, %s222
      %s224 = sphi 0, %s222
      %s225 = sphi 0, %s224
      %s239 = sphi 0, %s225
      %s243 = sphi 0, %s243
      %s245 = sphi 0, %s243
      %s246 = sphi 0, %s245
      %s260 = sphi 0, %s246
      %s268 = sphi 0, %s270
      %s271 = sphi 0, %s268
      %s272 = sphi 0, %s271
      %s288 = sphi 0, %s272
    $region4: #{tpu_custom_call.1} parent=1 // loop_header_branch
      %30 = sbr.rel (%p28) target = $region8
    $region5: #{tpu_custom_call.1} parent=1 // loop_body
      %s32 = ssub.s32 %s27, 1
      %s33 = ssub.s32 %s27, 2
      %s40 = sadd.s32 1, %s35
      %p41 = scmp.ge.s32.totalorder %s40, 2
      %s42 = scalar_select %p41, 0, %s40
      %s43 = sadd.s32 1, %s34
      %s44 = scalar_select %p41, %s43, %s34
      %p45 = scmp.ge.s32.totalorder %s44, 1
      %s46 = scalar_select %p45, 0, %s44
      %s48 = sadd.s32 %s47, 1
      %p51 = scmp.eq.s32.totalorder %s27, 1
      %p52 = scmp.ne.s32.totalorder %s47, %s49
      %p53 = scmp.eq.s32.totalorder %s27, 0
      %p54 = por %p52, %p53
      %p55 = scmp.ne.s32.totalorder %s47, %s49
      %p56 = scmp.eq.s32.totalorder %s32, 1
      %p57 = por %p55, %p56
      %p58 = scmp.ne.s32.totalorder %s49, %s50
      %p59 = scmp.eq.s32.totalorder %s32, 0
      %p60 = por %p58, %p59
      %p61 = scmp.ne.s32.totalorder %s49, %s50
      %p62 = scmp.eq.s32.totalorder %s33, 1
      %p63 = por %p61, %p62
      %p65 = scmp.ne.s32.totalorder %s50, %s64
      %p66 = scmp.eq.s32.totalorder %s33, 0
      %p67 = por %p65, %p66
      %s68 = ssub.s32 %s35, %s42
      %s69 = ssub.s32 %s34, %s46
      %s70 = sor.u32 %s68, %s69
      %p71 = scmp.eq.s32.totalorder %s70, 0
      %s73 = sadd.s32 %s72, 1
      %s74 = scalar_select %p71, %s72, %s73
      %p77 = pneg %p71
      %p78 = scmp.eq.s32.totalorder %s27, 1
      %p79 = por %p77, %p78
      %p80 = scmp.ne.s32.totalorder %s72, %s75
      %p81 = scmp.eq.s32.totalorder %s27, 0
      %p82 = por %p80, %p81
      %p83 = scmp.ne.s32.totalorder %s72, %s75
      %p84 = scmp.eq.s32.totalorder %s32, 1
      %p85 = por %p83, %p84
      %p86 = scmp.ne.s32.totalorder %s75, %s76
      %p87 = scmp.eq.s32.totalorder %s32, 0
      %p88 = por %p86, %p87
      %p89 = scmp.ne.s32.totalorder %s75, %s76
      %p90 = scmp.eq.s32.totalorder %s33, 1
      %p91 = por %p89, %p90
      %p93 = scmp.ne.s32.totalorder %s76, %s92
      %p94 = scmp.eq.s32.totalorder %s33, 0
      %p95 = por %p93, %p94
      %s97 = sadd.s32 %s96, 1
      %p100 = scmp.eq.s32.totalorder %s27, 1
      %p101 = scmp.ne.s32.totalorder %s96, %s98
      %p102 = scmp.eq.s32.totalorder %s27, 0
      %p103 = por %p101, %p102
      %p104 = scmp.ne.s32.totalorder %s96, %s98
      %p105 = scmp.eq.s32.totalorder %s32, 1
      %p106 = por %p104, %p105
      %p107 = scmp.ne.s32.totalorder %s98, %s99
      %p108 = scmp.eq.s32.totalorder %s32, 0
      %p109 = por %p107, %p108
      %p110 = scmp.ne.s32.totalorder %s98, %s99
      %p111 = scmp.eq.s32.totalorder %s33, 1
      %p112 = por %p110, %p111
      %p114 = scmp.ne.s32.totalorder %s99, %s113
      %p115 = scmp.eq.s32.totalorder %s33, 0
      %p116 = por %p114, %p115
      %s118 = sadd.s32 %s117, 1
      %p121 = scmp.eq.s32.totalorder %s27, 1
      %p122 = scmp.ne.s32.totalorder %s117, %s119
      %p123 = scmp.eq.s32.totalorder %s27, 0
      %p124 = por %p122, %p123
      %p125 = scmp.ne.s32.totalorder %s117, %s119
      %p126 = scmp.eq.s32.totalorder %s32, 1
      %p127 = por %p125, %p126
      %p128 = scmp.ne.s32.totalorder %s119, %s120
      %p129 = scmp.eq.s32.totalorder %s32, 0
      %p130 = por %p128, %p129
      %p131 = scmp.ne.s32.totalorder %s119, %s120
      %p132 = scmp.eq.s32.totalorder %s33, 1
      %p133 = por %p131, %p132
      %p135 = scmp.ne.s32.totalorder %s120, %s134
      %p136 = scmp.eq.s32.totalorder %s33, 0
      %p137 = por %p135, %p136
      %s139 = sadd.s32 %s138, 1
      %p142 = scmp.eq.s32.totalorder %s27, 1
      %p143 = scmp.ne.s32.totalorder %s138, %s140
      %p144 = scmp.eq.s32.totalorder %s27, 0
      %p145 = por %p143, %p144
      %p146 = scmp.ne.s32.totalorder %s138, %s140
      %p147 = scmp.eq.s32.totalorder %s32, 1
      %p148 = por %p146, %p147
      %p149 = scmp.ne.s32.totalorder %s140, %s141
      %p150 = scmp.eq.s32.totalorder %s32, 0
      %p151 = por %p149, %p150
      %p152 = scmp.ne.s32.totalorder %s140, %s141
      %p153 = scmp.eq.s32.totalorder %s33, 1
      %p154 = por %p152, %p153
      %p156 = scmp.ne.s32.totalorder %s141, %s155
      %p157 = scmp.eq.s32.totalorder %s33, 0
      %p158 = por %p156, %p157
      %s160 = sadd.s32 %s159, 1
      %p163 = scmp.eq.s32.totalorder %s27, 1
      %p164 = scmp.ne.s32.totalorder %s159, %s161
      %p165 = scmp.eq.s32.totalorder %s27, 0
      %p166 = por %p164, %p165
      %p167 = scmp.ne.s32.totalorder %s159, %s161
      %p168 = scmp.eq.s32.totalorder %s32, 1
      %p169 = por %p167, %p168
      %p170 = scmp.ne.s32.totalorder %s161, %s162
      %p171 = scmp.eq.s32.totalorder %s32, 0
      %p172 = por %p170, %p171
      %p173 = scmp.ne.s32.totalorder %s161, %s162
      %p174 = scmp.eq.s32.totalorder %s33, 1
      %p175 = por %p173, %p174
      %p177 = scmp.ne.s32.totalorder %s162, %s176
      %p178 = scmp.eq.s32.totalorder %s33, 0
      %p179 = por %p177, %p178
      %s181 = sadd.s32 %s180, 1
      %p184 = scmp.eq.s32.totalorder %s27, 1
      %p185 = scmp.ne.s32.totalorder %s180, %s182
      %p186 = scmp.eq.s32.totalorder %s27, 0
      %p187 = por %p185, %p186
      %p188 = scmp.ne.s32.totalorder %s180, %s182
      %p189 = scmp.eq.s32.totalorder %s32, 1
      %p190 = por %p188, %p189
      %p191 = scmp.ne.s32.totalorder %s182, %s183
      %p192 = scmp.eq.s32.totalorder %s32, 0
      %p193 = por %p191, %p192
      %p194 = scmp.ne.s32.totalorder %s182, %s183
      %p195 = scmp.eq.s32.totalorder %s33, 1
      %p196 = por %p194, %p195
      %p198 = scmp.ne.s32.totalorder %s183, %s197
      %p199 = scmp.eq.s32.totalorder %s33, 0
      %p200 = por %p198, %p199
      %s202 = sadd.s32 %s201, 1
      %p205 = scmp.eq.s32.totalorder %s27, 1
      %p206 = scmp.ne.s32.totalorder %s201, %s203
      %p207 = scmp.eq.s32.totalorder %s27, 0
      %p208 = por %p206, %p207
      %p209 = scmp.ne.s32.totalorder %s201, %s203
      %p210 = scmp.eq.s32.totalorder %s32, 1
      %p211 = por %p209, %p210
      %p212 = scmp.ne.s32.totalorder %s203, %s204
      %p213 = scmp.eq.s32.totalorder %s32, 0
      %p214 = por %p212, %p213
      %p215 = scmp.ne.s32.totalorder %s203, %s204
      %p216 = scmp.eq.s32.totalorder %s33, 1
      %p217 = por %p215, %p216
      %p219 = scmp.ne.s32.totalorder %s204, %s218
      %p220 = scmp.eq.s32.totalorder %s33, 0
      %p221 = por %p219, %p220
      %s223 = sadd.s32 %s222, 1
      %p226 = scmp.eq.s32.totalorder %s27, 1
      %p227 = scmp.ne.s32.totalorder %s222, %s224
      %p228 = scmp.eq.s32.totalorder %s27, 0
      %p229 = por %p227, %p228
      %p230 = scmp.ne.s32.totalorder %s222, %s224
      %p231 = scmp.eq.s32.totalorder %s32, 1
      %p232 = por %p230, %p231
      %p233 = scmp.ne.s32.totalorder %s224, %s225
      %p234 = scmp.eq.s32.totalorder %s32, 0
      %p235 = por %p233, %p234
      %p236 = scmp.ne.s32.totalorder %s224, %s225
      %p237 = scmp.eq.s32.totalorder %s33, 1
      %p238 = por %p236, %p237
      %p240 = scmp.ne.s32.totalorder %s225, %s239
      %p241 = scmp.eq.s32.totalorder %s33, 0
      %p242 = por %p240, %p241
      %s244 = sadd.s32 %s243, 1
      %p247 = scmp.eq.s32.totalorder %s27, 1
      %p248 = scmp.ne.s32.totalorder %s243, %s245
      %p249 = scmp.eq.s32.totalorder %s27, 0
      %p250 = por %p248, %p249
      %p251 = scmp.ne.s32.totalorder %s243, %s245
      %p252 = scmp.eq.s32.totalorder %s32, 1
      %p253 = por %p251, %p252
      %p254 = scmp.ne.s32.totalorder %s245, %s246
      %p255 = scmp.eq.s32.totalorder %s32, 0
      %p256 = por %p254, %p255
      %p257 = scmp.ne.s32.totalorder %s245, %s246
      %p258 = scmp.eq.s32.totalorder %s33, 1
      %p259 = por %p257, %p258
      %p261 = scmp.ne.s32.totalorder %s246, %s260
      %p262 = scmp.eq.s32.totalorder %s33, 0
      %p263 = por %p261, %p262
      %s264 = ssub.s32 %s35, %s42
      %s265 = ssub.s32 %s34, %s46
      %s266 = sor.u32 %s264, %s265
      %p267 = scmp.eq.s32.totalorder %s266, 0
      %s269 = sadd.s32 %s268, 1
      %s270 = scalar_select %p267, %s268, %s269
      %p273 = pneg %p267
      %p274 = scmp.eq.s32.totalorder %s27, 1
      %p275 = por %p273, %p274
      %p276 = scmp.ne.s32.totalorder %s268, %s271
      %p277 = scmp.eq.s32.totalorder %s27, 0
      %p278 = por %p276, %p277
      %p279 = scmp.ne.s32.totalorder %s268, %s271
      %p280 = scmp.eq.s32.totalorder %s32, 1
      %p281 = por %p279, %p280
      %p282 = scmp.ne.s32.totalorder %s271, %s272
      %p283 = scmp.eq.s32.totalorder %s32, 0
      %p284 = por %p282, %p283
      %p285 = scmp.ne.s32.totalorder %s271, %s272
      %p286 = scmp.eq.s32.totalorder %s33, 1
      %p287 = por %p285, %p286
      %p289 = scmp.ne.s32.totalorder %s272, %s288
      %p290 = scmp.eq.s32.totalorder %s33, 0
      %p291 = por %p289, %p290
      %p292 = scmp.le.s32.totalorder 1, %s27
      %p293 = scmp.lt.s32.totalorder %s27, 3
      %p294 = pnand %p292, %p293
      %p295 = pneg %p294
      // Predicated region
      $region9: #{tpu_custom_call.1} parent=5 // pred_check
        _
      $region10: #{tpu_custom_call.1} parent=5 // pred_check_branch
        %297 = sbr.rel (%p294) target = $region12
      $region11: #{tpu_custom_call.1} parent=5 // pred_region
        %s298 = ssub.s32 %s27, 1
        // Predicated region
        $region13: #{tpu_custom_call.1} parent=11 // pred_check
          %p299 = pneg %p60
        $region14: #{tpu_custom_call.1} parent=11 // pred_check_branch
          %301 = sbr.rel (%p299) target = $region16
        $region15: #{tpu_custom_call.1} parent=11 // pred_region
          _
        $region16: #{tpu_custom_call.1} parent=11 // pred_fallthru
          _
        // Predicated region
        $region17: #{tpu_custom_call.1} parent=11 // pred_check
          %p302 = pneg %p109
        $region18: #{tpu_custom_call.1} parent=11 // pred_check_branch
          %304 = sbr.rel (%p302) target = $region20
        $region19: #{tpu_custom_call.1} parent=11 // pred_region
          %306 = vsyncadd [#allocation11], 0
          %s307 = sshll.u32 %s2, 4
          %s308 = int_to_ptr.hbm [resolvable:$true] %s307
          %s309 = sshll.u32 [#allocation10], 4
          %s310 = int_to_ptr.vmem [resolvable:$true] %s309
          %315 = dma.hbm_to_vmem [thread:$0]  %s308, 512, %s310, [#allocation11], 256, 256, 16
        $region20: #{tpu_custom_call.1} parent=11 // pred_fallthru
          _
        // Predicated region
        $region21: #{tpu_custom_call.1} parent=11 // pred_check
          %p316 = pneg %p130
        $region22: #{tpu_custom_call.1} parent=11 // pred_check_branch
          %318 = sbr.rel (%p316) target = $region24
        $region23: #{tpu_custom_call.1} parent=11 // pred_region
          %320 = vsyncadd [#allocation11], 0
          %s321 = sshll.u32 %s3, 4
          %s322 = int_to_ptr.hbm [resolvable:$true] %s321
          %s323 = sshll.u32 [#allocation12], 4
          %s324 = int_to_ptr.vmem [resolvable:$true] %s323
          %329 = dma.hbm_to_vmem [thread:$0]  %s322, 4096, %s324, [#allocation11], 256, 256, 16
        $region24: #{tpu_custom_call.1} parent=11 // pred_fallthru
          _
        // Predicated region
        $region25: #{tpu_custom_call.1} parent=11 // pred_check
          %p330 = pneg %p151
        $region26: #{tpu_custom_call.1} parent=11 // pred_check_branch
          %332 = sbr.rel (%p330) target = $region28
        $region27: #{tpu_custom_call.1} parent=11 // pred_region
          %334 = vsyncadd [#allocation14], 0
          %s335 = sshll.u32 %s4, 4
          %s336 = int_to_ptr.hbm [resolvable:$true] %s335
          %s337 = sshll.u32 [#allocation13], 4
          %s338 = int_to_ptr.vmem [resolvable:$true] %s337
          %343 = dma.hbm_to_vmem [thread:$0]  %s336, 8192, %s338, [#allocation14], 256, 256, 16
        $region28: #{tpu_custom_call.1} parent=11 // pred_fallthru
          _
        // Predicated region
        $region29: #{tpu_custom_call.1} parent=11 // pred_check
          %p344 = pneg %p172
        $region30: #{tpu_custom_call.1} parent=11 // pred_check_branch
          %346 = sbr.rel (%p344) target = $region32
        $region31: #{tpu_custom_call.1} parent=11 // pred_region
          %348 = vsyncadd [#allocation14], 0
          %s349 = sshll.u32 %s5, 4
          %s350 = int_to_ptr.hbm [resolvable:$true] %s349
          %s351 = sshll.u32 [#allocation15], 4
          %s352 = int_to_ptr.vmem [resolvable:$true] %s351
          %357 = dma.hbm_to_vmem [thread:$0]  %s350, 128, %s352, [#allocation14], 64, 64, 4
        $region32: #{tpu_custom_call.1} parent=11 // pred_fallthru
          _
        // Predicated region
        $region33: #{tpu_custom_call.1} parent=11 // pred_check
          %p358 = pneg %p193
        $region34: #{tpu_custom_call.1} parent=11 // pred_check_branch
          %360 = sbr.rel (%p358) target = $region36
        $region35: #{tpu_custom_call.1} parent=11 // pred_region
          %362 = vsyncadd [#allocation17], 0
          %s363 = sshll.u32 %s6, 4
          %s364 = int_to_ptr.hbm [resolvable:$true] %s363
          %s365 = sshll.u32 [#allocation16], 4
          %s366 = int_to_ptr.vmem [resolvable:$true] %s365
          %371 = dma.hbm_to_vmem [thread:$0]  %s364, 8192, %s366, [#allocation17], 512, 512, 32
        $region36: #{tpu_custom_call.1} parent=11 // pred_fallthru
          _
        // Predicated region
        $region37: #{tpu_custom_call.1} parent=11 // pred_check
          %p372 = pneg %p214
        $region38: #{tpu_custom_call.1} parent=11 // pred_check_branch
          %374 = sbr.rel (%p372) target = $region40
        $region39: #{tpu_custom_call.1} parent=11 // pred_region
          %376 = vsyncadd [#allocation17], 0
          %s378 = sshll.u32 %s7, 4
          %s379 = int_to_ptr.hbm [resolvable:$true] %s378
          %s380 = sshll.u32 [#allocation18], 4
          %s381 = int_to_ptr.vmem [resolvable:$true] %s380
          %383 = dma.hbm_to_vmem [thread:$0]  %s379, 128, %s381, [#allocation17]
        $region40: #{tpu_custom_call.1} parent=11 // pred_fallthru
          _
        // Predicated region
        $region41: #{tpu_custom_call.1} parent=11 // pred_check
          %p384 = pneg %p235
        $region42: #{tpu_custom_call.1} parent=11 // pred_check_branch
          %386 = sbr.rel (%p384) target = $region44
        $region43: #{tpu_custom_call.1} parent=11 // pred_region
          %388 = vsyncadd [#allocation20], 0
          %s389 = sshll.u32 %s8, 4
          %s390 = int_to_ptr.hbm [resolvable:$true] %s389
          %s391 = sshll.u32 [#allocation19], 4
          %s392 = int_to_ptr.vmem [resolvable:$true] %s391
          %397 = dma.hbm_to_vmem [thread:$0]  %s390, 8192, %s392, [#allocation20], 64, 64, 4
        $region44: #{tpu_custom_call.1} parent=11 // pred_fallthru
          _
        // Predicated region
        $region45: #{tpu_custom_call.1} parent=11 // pred_check
          %p398 = pneg %p256
        $region46: #{tpu_custom_call.1} parent=11 // pred_check_branch
          %400 = sbr.rel (%p398) target = $region48
        $region47: #{tpu_custom_call.1} parent=11 // pred_region
          _
        $region48: #{tpu_custom_call.1} parent=11 // pred_fallthru
          _
      $region12: #{tpu_custom_call.1} parent=5 // pred_fallthru
        _
      %p401 = scmp.lt.s32.totalorder %s27, 2
      // Predicated region
      $region49: #{tpu_custom_call.1} parent=5 // pred_check
        %p402 = pneg %p401
      $region50: #{tpu_custom_call.1} parent=5 // pred_check_branch
        %404 = sbr.rel (%p402) target = $region52
      $region51: #{tpu_custom_call.1} parent=5 // pred_region
        // Predicated region
        $region53: #{tpu_custom_call.1} parent=51 // pred_check
          %p405 = pneg %p82
        $region54: #{tpu_custom_call.1} parent=51 // pred_check_branch
          %407 = sbr.rel (%p405) target = $region56
        $region55: #{tpu_custom_call.1} parent=51 // pred_region
          %s408 = sand.u32 %s72, 1
          %s409 = scalar_lea.sflag [#allocation8], %s408
          %s410 = sand.u32 %s72, 1
          %s411 = smul.addr %s410, 32
          %s412 = scalar_lea.vmem [#allocation7], %s411
          %s413 = smul.u32 4, %s35
          %415 = vsyncadd %s409, 0
          %s416 = sadd.s32 %s34, %s413
          %s417 = smul.addr %s416, 8
          %s418 = scalar_lea.hbm %s1, %s417
          %s419 = sshll.u32 %s418, 4
          %s420 = int_to_ptr.hbm [resolvable:$true] %s419
          %s421 = sshll.u32 %s412, 4
          %s422 = int_to_ptr.vmem [resolvable:$true] %s421
          %427 = dma.hbm_to_vmem [thread:$0]  %s420, 512, %s422, %s409, 128, 128, 8
        $region56: #{tpu_custom_call.1} parent=51 // pred_fallthru
          _
      $region52: #{tpu_custom_call.1} parent=5 // pred_fallthru
        _
      %p428 = scmp.le.s32.totalorder 1, %s27
      %p429 = scmp.lt.s32.totalorder %s27, 3
      %p430 = pnand %p428, %p429
      %p431 = pneg %p430
      // Predicated region
      $region57: #{tpu_custom_call.1} parent=5 // pred_check
        _
      $region58: #{tpu_custom_call.1} parent=5 // pred_check_branch
        %433 = sbr.rel (%p430) target = $region60
      $region59: #{tpu_custom_call.1} parent=5 // pred_region
        %s434 = ssub.s32 %s27, 1
        %s435 = sand.u32 %s75, 1
        %s436 = scalar_lea.sflag [#allocation8], %s435
        %s437 = sand.u32 %s75, 1
        %s438 = smul.addr %s437, 32
        %s439 = scalar_lea.vmem [#allocation7], %s438
        // Predicated region
        $region61: #{tpu_custom_call.1} parent=59 // pred_check
          %p440 = pneg %p88
        $region62: #{tpu_custom_call.1} parent=59 // pred_check_branch
          %442 = sbr.rel (%p440) target = $region64
        $region63: #{tpu_custom_call.1} parent=59 // pred_region
          %444 = dma.done %s436, 512
        $region64: #{tpu_custom_call.1} parent=59 // pred_fallthru
          _
        // Predicated region
        $region65: #{tpu_custom_call.1} parent=59 // pred_check
          %p445 = pneg %p109
        $region66: #{tpu_custom_call.1} parent=59 // pred_check_branch
          %447 = sbr.rel (%p445) target = $region68
        $region67: #{tpu_custom_call.1} parent=59 // pred_region
          %449 = dma.done [#allocation11], 512
        $region68: #{tpu_custom_call.1} parent=59 // pred_fallthru
          _
        // Predicated region
        $region69: #{tpu_custom_call.1} parent=59 // pred_check
          %p450 = pneg %p130
        $region70: #{tpu_custom_call.1} parent=59 // pred_check_branch
          %452 = sbr.rel (%p450) target = $region72
        $region71: #{tpu_custom_call.1} parent=59 // pred_region
          %454 = dma.done [#allocation11], 4096
        $region72: #{tpu_custom_call.1} parent=59 // pred_fallthru
          _
        // Predicated region
        $region73: #{tpu_custom_call.1} parent=59 // pred_check
          %p455 = pneg %p151
        $region74: #{tpu_custom_call.1} parent=59 // pred_check_branch
          %457 = sbr.rel (%p455) target = $region76
        $region75: #{tpu_custom_call.1} parent=59 // pred_region
          %459 = dma.done [#allocation14], 8192
        $region76: #{tpu_custom_call.1} parent=59 // pred_fallthru
          _
        // Predicated region
        $region77: #{tpu_custom_call.1} parent=59 // pred_check
          %p460 = pneg %p172
        $region78: #{tpu_custom_call.1} parent=59 // pred_check_branch
          %462 = sbr.rel (%p460) target = $region80
        $region79: #{tpu_custom_call.1} parent=59 // pred_region
          %464 = dma.done [#allocation14], 128
        $region80: #{tpu_custom_call.1} parent=59 // pred_fallthru
          _
        // Predicated region
        $region81: #{tpu_custom_call.1} parent=59 // pred_check
          %p465 = pneg %p193
        $region82: #{tpu_custom_call.1} parent=59 // pred_check_branch
          %467 = sbr.rel (%p465) target = $region84
        $region83: #{tpu_custom_call.1} parent=59 // pred_region
          %469 = dma.done [#allocation17], 8192
        $region84: #{tpu_custom_call.1} parent=59 // pred_fallthru
          _
        // Predicated region
        $region85: #{tpu_custom_call.1} parent=59 // pred_check
          %p470 = pneg %p214
        $region86: #{tpu_custom_call.1} parent=59 // pred_check_branch
          %472 = sbr.rel (%p470) target = $region88
        $region87: #{tpu_custom_call.1} parent=59 // pred_region
          %474 = dma.done [#allocation17], 128
        $region88: #{tpu_custom_call.1} parent=59 // pred_fallthru
          _
        // Predicated region
        $region89: #{tpu_custom_call.1} parent=59 // pred_check
          %p475 = pneg %p235
        $region90: #{tpu_custom_call.1} parent=59 // pred_check_branch
          %477 = sbr.rel (%p475) target = $region92
        $region91: #{tpu_custom_call.1} parent=59 // pred_region
          %479 = dma.done [#allocation20], 8192
        $region92: #{tpu_custom_call.1} parent=59 // pred_fallthru
          _
        %p480 = pneg %p60
        %p481 = pneg %p57
        %s482 = sand.u32 %s75, 1
        %s483 = scalar_lea.sflag [#allocation8], %s482
        %s484 = sand.u32 %s75, 1
        %s485 = smul.addr %s484, 32
        %s486 = scalar_lea.vmem [#allocation7], %s485
        %p487 = pneg %p88
        %p488 = pneg %p85
        %p489 = pneg %p109
        %p490 = pneg %p106
        %p491 = pneg %p130
        %p492 = pneg %p127
        %p493 = pneg %p151
        %p494 = pneg %p148
        %p495 = pneg %p172
        %p496 = pneg %p169
        %p497 = pneg %p193
        %p498 = pneg %p190
        %p499 = pneg %p214
        %p500 = pneg %p211
        %p501 = pneg %p235
        %p502 = pneg %p232
        %p503 = pneg %p256
        %p504 = pneg %p253
        %p505 = pneg %p284
        %p506 = pneg %p281
        %s507 = sand.u32 %s271, 1
        %s508 = scalar_lea.sflag [#allocation9], %s507
        %s509 = sand.u32 %s271, 1
        %s510 = smul.addr %s509, 32
        %s511 = scalar_lea.vmem [#allocation21], %s510
        %s512 = smul.u32 4, %s37
        %s513 = smul.u32 4, %s37
        %p515 = scmp.eq.s32.totalorder %s37, 0
        // Predicated region
        $region93: #{tpu_custom_call.1} parent=59 // pred_check
          %p516 = pneg %p515
        $region94: #{tpu_custom_call.1} parent=59 // pred_check_branch
          %518 = sbr.rel (%p516) target = $region96
        $region95: #{tpu_custom_call.1} parent=59 // pred_region
          %519 = vst [vmem:[#allocation2] sm:$0xff] 0.0
          %520 = vst [vmem:[#allocation2 + $0x8] sm:$0xff] 0.0
          %521 = vst [vmem:[#allocation3] sm:$0xff] 0.0
          %522 = vst [vmem:[#allocation3 + $0x8] sm:$0xff] 0.0
        $region96: #{tpu_custom_call.1} parent=59 // pred_fallthru
          _
        %v523 = vld [vmem:[%s439] sm:$0xff]
        %v524 = vld [vmem:[%s439 + $0x8] sm:$0xff]
        %v525 = vld [vmem:[%s439 + $0x10] sm:$0xff]
        %v526 = vld [vmem:[%s439 + $0x18] sm:$0xff]
        %v527 = vpack.c.bf16 %v524, %v523
        %v528 = vpack.c.bf16 %v526, %v525
        %v529 = vld [vmem:[#allocation10] sm:$0xff]
        %v530 = vld [vmem:[#allocation10 + $0x8] sm:$0xff]
        %v531 = vld [vmem:[#allocation10 + $0x10] sm:$0xff]
        %v532 = vld [vmem:[#allocation10 + $0x18] sm:$0xff]
        %v533 = vld [vmem:[#allocation15] sm:$0xf]
        %v535 = vperm.slane %v533, 0
        %v536 = vperm.slane %v533, 1
        %v537 = vperm.slane %v533, 2
        %v538 = vperm.slane %v533, 3
        %v547 = vunpack.c.l.b16 %v529
        %v548 = vunpack.c.h.b16 %v529
        %v549 = vunpack.c.l.b16 %v530
        %v550 = vunpack.c.h.b16 %v530
        %v551 = vunpack.c.l.b16 %v531
        %v552 = vunpack.c.h.b16 %v531
        %v553 = vunpack.c.l.b16 %v532
        %v554 = vunpack.c.h.b16 %v532
        %v555 = vpack.c.b16 %v551, %v547
        %v556 = vpack.c.b16 %v552, %v548
        %v557 = vpack.c.b16 %v553, %v549
        %v558 = vpack.c.b16 %v554, %v550
        %vm563 = vcmask 130048
        %v565 = vsel %vm563, %v527, 0
        %v568 = vsel %vm563, %v528, 0
        %570 = vmatpush.bf16.msra.mxu0 0
        %571 = vmatpush.bf16.msra.mxu0 0
        %572 = vmatpush.bf16.msra.mxu0 0
        %573 = vmatpush.bf16.msra.mxu0 0
        %574 = vmatpush.bf16.msra.mxu0 0
        %575 = vmatpush.bf16.msra.mxu0 0
        %576 = vmatpush.bf16.msra.mxu0 0
        %577 = vmatpush.bf16.msra.mxu0 %v555
        %578 = vmatmul.bf16.gmra.mxu0 %v565
        %v579 = vpop.f32.mrf.mxu0
        %v580 = vadd.f32 %v535, %v579
        %v581 = vpop.f32.mrf.mxu0
        %v582 = vadd.f32 %v535, %v581
        %583 = vmatmul.bf16.gmra.mxu0 %v568
        %v584 = vpop.f32.mrf.mxu0
        %v585 = vadd.f32 %v535, %v584
        %v586 = vpop.f32.mrf.mxu0
        %v587 = vadd.f32 %v535, %v586
        %588 = vdwg.mxu0
        %589 = vmatpush.bf16.msra.mxu0 0
        %590 = vmatpush.bf16.msra.mxu0 0
        %591 = vmatpush.bf16.msra.mxu0 0
        %592 = vmatpush.bf16.msra.mxu0 0
        %593 = vmatpush.bf16.msra.mxu0 0
        %594 = vmatpush.bf16.msra.mxu0 0
        %595 = vmatpush.bf16.msra.mxu0 0
        %596 = vmatpush.bf16.msra.mxu0 %v556
        %597 = vmatmul.bf16.gmra.mxu0 %v565
        %v598 = vpop.f32.mrf.mxu0
        %v599 = vadd.f32 %v536, %v598
        %v600 = vpop.f32.mrf.mxu0
        %v601 = vadd.f32 %v536, %v600
        %602 = vmatmul.bf16.gmra.mxu0 %v568
        %v603 = vpop.f32.mrf.mxu0
        %v604 = vadd.f32 %v536, %v603
        %v605 = vpop.f32.mrf.mxu0
        %v606 = vadd.f32 %v536, %v605
        %607 = vdwg.mxu0
        %608 = vmatpush.bf16.msra.mxu0 0
        %609 = vmatpush.bf16.msra.mxu0 0
        %610 = vmatpush.bf16.msra.mxu0 0
        %611 = vmatpush.bf16.msra.mxu0 0
        %612 = vmatpush.bf16.msra.mxu0 0
        %613 = vmatpush.bf16.msra.mxu0 0
        %614 = vmatpush.bf16.msra.mxu0 0
        %615 = vmatpush.bf16.msra.mxu0 %v557
        %616 = vmatmul.bf16.gmra.mxu0 %v565
        %v617 = vpop.f32.mrf.mxu0
        %v618 = vadd.f32 %v537, %v617
        %v619 = vpop.f32.mrf.mxu0
        %v620 = vadd.f32 %v537, %v619
        %621 = vmatmul.bf16.gmra.mxu0 %v568
        %v622 = vpop.f32.mrf.mxu0
        %v623 = vadd.f32 %v537, %v622
        %v624 = vpop.f32.mrf.mxu0
        %v625 = vadd.f32 %v537, %v624
        %626 = vdwg.mxu0
        %627 = vmatpush.bf16.msra.mxu0 0
        %628 = vmatpush.bf16.msra.mxu0 0
        %629 = vmatpush.bf16.msra.mxu0 0
        %630 = vmatpush.bf16.msra.mxu0 0
        %631 = vmatpush.bf16.msra.mxu0 0
        %632 = vmatpush.bf16.msra.mxu0 0
        %633 = vmatpush.bf16.msra.mxu0 0
        %634 = vmatpush.bf16.msra.mxu0 %v558
        %635 = vmatmul.bf16.gmra.mxu0 %v565
        %v636 = vpop.f32.mrf.mxu0
        %v637 = vadd.f32 %v538, %v636
        %v638 = vpop.f32.mrf.mxu0
        %v639 = vadd.f32 %v538, %v638
        %640 = vmatmul.bf16.gmra.mxu0 %v568
        %v641 = vpop.f32.mrf.mxu0
        %v642 = vadd.f32 %v538, %v641
        %v643 = vpop.f32.mrf.mxu0
        %v644 = vadd.f32 %v538, %v643
        %645 = vdwg.mxu0
        %646 = vst [vmem:[#allocation5] sm:$0xff] %v580
        %647 = vst [vmem:[#allocation5 + $0x8] sm:$0xff] %v599
        %648 = vst [vmem:[#allocation5 + $0x10] sm:$0xff] %v618
        %649 = vst [vmem:[#allocation5 + $0x18] sm:$0xff] %v637
        %650 = vst [vmem:[#allocation5 + $0x20] sm:$0xff] %v582
        %651 = vst [vmem:[#allocation5 + $0x28] sm:$0xff] %v601
        %652 = vst [vmem:[#allocation5 + $0x30] sm:$0xff] %v620
        %653 = vst [vmem:[#allocation5 + $0x38] sm:$0xff] %v639
        %654 = vst [vmem:[#allocation5 + $0x40] sm:$0xff] %v585
        %655 = vst [vmem:[#allocation5 + $0x48] sm:$0xff] %v604
        %656 = vst [vmem:[#allocation5 + $0x50] sm:$0xff] %v623
        %657 = vst [vmem:[#allocation5 + $0x58] sm:$0xff] %v642
        %658 = vst [vmem:[#allocation5 + $0x60] sm:$0xff] %v587
        %659 = vst [vmem:[#allocation5 + $0x68] sm:$0xff] %v606
        %660 = vst [vmem:[#allocation5 + $0x70] sm:$0xff] %v625
        %661 = vst [vmem:[#allocation5 + $0x78] sm:$0xff] %v644
        %v662 = vld [vmem:[#allocation13] sm:$0xff]
        %v663 = vld [vmem:[#allocation13 + $0x8] sm:$0xff]
        %v664 = vld [vmem:[#allocation13 + $0x10] sm:$0xff]
        %v665 = vld [vmem:[#allocation13 + $0x18] sm:$0xff]
        %v666 = vld [vmem:[#allocation13 + $0x20] sm:$0xff]
        %v667 = vld [vmem:[#allocation13 + $0x28] sm:$0xff]
        %v668 = vld [vmem:[#allocation13 + $0x30] sm:$0xff]
        %v669 = vld [vmem:[#allocation13 + $0x38] sm:$0xff]
        %v670 = vld [vmem:[#allocation13 + $0x40] sm:$0xff]
        %v671 = vld [vmem:[#allocation13 + $0x48] sm:$0xff]
        %v672 = vld [vmem:[#allocation13 + $0x50] sm:$0xff]
        %v673 = vld [vmem:[#allocation13 + $0x58] sm:$0xff]
        %v674 = vld [vmem:[#allocation13 + $0x60] sm:$0xff]
        %v675 = vld [vmem:[#allocation13 + $0x68] sm:$0xff]
        %v676 = vld [vmem:[#allocation13 + $0x70] sm:$0xff]
        %v677 = vld [vmem:[#allocation13 + $0x78] sm:$0xff]
        %v678 = vld [vmem:[#allocation13 + $0x80] sm:$0xff]
        %v679 = vld [vmem:[#allocation13 + $0x88] sm:$0xff]
        %v680 = vld [vmem:[#allocation13 + $0x90] sm:$0xff]
        %v681 = vld [vmem:[#allocation13 + $0x98] sm:$0xff]
        %v682 = vld [vmem:[#allocation13 + $0xa0] sm:$0xff]
        %v683 = vld [vmem:[#allocation13 + $0xa8] sm:$0xff]
        %v684 = vld [vmem:[#allocation13 + $0xb0] sm:$0xff]
        %v685 = vld [vmem:[#allocation13 + $0xb8] sm:$0xff]
        %v686 = vld [vmem:[#allocation13 + $0xc0] sm:$0xff]
        %v687 = vld [vmem:[#allocation13 + $0xc8] sm:$0xff]
        %v688 = vld [vmem:[#allocation13 + $0xd0] sm:$0xff]
        %v689 = vld [vmem:[#allocation13 + $0xd8] sm:$0xff]
        %v690 = vld [vmem:[#allocation13 + $0xe0] sm:$0xff]
        %v691 = vld [vmem:[#allocation13 + $0xe8] sm:$0xff]
        %v692 = vld [vmem:[#allocation13 + $0xf0] sm:$0xff]
        %v693 = vld [vmem:[#allocation13 + $0xf8] sm:$0xff]
        %v694 = vld [vmem:[#allocation2] sm:$0xff]
        %v695 = vld [vmem:[#allocation5] sm:$0xff]
        %v696 = vld [vmem:[#allocation5 + $0x8] sm:$0xff]
        %v697 = vld [vmem:[#allocation5 + $0x10] sm:$0xff]
        %v698 = vld [vmem:[#allocation5 + $0x18] sm:$0xff]
        %v699 = vpack.c.bf16 %v694, %v694
        %v732 = vunpack.c.l.b16 %v662
        %v733 = vunpack.c.h.b16 %v662
        %v734 = vunpack.c.l.b16 %v663
        %v735 = vunpack.c.h.b16 %v663
        %v736 = vunpack.c.l.b16 %v664
        %v737 = vunpack.c.h.b16 %v664
        %v738 = vunpack.c.l.b16 %v665
        %v739 = vunpack.c.h.b16 %v665
        %v740 = vunpack.c.l.b16 %v666
        %v741 = vunpack.c.h.b16 %v666
        %v742 = vunpack.c.l.b16 %v667
        %v743 = vunpack.c.h.b16 %v667
        %v744 = vunpack.c.l.b16 %v668
        %v745 = vunpack.c.h.b16 %v668
        %v746 = vunpack.c.l.b16 %v669
        %v747 = vunpack.c.h.b16 %v669
        %v748 = vunpack.c.l.b16 %v670
        %v749 = vunpack.c.h.b16 %v670
        %v750 = vunpack.c.l.b16 %v671
        %v751 = vunpack.c.h.b16 %v671
        %v752 = vunpack.c.l.b16 %v672
        %v753 = vunpack.c.h.b16 %v672
        %v754 = vunpack.c.l.b16 %v673
        %v755 = vunpack.c.h.b16 %v673
        %v756 = vunpack.c.l.b16 %v674
        %v757 = vunpack.c.h.b16 %v674
        %v758 = vunpack.c.l.b16 %v675
        %v759 = vunpack.c.h.b16 %v675
        %v760 = vunpack.c.l.b16 %v676
        %v761 = vunpack.c.h.b16 %v676
        %v762 = vunpack.c.l.b16 %v677
        %v763 = vunpack.c.h.b16 %v677
        %v764 = vunpack.c.l.b16 %v678
        %v765 = vunpack.c.h.b16 %v678
        %v766 = vunpack.c.l.b16 %v679
        %v767 = vunpack.c.h.b16 %v679
        %v768 = vunpack.c.l.b16 %v680
        %v769 = vunpack.c.h.b16 %v680
        %v770 = vunpack.c.l.b16 %v681
        %v771 = vunpack.c.h.b16 %v681
        %v772 = vunpack.c.l.b16 %v682
        %v773 = vunpack.c.h.b16 %v682
        %v774 = vunpack.c.l.b16 %v683
        %v775 = vunpack.c.h.b16 %v683
        %v776 = vunpack.c.l.b16 %v684
        %v777 = vunpack.c.h.b16 %v684
        %v778 = vunpack.c.l.b16 %v685
        %v779 = vunpack.c.h.b16 %v685
        %v780 = vunpack.c.l.b16 %v686
        %v781 = vunpack.c.h.b16 %v686
        %v782 = vunpack.c.l.b16 %v687
        %v783 = vunpack.c.h.b16 %v687
        %v784 = vunpack.c.l.b16 %v688
        %v785 = vunpack.c.h.b16 %v688
        %v786 = vunpack.c.l.b16 %v689
        %v787 = vunpack.c.h.b16 %v689
        %v788 = vunpack.c.l.b16 %v690
        %v789 = vunpack.c.h.b16 %v690
        %v790 = vunpack.c.l.b16 %v691
        %v791 = vunpack.c.h.b16 %v691
        %v792 = vunpack.c.l.b16 %v692
        %v793 = vunpack.c.h.b16 %v692
        %v794 = vunpack.c.l.b16 %v693
        %v795 = vunpack.c.h.b16 %v693
        %v796 = vpack.c.b16 %v736, %v732
        %v797 = vpack.c.b16 %v737, %v733
        %v798 = vpack.c.b16 %v738, %v734
        %v799 = vpack.c.b16 %v739, %v735
        %v800 = vpack.c.b16 %v744, %v740
        %v801 = vpack.c.b16 %v745, %v741
        %v802 = vpack.c.b16 %v746, %v742
        %v803 = vpack.c.b16 %v747, %v743
        %v804 = vpack.c.b16 %v752, %v748
        %v805 = vpack.c.b16 %v753, %v749
        %v806 = vpack.c.b16 %v754, %v750
        %v807 = vpack.c.b16 %v755, %v751
        %v808 = vpack.c.b16 %v760, %v756
        %v809 = vpack.c.b16 %v761, %v757
        %v810 = vpack.c.b16 %v762, %v758
        %v811 = vpack.c.b16 %v763, %v759
        %v812 = vpack.c.b16 %v768, %v764
        %v813 = vpack.c.b16 %v769, %v765
        %v814 = vpack.c.b16 %v770, %v766
        %v815 = vpack.c.b16 %v771, %v767
        %v816 = vpack.c.b16 %v776, %v772
        %v817 = vpack.c.b16 %v777, %v773
        %v818 = vpack.c.b16 %v778, %v774
        %v819 = vpack.c.b16 %v779, %v775
        %v820 = vpack.c.b16 %v784, %v780
        %v821 = vpack.c.b16 %v785, %v781
        %v822 = vpack.c.b16 %v786, %v782
        %v823 = vpack.c.b16 %v787, %v783
        %v824 = vpack.c.b16 %v792, %v788
        %v825 = vpack.c.b16 %v793, %v789
        %v826 = vpack.c.b16 %v794, %v790
        %v827 = vpack.c.b16 %v795, %v791
        %860 = vmatpush.bf16.msra.mxu0 %v824
        %861 = vmatpush.bf16.msra.mxu0 %v820
        %862 = vmatpush.bf16.msra.mxu0 %v816
        %863 = vmatpush.bf16.msra.mxu0 %v812
        %864 = vmatpush.bf16.msra.mxu0 %v808
        %865 = vmatpush.bf16.msra.mxu0 %v804
        %866 = vmatpush.bf16.msra.mxu0 %v800
        %867 = vmatpush.bf16.msra.mxu0 %v796
        %868 = vmatmul.bf16.gmra.mxu0 %v699
        %v869 = vpop.f32.mrf.mxu0
        %v870 = vadd.f32 0.0, %v869
        %v871 = vpop.f32.mrf.mxu0
        %872 = vdwg.mxu0
        %873 = vmatpush.bf16.msra.mxu0 %v825
        %874 = vmatpush.bf16.msra.mxu0 %v821
        %875 = vmatpush.bf16.msra.mxu0 %v817
        %876 = vmatpush.bf16.msra.mxu0 %v813
        %877 = vmatpush.bf16.msra.mxu0 %v809
        %878 = vmatpush.bf16.msra.mxu0 %v805
        %879 = vmatpush.bf16.msra.mxu0 %v801
        %880 = vmatpush.bf16.msra.mxu0 %v797
        %881 = vmatmul.bf16.gmra.mxu0 %v699
        %v882 = vpop.f32.mrf.mxu0
        %v883 = vadd.f32 0.0, %v882
        %v884 = vpop.f32.mrf.mxu0
        %885 = vdwg.mxu0
        %886 = vmatpush.bf16.msra.mxu0 %v826
        %887 = vmatpush.bf16.msra.mxu0 %v822
        %888 = vmatpush.bf16.msra.mxu0 %v818
        %889 = vmatpush.bf16.msra.mxu0 %v814
        %890 = vmatpush.bf16.msra.mxu0 %v810
        %891 = vmatpush.bf16.msra.mxu0 %v806
        %892 = vmatpush.bf16.msra.mxu0 %v802
        %893 = vmatpush.bf16.msra.mxu0 %v798
        %894 = vmatmul.bf16.gmra.mxu0 %v699
        %v895 = vpop.f32.mrf.mxu0
        %v896 = vadd.f32 0.0, %v895
        %v897 = vpop.f32.mrf.mxu0
        %898 = vdwg.mxu0
        %899 = vmatpush.bf16.msra.mxu0 %v827
        %900 = vmatpush.bf16.msra.mxu0 %v823
        %901 = vmatpush.bf16.msra.mxu0 %v819
        %902 = vmatpush.bf16.msra.mxu0 %v815
        %903 = vmatpush.bf16.msra.mxu0 %v811
        %904 = vmatpush.bf16.msra.mxu0 %v807
        %905 = vmatpush.bf16.msra.mxu0 %v803
        %906 = vmatpush.bf16.msra.mxu0 %v799
        %907 = vmatmul.bf16.gmra.mxu0 %v699
        %v908 = vpop.f32.mrf.mxu0
        %v909 = vadd.f32 0.0, %v908
        %v910 = vpop.f32.mrf.mxu0
        %911 = vdwg.mxu0
        %v912 = vadd.f32 %v695, %v870
        %v913 = vadd.f32 %v696, %v883
        %v914 = vadd.f32 %v697, %v896
        %v915 = vadd.f32 %v698, %v909
        %v916 = vxor.u32 %v912, 2147483648
        %v917 = vmul.f32 %v916, 1.442695
        %v918 = vpow.pop %v917
        %v919 = vadd.f32 %v918, 1.0
        %v920 = vrcp.pop %v919
        %v921 = vmul.f32 %v919, %v920
        %v922 = vsub.f32 1.0, %v921
        %v923 = vmul.f32 %v920, %v922
        %v924 = vadd.f32 %v920, %v923
        %vm925 = vweird.f32 %v919
        %vm926 = vweird.f32 %v920
        %vm927 = vmor %vm925, %vm926
        %v928 = vsel %vm927, %v920, %v924
        %v929 = vand.u32 2147483647, %v919
        %vm930 = vcmp.eq.f32.partialorder %v929, 8.507059e+37
        %v931 = vand.u32 %v919, 2147483648
        %v932 = vor.u32 1.1754944e-38, %v931
        %v933 = vsel %vm930, %v932, %v928
        %v934 = vmul.f32 1.0, %v933
        %v935 = vxor.u32 %v913, 2147483648
        %v936 = vmul.f32 %v935, 1.442695
        %v937 = vpow.pop %v936
        %v938 = vadd.f32 %v937, 1.0
        %v939 = vrcp.pop %v938
        %v940 = vmul.f32 %v938, %v939
        %v941 = vsub.f32 1.0, %v940
        %v942 = vmul.f32 %v939, %v941
        %v943 = vadd.f32 %v939, %v942
        %vm944 = vweird.f32 %v938
        %vm945 = vweird.f32 %v939
        %vm946 = vmor %vm944, %vm945
        %v947 = vsel %vm946, %v939, %v943
        %v948 = vand.u32 2147483647, %v938
        %vm949 = vcmp.eq.f32.partialorder %v948, 8.507059e+37
        %v950 = vand.u32 %v938, 2147483648
        %v951 = vor.u32 1.1754944e-38, %v950
        %v952 = vsel %vm949, %v951, %v947
        %v953 = vmul.f32 1.0, %v952
        %v954 = vtanh.pop %v914
        %v955 = vxor.u32 %v915, 2147483648
        %v956 = vmul.f32 %v955, 1.442695
        %v957 = vpow.pop %v956
        %v958 = vadd.f32 %v957, 1.0
        %v959 = vrcp.pop %v958
        %v960 = vmul.f32 %v958, %v959
        %v961 = vsub.f32 1.0, %v960
        %v962 = vmul.f32 %v959, %v961
        %v963 = vadd.f32 %v959, %v962
        %vm964 = vweird.f32 %v958
        %vm965 = vweird.f32 %v959
        %vm966 = vmor %vm964, %vm965
        %v967 = vsel %vm966, %v959, %v963
        %v968 = vand.u32 2147483647, %v958
        %vm969 = vcmp.eq.f32.partialorder %v968, 8.507059e+37
        %v970 = vand.u32 %v958, 2147483648
        %v971 = vor.u32 1.1754944e-38, %v970
        %v972 = vsel %vm969, %v971, %v967
        %v973 = vmul.f32 1.0, %v972
        %v974 = vld [vmem:[#allocation3] sm:$0xff]
        %v975 = vmul.f32 %v953, %v974
        %v976 = vmul.f32 %v934, %v954
        %v977 = vadd.f32 %v975, %v976
        %v978 = vtanh.pop %v977
        %v979 = vmul.f32 %v973, %v978
        %980 = vst [vmem:[#allocation3] sm:$0xff] %v977
        %981 = vst [vmem:[#allocation2] sm:$0xff] %v979
        %982 = vst [vmem:[#allocation4] sm:$0xff] %v979
        %v983 = vld [vmem:[#allocation2] sm:$0xff]
        %s984 = scalar_lea.vmem [#allocation5], 32
        %v985 = vld [vmem:[%s984] sm:$0xff]
        %v986 = vld [vmem:[%s984 + $0x8] sm:$0xff]
        %v987 = vld [vmem:[%s984 + $0x10] sm:$0xff]
        %v988 = vld [vmem:[%s984 + $0x18] sm:$0xff]
        %v989 = vpack.c.bf16 %v983, %v983
        %990 = vmatpush.bf16.msra.mxu0 %v824
        %991 = vmatpush.bf16.msra.mxu0 %v820
        %992 = vmatpush.bf16.msra.mxu0 %v816
        %993 = vmatpush.bf16.msra.mxu0 %v812
        %994 = vmatpush.bf16.msra.mxu0 %v808
        %995 = vmatpush.bf16.msra.mxu0 %v804
        %996 = vmatpush.bf16.msra.mxu0 %v800
        %997 = vmatpush.bf16.msra.mxu0 %v796
        %998 = vmatmul.bf16.gmra.mxu0 %v989
        %v999 = vpop.f32.mrf.mxu0
        %v1000 = vadd.f32 0.0, %v999
        %v1001 = vpop.f32.mrf.mxu0
        %1002 = vdwg.mxu0
        %1003 = vmatpush.bf16.msra.mxu0 %v825
        %1004 = vmatpush.bf16.msra.mxu0 %v821
        %1005 = vmatpush.bf16.msra.mxu0 %v817
        %1006 = vmatpush.bf16.msra.mxu0 %v813
        %1007 = vmatpush.bf16.msra.mxu0 %v809
        %1008 = vmatpush.bf16.msra.mxu0 %v805
        %1009 = vmatpush.bf16.msra.mxu0 %v801
        %1010 = vmatpush.bf16.msra.mxu0 %v797
        %1011 = vmatmul.bf16.gmra.mxu0 %v989
        %v1012 = vpop.f32.mrf.mxu0
        %v1013 = vadd.f32 0.0, %v1012
        %v1014 = vpop.f32.mrf.mxu0
        %1015 = vdwg.mxu0
        %1016 = vmatpush.bf16.msra.mxu0 %v826
        %1017 = vmatpush.bf16.msra.mxu0 %v822
        %1018 = vmatpush.bf16.msra.mxu0 %v818
        %1019 = vmatpush.bf16.msra.mxu0 %v814
        %1020 = vmatpush.bf16.msra.mxu0 %v810
        %1021 = vmatpush.bf16.msra.mxu0 %v806
        %1022 = vmatpush.bf16.msra.mxu0 %v802
        %1023 = vmatpush.bf16.msra.mxu0 %v798
        %1024 = vmatmul.bf16.gmra.mxu0 %v989
        %v1025 = vpop.f32.mrf.mxu0
        %v1026 = vadd.f32 0.0, %v1025
        %v1027 = vpop.f32.mrf.mxu0
        %1028 = vdwg.mxu0
        %1029 = vmatpush.bf16.msra.mxu0 %v827
        %1030 = vmatpush.bf16.msra.mxu0 %v823
        %1031 = vmatpush.bf16.msra.mxu0 %v819
        %1032 = vmatpush.bf16.msra.mxu0 %v815
        %1033 = vmatpush.bf16.msra.mxu0 %v811
        %1034 = vmatpush.bf16.msra.mxu0 %v807
        %1035 = vmatpush.bf16.msra.mxu0 %v803
        %1036 = vmatpush.bf16.msra.mxu0 %v799
        %1037 = vmatmul.bf16.gmra.mxu0 %v989
        %v1038 = vpop.f32.mrf.mxu0
        %v1039 = vadd.f32 0.0, %v1038
        %v1040 = vpop.f32.mrf.mxu0
        %1041 = vdwg.mxu0
        %v1042 = vadd.f32 %v985, %v1000
        %v1043 = vadd.f32 %v986, %v1013
        %v1044 = vadd.f32 %v987, %v1026
        %v1045 = vadd.f32 %v988, %v1039
        %v1046 = vxor.u32 %v1042, 2147483648
        %v1047 = vmul.f32 %v1046, 1.442695
        %v1048 = vpow.pop %v1047
        %v1049 = vadd.f32 %v1048, 1.0
        %v1050 = vrcp.pop %v1049
        %v1051 = vmul.f32 %v1049, %v1050
        %v1052 = vsub.f32 1.0, %v1051
        %v1053 = vmul.f32 %v1050, %v1052
        %v1054 = vadd.f32 %v1050, %v1053
        %vm1055 = vweird.f32 %v1049
        %vm1056 = vweird.f32 %v1050
        %vm1057 = vmor %vm1055, %vm1056
        %v1058 = vsel %vm1057, %v1050, %v1054
        %v1059 = vand.u32 2147483647, %v1049
        %vm1060 = vcmp.eq.f32.partialorder %v1059, 8.507059e+37
        %v1061 = vand.u32 %v1049, 2147483648
        %v1062 = vor.u32 1.1754944e-38, %v1061
        %v1063 = vsel %vm1060, %v1062, %v1058
        %v1064 = vmul.f32 1.0, %v1063
        %v1065 = vxor.u32 %v1043, 2147483648
        %v1066 = vmul.f32 %v1065, 1.442695
        %v1067 = vpow.pop %v1066
        %v1068 = vadd.f32 %v1067, 1.0
        %v1069 = vrcp.pop %v1068
        %v1070 = vmul.f32 %v1068, %v1069
        %v1071 = vsub.f32 1.0, %v1070
        %v1072 = vmul.f32 %v1069, %v1071
        %v1073 = vadd.f32 %v1069, %v1072
        %vm1074 = vweird.f32 %v1068
        %vm1075 = vweird.f32 %v1069
        %vm1076 = vmor %vm1074, %vm1075
        %v1077 = vsel %vm1076, %v1069, %v1073
        %v1078 = vand.u32 2147483647, %v1068
        %vm1079 = vcmp.eq.f32.partialorder %v1078, 8.507059e+37
        %v1080 = vand.u32 %v1068, 2147483648
        %v1081 = vor.u32 1.1754944e-38, %v1080
        %v1082 = vsel %vm1079, %v1081, %v1077
        %v1083 = vmul.f32 1.0, %v1082
        %v1084 = vtanh.pop %v1044
        %v1085 = vxor.u32 %v1045, 2147483648
        %v1086 = vmul.f32 %v1085, 1.442695
        %v1087 = vpow.pop %v1086
        %v1088 = vadd.f32 %v1087, 1.0
        %v1089 = vrcp.pop %v1088
        %v1090 = vmul.f32 %v1088, %v1089
        %v1091 = vsub.f32 1.0, %v1090
        %v1092 = vmul.f32 %v1089, %v1091
        %v1093 = vadd.f32 %v1089, %v1092
        %vm1094 = vweird.f32 %v1088
        %vm1095 = vweird.f32 %v1089
        %vm1096 = vmor %vm1094, %vm1095
        %v1097 = vsel %vm1096, %v1089, %v1093
        %v1098 = vand.u32 2147483647, %v1088
        %vm1099 = vcmp.eq.f32.partialorder %v1098, 8.507059e+37
        %v1100 = vand.u32 %v1088, 2147483648
        %v1101 = vor.u32 1.1754944e-38, %v1100
        %v1102 = vsel %vm1099, %v1101, %v1097
        %v1103 = vmul.f32 1.0, %v1102
        %v1104 = vld [vmem:[#allocation3] sm:$0xff]
        %v1105 = vmul.f32 %v1083, %v1104
        %v1106 = vmul.f32 %v1064, %v1084
        %v1107 = vadd.f32 %v1105, %v1106
        %v1108 = vtanh.pop %v1107
        %v1109 = vmul.f32 %v1103, %v1108
        %1110 = vst [vmem:[#allocation3] sm:$0xff] %v1107
        %1111 = vst [vmem:[#allocation2] sm:$0xff] %v1109
        %s1112 = scalar_lea.vmem [#allocation4], 8
        %1113 = vst [vmem:[%s1112] sm:$0xff] %v1109
        %v1114 = vld [vmem:[#allocation2] sm:$0xff]
        %s1115 = scalar_lea.vmem [#allocation5], 64
        %v1116 = vld [vmem:[%s1115] sm:$0xff]
        %v1117 = vld [vmem:[%s1115 + $0x8] sm:$0xff]
        %v1118 = vld [vmem:[%s1115 + $0x10] sm:$0xff]
        %v1119 = vld [vmem:[%s1115 + $0x18] sm:$0xff]
        %v1120 = vpack.c.bf16 %v1114, %v1114
        %1121 = vmatpush.bf16.msra.mxu0 %v824
        %1122 = vmatpush.bf16.msra.mxu0 %v820
        %1123 = vmatpush.bf16.msra.mxu0 %v816
        %1124 = vmatpush.bf16.msra.mxu0 %v812
        %1125 = vmatpush.bf16.msra.mxu0 %v808
        %1126 = vmatpush.bf16.msra.mxu0 %v804
        %1127 = vmatpush.bf16.msra.mxu0 %v800
        %1128 = vmatpush.bf16.msra.mxu0 %v796
        %1129 = vmatmul.bf16.gmra.mxu0 %v1120
        %v1130 = vpop.f32.mrf.mxu0
        %v1131 = vadd.f32 0.0, %v1130
        %v1132 = vpop.f32.mrf.mxu0
        %1133 = vdwg.mxu0
        %1134 = vmatpush.bf16.msra.mxu0 %v825
        %1135 = vmatpush.bf16.msra.mxu0 %v821
        %1136 = vmatpush.bf16.msra.mxu0 %v817
        %1137 = vmatpush.bf16.msra.mxu0 %v813
        %1138 = vmatpush.bf16.msra.mxu0 %v809
        %1139 = vmatpush.bf16.msra.mxu0 %v805
        %1140 = vmatpush.bf16.msra.mxu0 %v801
        %1141 = vmatpush.bf16.msra.mxu0 %v797
        %1142 = vmatmul.bf16.gmra.mxu0 %v1120
        %v1143 = vpop.f32.mrf.mxu0
        %v1144 = vadd.f32 0.0, %v1143
        %v1145 = vpop.f32.mrf.mxu0
        %1146 = vdwg.mxu0
        %1147 = vmatpush.bf16.msra.mxu0 %v826
        %1148 = vmatpush.bf16.msra.mxu0 %v822
        %1149 = vmatpush.bf16.msra.mxu0 %v818
        %1150 = vmatpush.bf16.msra.mxu0 %v814
        %1151 = vmatpush.bf16.msra.mxu0 %v810
        %1152 = vmatpush.bf16.msra.mxu0 %v806
        %1153 = vmatpush.bf16.msra.mxu0 %v802
        %1154 = vmatpush.bf16.msra.mxu0 %v798
        %1155 = vmatmul.bf16.gmra.mxu0 %v1120
        %v1156 = vpop.f32.mrf.mxu0
        %v1157 = vadd.f32 0.0, %v1156
        %v1158 = vpop.f32.mrf.mxu0
        %1159 = vdwg.mxu0
        %1160 = vmatpush.bf16.msra.mxu0 %v827
        %1161 = vmatpush.bf16.msra.mxu0 %v823
        %1162 = vmatpush.bf16.msra.mxu0 %v819
        %1163 = vmatpush.bf16.msra.mxu0 %v815
        %1164 = vmatpush.bf16.msra.mxu0 %v811
        %1165 = vmatpush.bf16.msra.mxu0 %v807
        %1166 = vmatpush.bf16.msra.mxu0 %v803
        %1167 = vmatpush.bf16.msra.mxu0 %v799
        %1168 = vmatmul.bf16.gmra.mxu0 %v1120
        %v1169 = vpop.f32.mrf.mxu0
        %v1170 = vadd.f32 0.0, %v1169
        %v1171 = vpop.f32.mrf.mxu0
        %1172 = vdwg.mxu0
        %v1173 = vadd.f32 %v1116, %v1131
        %v1174 = vadd.f32 %v1117, %v1144
        %v1175 = vadd.f32 %v1118, %v1157
        %v1176 = vadd.f32 %v1119, %v1170
        %v1177 = vxor.u32 %v1173, 2147483648
        %v1178 = vmul.f32 %v1177, 1.442695
        %v1179 = vpow.pop %v1178
        %v1180 = vadd.f32 %v1179, 1.0
        %v1181 = vrcp.pop %v1180
        %v1182 = vmul.f32 %v1180, %v1181
        %v1183 = vsub.f32 1.0, %v1182
        %v1184 = vmul.f32 %v1181, %v1183
        %v1185 = vadd.f32 %v1181, %v1184
        %vm1186 = vweird.f32 %v1180
        %vm1187 = vweird.f32 %v1181
        %vm1188 = vmor %vm1186, %vm1187
        %v1189 = vsel %vm1188, %v1181, %v1185
        %v1190 = vand.u32 2147483647, %v1180
        %vm1191 = vcmp.eq.f32.partialorder %v1190, 8.507059e+37
        %v1192 = vand.u32 %v1180, 2147483648
        %v1193 = vor.u32 1.1754944e-38, %v1192
        %v1194 = vsel %vm1191, %v1193, %v1189
        %v1195 = vmul.f32 1.0, %v1194
        %v1196 = vxor.u32 %v1174, 2147483648
        %v1197 = vmul.f32 %v1196, 1.442695
        %v1198 = vpow.pop %v1197
        %v1199 = vadd.f32 %v1198, 1.0
        %v1200 = vrcp.pop %v1199
        %v1201 = vmul.f32 %v1199, %v1200
        %v1202 = vsub.f32 1.0, %v1201
        %v1203 = vmul.f32 %v1200, %v1202
        %v1204 = vadd.f32 %v1200, %v1203
        %vm1205 = vweird.f32 %v1199
        %vm1206 = vweird.f32 %v1200
        %vm1207 = vmor %vm1205, %vm1206
        %v1208 = vsel %vm1207, %v1200, %v1204
        %v1209 = vand.u32 2147483647, %v1199
        %vm1210 = vcmp.eq.f32.partialorder %v1209, 8.507059e+37
        %v1211 = vand.u32 %v1199, 2147483648
        %v1212 = vor.u32 1.1754944e-38, %v1211
        %v1213 = vsel %vm1210, %v1212, %v1208
        %v1214 = vmul.f32 1.0, %v1213
        %v1215 = vtanh.pop %v1175
        %v1216 = vxor.u32 %v1176, 2147483648
        %v1217 = vmul.f32 %v1216, 1.442695
        %v1218 = vpow.pop %v1217
        %v1219 = vadd.f32 %v1218, 1.0
        %v1220 = vrcp.pop %v1219
        %v1221 = vmul.f32 %v1219, %v1220
        %v1222 = vsub.f32 1.0, %v1221
        %v1223 = vmul.f32 %v1220, %v1222
        %v1224 = vadd.f32 %v1220, %v1223
        %vm1225 = vweird.f32 %v1219
        %vm1226 = vweird.f32 %v1220
        %vm1227 = vmor %vm1225, %vm1226
        %v1228 = vsel %vm1227, %v1220, %v1224
        %v1229 = vand.u32 2147483647, %v1219
        %vm1230 = vcmp.eq.f32.partialorder %v1229, 8.507059e+37
        %v1231 = vand.u32 %v1219, 2147483648
        %v1232 = vor.u32 1.1754944e-38, %v1231
        %v1233 = vsel %vm1230, %v1232, %v1228
        %v1234 = vmul.f32 1.0, %v1233
        %v1235 = vld [vmem:[#allocation3] sm:$0xff]
        %v1236 = vmul.f32 %v1214, %v1235
        %v1237 = vmul.f32 %v1195, %v1215
        %v1238 = vadd.f32 %v1236, %v1237
        %v1239 = vtanh.pop %v1238
        %v1240 = vmul.f32 %v1234, %v1239
        %1241 = vst [vmem:[#allocation3] sm:$0xff] %v1238
        %1242 = vst [vmem:[#allocation2] sm:$0xff] %v1240
        %s1243 = scalar_lea.vmem [#allocation4], 16
        %1244 = vst [vmem:[%s1243] sm:$0xff] %v1240
        %v1245 = vld [vmem:[#allocation2] sm:$0xff]
        %s1246 = scalar_lea.vmem [#allocation5], 96
        %v1247 = vld [vmem:[%s1246] sm:$0xff]
        %v1248 = vld [vmem:[%s1246 + $0x8] sm:$0xff]
        %v1249 = vld [vmem:[%s1246 + $0x10] sm:$0xff]
        %v1250 = vld [vmem:[%s1246 + $0x18] sm:$0xff]
        %v1251 = vpack.c.bf16 %v1245, %v1245
        %1252 = vmatpush.bf16.msra.mxu0 %v824
        %1253 = vmatpush.bf16.msra.mxu0 %v820
        %1254 = vmatpush.bf16.msra.mxu0 %v816
        %1255 = vmatpush.bf16.msra.mxu0 %v812
        %1256 = vmatpush.bf16.msra.mxu0 %v808
        %1257 = vmatpush.bf16.msra.mxu0 %v804
        %1258 = vmatpush.bf16.msra.mxu0 %v800
        %1259 = vmatpush.bf16.msra.mxu0 %v796
        %1260 = vmatmul.bf16.gmra.mxu0 %v1251
        %v1261 = vpop.f32.mrf.mxu0
        %v1262 = vadd.f32 0.0, %v1261
        %v1263 = vpop.f32.mrf.mxu0
        %1264 = vdwg.mxu0
        %1265 = vmatpush.bf16.msra.mxu0 %v825
        %1266 = vmatpush.bf16.msra.mxu0 %v821
        %1267 = vmatpush.bf16.msra.mxu0 %v817
        %1268 = vmatpush.bf16.msra.mxu0 %v813
        %1269 = vmatpush.bf16.msra.mxu0 %v809
        %1270 = vmatpush.bf16.msra.mxu0 %v805
        %1271 = vmatpush.bf16.msra.mxu0 %v801
        %1272 = vmatpush.bf16.msra.mxu0 %v797
        %1273 = vmatmul.bf16.gmra.mxu0 %v1251
        %v1274 = vpop.f32.mrf.mxu0
        %v1275 = vadd.f32 0.0, %v1274
        %v1276 = vpop.f32.mrf.mxu0
        %1277 = vdwg.mxu0
        %1278 = vmatpush.bf16.msra.mxu0 %v826
        %1279 = vmatpush.bf16.msra.mxu0 %v822
        %1280 = vmatpush.bf16.msra.mxu0 %v818
        %1281 = vmatpush.bf16.msra.mxu0 %v814
        %1282 = vmatpush.bf16.msra.mxu0 %v810
        %1283 = vmatpush.bf16.msra.mxu0 %v806
        %1284 = vmatpush.bf16.msra.mxu0 %v802
        %1285 = vmatpush.bf16.msra.mxu0 %v798
        %1286 = vmatmul.bf16.gmra.mxu0 %v1251
        %v1287 = vpop.f32.mrf.mxu0
        %v1288 = vadd.f32 0.0, %v1287
        %v1289 = vpop.f32.mrf.mxu0
        %1290 = vdwg.mxu0
        %1291 = vmatpush.bf16.msra.mxu0 %v827
        %1292 = vmatpush.bf16.msra.mxu0 %v823
        %1293 = vmatpush.bf16.msra.mxu0 %v819
        %1294 = vmatpush.bf16.msra.mxu0 %v815
        %1295 = vmatpush.bf16.msra.mxu0 %v811
        %1296 = vmatpush.bf16.msra.mxu0 %v807
        %1297 = vmatpush.bf16.msra.mxu0 %v803
        %1298 = vmatpush.bf16.msra.mxu0 %v799
        %1299 = vmatmul.bf16.gmra.mxu0 %v1251
        %v1300 = vpop.f32.mrf.mxu0
        %v1301 = vadd.f32 0.0, %v1300
        %v1302 = vpop.f32.mrf.mxu0
        %1303 = vdwg.mxu0
        %v1304 = vadd.f32 %v1247, %v1262
        %v1305 = vadd.f32 %v1248, %v1275
        %v1306 = vadd.f32 %v1249, %v1288
        %v1307 = vadd.f32 %v1250, %v1301
        %v1308 = vxor.u32 %v1304, 2147483648
        %v1309 = vmul.f32 %v1308, 1.442695
        %v1310 = vpow.pop %v1309
        %v1311 = vadd.f32 %v1310, 1.0
        %v1312 = vrcp.pop %v1311
        %v1313 = vmul.f32 %v1311, %v1312
        %v1314 = vsub.f32 1.0, %v1313
        %v1315 = vmul.f32 %v1312, %v1314
        %v1316 = vadd.f32 %v1312, %v1315
        %vm1317 = vweird.f32 %v1311
        %vm1318 = vweird.f32 %v1312
        %vm1319 = vmor %vm1317, %vm1318
        %v1320 = vsel %vm1319, %v1312, %v1316
        %v1321 = vand.u32 2147483647, %v1311
        %vm1322 = vcmp.eq.f32.partialorder %v1321, 8.507059e+37
        %v1323 = vand.u32 %v1311, 2147483648
        %v1324 = vor.u32 1.1754944e-38, %v1323
        %v1325 = vsel %vm1322, %v1324, %v1320
        %v1326 = vmul.f32 1.0, %v1325
        %v1327 = vxor.u32 %v1305, 2147483648
        %v1328 = vmul.f32 %v1327, 1.442695
        %v1329 = vpow.pop %v1328
        %v1330 = vadd.f32 %v1329, 1.0
        %v1331 = vrcp.pop %v1330
        %v1332 = vmul.f32 %v1330, %v1331
        %v1333 = vsub.f32 1.0, %v1332
        %v1334 = vmul.f32 %v1331, %v1333
        %v1335 = vadd.f32 %v1331, %v1334
        %vm1336 = vweird.f32 %v1330
        %vm1337 = vweird.f32 %v1331
        %vm1338 = vmor %vm1336, %vm1337
        %v1339 = vsel %vm1338, %v1331, %v1335
        %v1340 = vand.u32 2147483647, %v1330
        %vm1341 = vcmp.eq.f32.partialorder %v1340, 8.507059e+37
        %v1342 = vand.u32 %v1330, 2147483648
        %v1343 = vor.u32 1.1754944e-38, %v1342
        %v1344 = vsel %vm1341, %v1343, %v1339
        %v1345 = vmul.f32 1.0, %v1344
        %v1346 = vtanh.pop %v1306
        %v1347 = vxor.u32 %v1307, 2147483648
        %v1348 = vmul.f32 %v1347, 1.442695
        %v1349 = vpow.pop %v1348
        %v1350 = vadd.f32 %v1349, 1.0
        %v1351 = vrcp.pop %v1350
        %v1352 = vmul.f32 %v1350, %v1351
        %v1353 = vsub.f32 1.0, %v1352
        %v1354 = vmul.f32 %v1351, %v1353
        %v1355 = vadd.f32 %v1351, %v1354
        %vm1356 = vweird.f32 %v1350
        %vm1357 = vweird.f32 %v1351
        %vm1358 = vmor %vm1356, %vm1357
        %v1359 = vsel %vm1358, %v1351, %v1355
        %v1360 = vand.u32 2147483647, %v1350
        %vm1361 = vcmp.eq.f32.partialorder %v1360, 8.507059e+37
        %v1362 = vand.u32 %v1350, 2147483648
        %v1363 = vor.u32 1.1754944e-38, %v1362
        %v1364 = vsel %vm1361, %v1363, %v1359
        %v1365 = vmul.f32 1.0, %v1364
        %v1366 = vld [vmem:[#allocation3] sm:$0xff]
        %v1367 = vmul.f32 %v1345, %v1366
        %v1368 = vmul.f32 %v1326, %v1346
        %v1369 = vadd.f32 %v1367, %v1368
        %v1370 = vtanh.pop %v1369
        %v1371 = vmul.f32 %v1365, %v1370
        %1372 = vst [vmem:[#allocation3] sm:$0xff] %v1369
        %1373 = vst [vmem:[#allocation2] sm:$0xff] %v1371
        %s1374 = scalar_lea.vmem [#allocation4], 24
        %1375 = vst [vmem:[%s1374] sm:$0xff] %v1371
        %v1376 = vld [vmem:[#allocation4] sm:$0xff]
        %v1377 = vld [vmem:[#allocation4 + $0x8] sm:$0xff]
        %v1378 = vld [vmem:[#allocation4 + $0x10] sm:$0xff]
        %v1379 = vld [vmem:[#allocation4 + $0x18] sm:$0xff]
        %v1380 = vpack.c.bf16 %v1377, %v1376
        %v1381 = vpack.c.bf16 %v1379, %v1378
        %v1382 = vld [vmem:[#allocation12] sm:$0xff]
        %v1383 = vld [vmem:[#allocation12 + $0x8] sm:$0xff]
        %v1384 = vld [vmem:[#allocation12 + $0x10] sm:$0xff]
        %v1385 = vld [vmem:[#allocation12 + $0x18] sm:$0xff]
        %v1386 = vld [vmem:[#allocation12 + $0x20] sm:$0xff]
        %v1387 = vld [vmem:[#allocation12 + $0x28] sm:$0xff]
        %v1388 = vld [vmem:[#allocation12 + $0x30] sm:$0xff]
        %v1389 = vld [vmem:[#allocation12 + $0x38] sm:$0xff]
        %v1390 = vld [vmem:[#allocation12 + $0x40] sm:$0xff]
        %v1391 = vld [vmem:[#allocation12 + $0x48] sm:$0xff]
        %v1392 = vld [vmem:[#allocation12 + $0x50] sm:$0xff]
        %v1393 = vld [vmem:[#allocation12 + $0x58] sm:$0xff]
        %v1394 = vld [vmem:[#allocation12 + $0x60] sm:$0xff]
        %v1395 = vld [vmem:[#allocation12 + $0x68] sm:$0xff]
        %v1396 = vld [vmem:[#allocation12 + $0x70] sm:$0xff]
        %v1397 = vld [vmem:[#allocation12 + $0x78] sm:$0xff]
        %v1398 = vld [vmem:[#allocation12 + $0x80] sm:$0xff]
        %v1399 = vld [vmem:[#allocation12 + $0x88] sm:$0xff]
        %v1400 = vld [vmem:[#allocation12 + $0x90] sm:$0xff]
        %v1401 = vld [vmem:[#allocation12 + $0x98] sm:$0xff]
        %v1402 = vld [vmem:[#allocation12 + $0xa0] sm:$0xff]
        %v1403 = vld [vmem:[#allocation12 + $0xa8] sm:$0xff]
        %v1404 = vld [vmem:[#allocation12 + $0xb0] sm:$0xff]
        %v1405 = vld [vmem:[#allocation12 + $0xb8] sm:$0xff]
        %v1406 = vld [vmem:[#allocation12 + $0xc0] sm:$0xff]
        %v1407 = vld [vmem:[#allocation12 + $0xc8] sm:$0xff]
        %v1408 = vld [vmem:[#allocation12 + $0xd0] sm:$0xff]
        %v1409 = vld [vmem:[#allocation12 + $0xd8] sm:$0xff]
        %v1410 = vld [vmem:[#allocation12 + $0xe0] sm:$0xff]
        %v1411 = vld [vmem:[#allocation12 + $0xe8] sm:$0xff]
        %v1412 = vld [vmem:[#allocation12 + $0xf0] sm:$0xff]
        %v1413 = vld [vmem:[#allocation12 + $0xf8] sm:$0xff]
        %s1414 = scalar_lea.vmem [#allocation15], 4
        %v1415 = vld [vmem:[%s1414] sm:$0xf]
        %v1417 = vperm.slane %v1415, 0
        %v1418 = vperm.slane %v1415, 1
        %v1419 = vperm.slane %v1415, 2
        %v1420 = vperm.slane %v1415, 3
        %v1457 = vunpack.c.l.b16 %v1382
        %v1458 = vunpack.c.h.b16 %v1382
        %v1459 = vunpack.c.l.b16 %v1383
        %v1460 = vunpack.c.h.b16 %v1383
        %v1461 = vunpack.c.l.b16 %v1384
        %v1462 = vunpack.c.h.b16 %v1384
        %v1463 = vunpack.c.l.b16 %v1385
        %v1464 = vunpack.c.h.b16 %v1385
        %v1465 = vunpack.c.l.b16 %v1386
        %v1466 = vunpack.c.h.b16 %v1386
        %v1467 = vunpack.c.l.b16 %v1387
        %v1468 = vunpack.c.h.b16 %v1387
        %v1469 = vunpack.c.l.b16 %v1388
        %v1470 = vunpack.c.h.b16 %v1388
        %v1471 = vunpack.c.l.b16 %v1389
        %v1472 = vunpack.c.h.b16 %v1389
        %v1473 = vunpack.c.l.b16 %v1390
        %v1474 = vunpack.c.h.b16 %v1390
        %v1475 = vunpack.c.l.b16 %v1391
        %v1476 = vunpack.c.h.b16 %v1391
        %v1477 = vunpack.c.l.b16 %v1392
        %v1478 = vunpack.c.h.b16 %v1392
        %v1479 = vunpack.c.l.b16 %v1393
        %v1480 = vunpack.c.h.b16 %v1393
        %v1481 = vunpack.c.l.b16 %v1394
        %v1482 = vunpack.c.h.b16 %v1394
        %v1483 = vunpack.c.l.b16 %v1395
        %v1484 = vunpack.c.h.b16 %v1395
        %v1485 = vunpack.c.l.b16 %v1396
        %v1486 = vunpack.c.h.b16 %v1396
        %v1487 = vunpack.c.l.b16 %v1397
        %v1488 = vunpack.c.h.b16 %v1397
        %v1489 = vunpack.c.l.b16 %v1398
        %v1490 = vunpack.c.h.b16 %v1398
        %v1491 = vunpack.c.l.b16 %v1399
        %v1492 = vunpack.c.h.b16 %v1399
        %v1493 = vunpack.c.l.b16 %v1400
        %v1494 = vunpack.c.h.b16 %v1400
        %v1495 = vunpack.c.l.b16 %v1401
        %v1496 = vunpack.c.h.b16 %v1401
        %v1497 = vunpack.c.l.b16 %v1402
        %v1498 = vunpack.c.h.b16 %v1402
        %v1499 = vunpack.c.l.b16 %v1403
        %v1500 = vunpack.c.h.b16 %v1403
        %v1501 = vunpack.c.l.b16 %v1404
        %v1502 = vunpack.c.h.b16 %v1404
        %v1503 = vunpack.c.l.b16 %v1405
        %v1504 = vunpack.c.h.b16 %v1405
        %v1505 = vunpack.c.l.b16 %v1406
        %v1506 = vunpack.c.h.b16 %v1406
        %v1507 = vunpack.c.l.b16 %v1407
        %v1508 = vunpack.c.h.b16 %v1407
        %v1509 = vunpack.c.l.b16 %v1408
        %v1510 = vunpack.c.h.b16 %v1408
        %v1511 = vunpack.c.l.b16 %v1409
        %v1512 = vunpack.c.h.b16 %v1409
        %v1513 = vunpack.c.l.b16 %v1410
        %v1514 = vunpack.c.h.b16 %v1410
        %v1515 = vunpack.c.l.b16 %v1411
        %v1516 = vunpack.c.h.b16 %v1411
        %v1517 = vunpack.c.l.b16 %v1412
        %v1518 = vunpack.c.h.b16 %v1412
        %v1519 = vunpack.c.l.b16 %v1413
        %v1520 = vunpack.c.h.b16 %v1413
        %v1521 = vpack.c.b16 %v1461, %v1457
        %v1522 = vpack.c.b16 %v1462, %v1458
        %v1523 = vpack.c.b16 %v1463, %v1459
        %v1524 = vpack.c.b16 %v1464, %v1460
        %v1525 = vpack.c.b16 %v1469, %v1465
        %v1526 = vpack.c.b16 %v1470, %v1466
        %v1527 = vpack.c.b16 %v1471, %v1467
        %v1528 = vpack.c.b16 %v1472, %v1468
        %v1529 = vpack.c.b16 %v1477, %v1473
        %v1530 = vpack.c.b16 %v1478, %v1474
        %v1531 = vpack.c.b16 %v1479, %v1475
        %v1532 = vpack.c.b16 %v1480, %v1476
        %v1533 = vpack.c.b16 %v1485, %v1481
        %v1534 = vpack.c.b16 %v1486, %v1482
        %v1535 = vpack.c.b16 %v1487, %v1483
        %v1536 = vpack.c.b16 %v1488, %v1484
        %v1537 = vpack.c.b16 %v1493, %v1489
        %v1538 = vpack.c.b16 %v1494, %v1490
        %v1539 = vpack.c.b16 %v1495, %v1491
        %v1540 = vpack.c.b16 %v1496, %v1492
        %v1541 = vpack.c.b16 %v1501, %v1497
        %v1542 = vpack.c.b16 %v1502, %v1498
        %v1543 = vpack.c.b16 %v1503, %v1499
        %v1544 = vpack.c.b16 %v1504, %v1500
        %v1545 = vpack.c.b16 %v1509, %v1505
        %v1546 = vpack.c.b16 %v1510, %v1506
        %v1547 = vpack.c.b16 %v1511, %v1507
        %v1548 = vpack.c.b16 %v1512, %v1508
        %v1549 = vpack.c.b16 %v1517, %v1513
        %v1550 = vpack.c.b16 %v1518, %v1514
        %v1551 = vpack.c.b16 %v1519, %v1515
        %v1552 = vpack.c.b16 %v1520, %v1516
        %1585 = vmatpush.bf16.msra.mxu0 %v1549
        %1586 = vmatpush.bf16.msra.mxu0 %v1545
        %1587 = vmatpush.bf16.msra.mxu0 %v1541
        %1588 = vmatpush.bf16.msra.mxu0 %v1537
        %1589 = vmatpush.bf16.msra.mxu0 %v1533
        %1590 = vmatpush.bf16.msra.mxu0 %v1529
        %1591 = vmatpush.bf16.msra.mxu0 %v1525
        %1592 = vmatpush.bf16.msra.mxu0 %v1521
        %1593 = vmatmul.bf16.gmra.mxu0 %v1380
        %v1594 = vpop.f32.mrf.mxu0
        %v1595 = vadd.f32 %v1417, %v1594
        %v1596 = vpop.f32.mrf.mxu0
        %v1597 = vadd.f32 %v1417, %v1596
        %1598 = vmatmul.bf16.gmra.mxu0 %v1381
        %v1599 = vpop.f32.mrf.mxu0
        %v1600 = vadd.f32 %v1417, %v1599
        %v1601 = vpop.f32.mrf.mxu0
        %v1602 = vadd.f32 %v1417, %v1601
        %1603 = vdwg.mxu0
        %1604 = vmatpush.bf16.msra.mxu0 %v1550
        %1605 = vmatpush.bf16.msra.mxu0 %v1546
        %1606 = vmatpush.bf16.msra.mxu0 %v1542
        %1607 = vmatpush.bf16.msra.mxu0 %v1538
        %1608 = vmatpush.bf16.msra.mxu0 %v1534
        %1609 = vmatpush.bf16.msra.mxu0 %v1530
        %1610 = vmatpush.bf16.msra.mxu0 %v1526
        %1611 = vmatpush.bf16.msra.mxu0 %v1522
        %1612 = vmatmul.bf16.gmra.mxu0 %v1380
        %v1613 = vpop.f32.mrf.mxu0
        %v1614 = vadd.f32 %v1418, %v1613
        %v1615 = vpop.f32.mrf.mxu0
        %v1616 = vadd.f32 %v1418, %v1615
        %1617 = vmatmul.bf16.gmra.mxu0 %v1381
        %v1618 = vpop.f32.mrf.mxu0
        %v1619 = vadd.f32 %v1418, %v1618
        %v1620 = vpop.f32.mrf.mxu0
        %v1621 = vadd.f32 %v1418, %v1620
        %1622 = vdwg.mxu0
        %1623 = vmatpush.bf16.msra.mxu0 %v1551
        %1624 = vmatpush.bf16.msra.mxu0 %v1547
        %1625 = vmatpush.bf16.msra.mxu0 %v1543
        %1626 = vmatpush.bf16.msra.mxu0 %v1539
        %1627 = vmatpush.bf16.msra.mxu0 %v1535
        %1628 = vmatpush.bf16.msra.mxu0 %v1531
        %1629 = vmatpush.bf16.msra.mxu0 %v1527
        %1630 = vmatpush.bf16.msra.mxu0 %v1523
        %1631 = vmatmul.bf16.gmra.mxu0 %v1380
        %v1632 = vpop.f32.mrf.mxu0
        %v1633 = vadd.f32 %v1419, %v1632
        %v1634 = vpop.f32.mrf.mxu0
        %v1635 = vadd.f32 %v1419, %v1634
        %1636 = vmatmul.bf16.gmra.mxu0 %v1381
        %v1637 = vpop.f32.mrf.mxu0
        %v1638 = vadd.f32 %v1419, %v1637
        %v1639 = vpop.f32.mrf.mxu0
        %v1640 = vadd.f32 %v1419, %v1639
        %1641 = vdwg.mxu0
        %1642 = vmatpush.bf16.msra.mxu0 %v1552
        %1643 = vmatpush.bf16.msra.mxu0 %v1548
        %1644 = vmatpush.bf16.msra.mxu0 %v1544
        %1645 = vmatpush.bf16.msra.mxu0 %v1540
        %1646 = vmatpush.bf16.msra.mxu0 %v1536
        %1647 = vmatpush.bf16.msra.mxu0 %v1532
        %1648 = vmatpush.bf16.msra.mxu0 %v1528
        %1649 = vmatpush.bf16.msra.mxu0 %v1524
        %1650 = vmatmul.bf16.gmra.mxu0 %v1380
        %v1651 = vpop.f32.mrf.mxu0
        %v1652 = vadd.f32 %v1420, %v1651
        %v1653 = vpop.f32.mrf.mxu0
        %v1654 = vadd.f32 %v1420, %v1653
        %1655 = vmatmul.bf16.gmra.mxu0 %v1381
        %v1656 = vpop.f32.mrf.mxu0
        %v1657 = vadd.f32 %v1420, %v1656
        %v1658 = vpop.f32.mrf.mxu0
        %v1659 = vadd.f32 %v1420, %v1658
        %1660 = vdwg.mxu0
        %1661 = vst [vmem:[#allocation5] sm:$0xff] %v1595
        %1662 = vst [vmem:[#allocation5 + $0x8] sm:$0xff] %v1614
        %1663 = vst [vmem:[#allocation5 + $0x10] sm:$0xff] %v1633
        %1664 = vst [vmem:[#allocation5 + $0x18] sm:$0xff] %v1652
        %1665 = vst [vmem:[#allocation5 + $0x20] sm:$0xff] %v1597
        %1666 = vst [vmem:[#allocation5 + $0x28] sm:$0xff] %v1616
        %1667 = vst [vmem:[#allocation5 + $0x30] sm:$0xff] %v1635
        %1668 = vst [vmem:[#allocation5 + $0x38] sm:$0xff] %v1654
        %1669 = vst [vmem:[#allocation5 + $0x40] sm:$0xff] %v1600
        %1670 = vst [vmem:[#allocation5 + $0x48] sm:$0xff] %v1619
        %1671 = vst [vmem:[#allocation5 + $0x50] sm:$0xff] %v1638
        %1672 = vst [vmem:[#allocation5 + $0x58] sm:$0xff] %v1657
        %1673 = vst [vmem:[#allocation5 + $0x60] sm:$0xff] %v1602
        %1674 = vst [vmem:[#allocation5 + $0x68] sm:$0xff] %v1621
        %1675 = vst [vmem:[#allocation5 + $0x70] sm:$0xff] %v1640
        %1676 = vst [vmem:[#allocation5 + $0x78] sm:$0xff] %v1659
        %s1677 = scalar_lea.vmem [#allocation13], 256
        %v1678 = vld [vmem:[%s1677] sm:$0xff]
        %v1679 = vld [vmem:[%s1677 + $0x8] sm:$0xff]
        %v1680 = vld [vmem:[%s1677 + $0x10] sm:$0xff]
        %v1681 = vld [vmem:[%s1677 + $0x18] sm:$0xff]
        %v1682 = vld [vmem:[%s1677 + $0x20] sm:$0xff]
        %v1683 = vld [vmem:[%s1677 + $0x28] sm:$0xff]
        %v1684 = vld [vmem:[%s1677 + $0x30] sm:$0xff]
        %v1685 = vld [vmem:[%s1677 + $0x38] sm:$0xff]
        %v1686 = vld [vmem:[%s1677 + $0x40] sm:$0xff]
        %v1687 = vld [vmem:[%s1677 + $0x48] sm:$0xff]
        %v1688 = vld [vmem:[%s1677 + $0x50] sm:$0xff]
        %v1689 = vld [vmem:[%s1677 + $0x58] sm:$0xff]
        %v1690 = vld [vmem:[%s1677 + $0x60] sm:$0xff]
        %v1691 = vld [vmem:[%s1677 + $0x68] sm:$0xff]
        %v1692 = vld [vmem:[%s1677 + $0x70] sm:$0xff]
        %v1693 = vld [vmem:[%s1677 + $0x78] sm:$0xff]
        %v1694 = vld [vmem:[%s1677 + $0x80] sm:$0xff]
        %v1695 = vld [vmem:[%s1677 + $0x88] sm:$0xff]
        %v1696 = vld [vmem:[%s1677 + $0x90] sm:$0xff]
        %v1697 = vld [vmem:[%s1677 + $0x98] sm:$0xff]
        %v1698 = vld [vmem:[%s1677 + $0xa0] sm:$0xff]
        %v1699 = vld [vmem:[%s1677 + $0xa8] sm:$0xff]
        %v1700 = vld [vmem:[%s1677 + $0xb0] sm:$0xff]
        %v1701 = vld [vmem:[%s1677 + $0xb8] sm:$0xff]
        %v1702 = vld [vmem:[%s1677 + $0xc0] sm:$0xff]
        %v1703 = vld [vmem:[%s1677 + $0xc8] sm:$0xff]
        %v1704 = vld [vmem:[%s1677 + $0xd0] sm:$0xff]
        %v1705 = vld [vmem:[%s1677 + $0xd8] sm:$0xff]
        %v1706 = vld [vmem:[%s1677 + $0xe0] sm:$0xff]
        %v1707 = vld [vmem:[%s1677 + $0xe8] sm:$0xff]
        %v1708 = vld [vmem:[%s1677 + $0xf0] sm:$0xff]
        %v1709 = vld [vmem:[%s1677 + $0xf8] sm:$0xff]
        %s1710 = scalar_lea.vmem [#allocation2], 8
        %v1711 = vld [vmem:[%s1710] sm:$0xff]
        %v1712 = vld [vmem:[#allocation5] sm:$0xff]
        %v1713 = vld [vmem:[#allocation5 + $0x8] sm:$0xff]
        %v1714 = vld [vmem:[#allocation5 + $0x10] sm:$0xff]
        %v1715 = vld [vmem:[#allocation5 + $0x18] sm:$0xff]
        %v1716 = vpack.c.bf16 %v1711, %v1711
        %v1749 = vunpack.c.l.b16 %v1678
        %v1750 = vunpack.c.h.b16 %v1678
        %v1751 = vunpack.c.l.b16 %v1679
        %v1752 = vunpack.c.h.b16 %v1679
        %v1753 = vunpack.c.l.b16 %v1680
        %v1754 = vunpack.c.h.b16 %v1680
        %v1755 = vunpack.c.l.b16 %v1681
        %v1756 = vunpack.c.h.b16 %v1681
        %v1757 = vunpack.c.l.b16 %v1682
        %v1758 = vunpack.c.h.b16 %v1682
        %v1759 = vunpack.c.l.b16 %v1683
        %v1760 = vunpack.c.h.b16 %v1683
        %v1761 = vunpack.c.l.b16 %v1684
        %v1762 = vunpack.c.h.b16 %v1684
        %v1763 = vunpack.c.l.b16 %v1685
        %v1764 = vunpack.c.h.b16 %v1685
        %v1765 = vunpack.c.l.b16 %v1686
        %v1766 = vunpack.c.h.b16 %v1686
        %v1767 = vunpack.c.l.b16 %v1687
        %v1768 = vunpack.c.h.b16 %v1687
        %v1769 = vunpack.c.l.b16 %v1688
        %v1770 = vunpack.c.h.b16 %v1688
        %v1771 = vunpack.c.l.b16 %v1689
        %v1772 = vunpack.c.h.b16 %v1689
        %v1773 = vunpack.c.l.b16 %v1690
        %v1774 = vunpack.c.h.b16 %v1690
        %v1775 = vunpack.c.l.b16 %v1691
        %v1776 = vunpack.c.h.b16 %v1691
        %v1777 = vunpack.c.l.b16 %v1692
        %v1778 = vunpack.c.h.b16 %v1692
        %v1779 = vunpack.c.l.b16 %v1693
        %v1780 = vunpack.c.h.b16 %v1693
        %v1781 = vunpack.c.l.b16 %v1694
        %v1782 = vunpack.c.h.b16 %v1694
        %v1783 = vunpack.c.l.b16 %v1695
        %v1784 = vunpack.c.h.b16 %v1695
        %v1785 = vunpack.c.l.b16 %v1696
        %v1786 = vunpack.c.h.b16 %v1696
        %v1787 = vunpack.c.l.b16 %v1697
        %v1788 = vunpack.c.h.b16 %v1697
        %v1789 = vunpack.c.l.b16 %v1698
        %v1790 = vunpack.c.h.b16 %v1698
        %v1791 = vunpack.c.l.b16 %v1699
        %v1792 = vunpack.c.h.b16 %v1699
        %v1793 = vunpack.c.l.b16 %v1700
        %v1794 = vunpack.c.h.b16 %v1700
        %v1795 = vunpack.c.l.b16 %v1701
        %v1796 = vunpack.c.h.b16 %v1701
        %v1797 = vunpack.c.l.b16 %v1702
        %v1798 = vunpack.c.h.b16 %v1702
        %v1799 = vunpack.c.l.b16 %v1703
        %v1800 = vunpack.c.h.b16 %v1703
        %v1801 = vunpack.c.l.b16 %v1704
        %v1802 = vunpack.c.h.b16 %v1704
        %v1803 = vunpack.c.l.b16 %v1705
        %v1804 = vunpack.c.h.b16 %v1705
        %v1805 = vunpack.c.l.b16 %v1706
        %v1806 = vunpack.c.h.b16 %v1706
        %v1807 = vunpack.c.l.b16 %v1707
        %v1808 = vunpack.c.h.b16 %v1707
        %v1809 = vunpack.c.l.b16 %v1708
        %v1810 = vunpack.c.h.b16 %v1708
        %v1811 = vunpack.c.l.b16 %v1709
        %v1812 = vunpack.c.h.b16 %v1709
        %v1813 = vpack.c.b16 %v1753, %v1749
        %v1814 = vpack.c.b16 %v1754, %v1750
        %v1815 = vpack.c.b16 %v1755, %v1751
        %v1816 = vpack.c.b16 %v1756, %v1752
        %v1817 = vpack.c.b16 %v1761, %v1757
        %v1818 = vpack.c.b16 %v1762, %v1758
        %v1819 = vpack.c.b16 %v1763, %v1759
        %v1820 = vpack.c.b16 %v1764, %v1760
        %v1821 = vpack.c.b16 %v1769, %v1765
        %v1822 = vpack.c.b16 %v1770, %v1766
        %v1823 = vpack.c.b16 %v1771, %v1767
        %v1824 = vpack.c.b16 %v1772, %v1768
        %v1825 = vpack.c.b16 %v1777, %v1773
        %v1826 = vpack.c.b16 %v1778, %v1774
        %v1827 = vpack.c.b16 %v1779, %v1775
        %v1828 = vpack.c.b16 %v1780, %v1776
        %v1829 = vpack.c.b16 %v1785, %v1781
        %v1830 = vpack.c.b16 %v1786, %v1782
        %v1831 = vpack.c.b16 %v1787, %v1783
        %v1832 = vpack.c.b16 %v1788, %v1784
        %v1833 = vpack.c.b16 %v1793, %v1789
        %v1834 = vpack.c.b16 %v1794, %v1790
        %v1835 = vpack.c.b16 %v1795, %v1791
        %v1836 = vpack.c.b16 %v1796, %v1792
        %v1837 = vpack.c.b16 %v1801, %v1797
        %v1838 = vpack.c.b16 %v1802, %v1798
        %v1839 = vpack.c.b16 %v1803, %v1799
        %v1840 = vpack.c.b16 %v1804, %v1800
        %v1841 = vpack.c.b16 %v1809, %v1805
        %v1842 = vpack.c.b16 %v1810, %v1806
        %v1843 = vpack.c.b16 %v1811, %v1807
        %v1844 = vpack.c.b16 %v1812, %v1808
        %1877 = vmatpush.bf16.msra.mxu0 %v1841
        %1878 = vmatpush.bf16.msra.mxu0 %v1837
        %1879 = vmatpush.bf16.msra.mxu0 %v1833
        %1880 = vmatpush.bf16.msra.mxu0 %v1829
        %1881 = vmatpush.bf16.msra.mxu0 %v1825
        %1882 = vmatpush.bf16.msra.mxu0 %v1821
        %1883 = vmatpush.bf16.msra.mxu0 %v1817
        %1884 = vmatpush.bf16.msra.mxu0 %v1813
        %1885 = vmatmul.bf16.gmra.mxu0 %v1716
        %v1886 = vpop.f32.mrf.mxu0
        %v1887 = vadd.f32 0.0, %v1886
        %v1888 = vpop.f32.mrf.mxu0
        %1889 = vdwg.mxu0
        %1890 = vmatpush.bf16.msra.mxu0 %v1842
        %1891 = vmatpush.bf16.msra.mxu0 %v1838
        %1892 = vmatpush.bf16.msra.mxu0 %v1834
        %1893 = vmatpush.bf16.msra.mxu0 %v1830
        %1894 = vmatpush.bf16.msra.mxu0 %v1826
        %1895 = vmatpush.bf16.msra.mxu0 %v1822
        %1896 = vmatpush.bf16.msra.mxu0 %v1818
        %1897 = vmatpush.bf16.msra.mxu0 %v1814
        %1898 = vmatmul.bf16.gmra.mxu0 %v1716
        %v1899 = vpop.f32.mrf.mxu0
        %v1900 = vadd.f32 0.0, %v1899
        %v1901 = vpop.f32.mrf.mxu0
        %1902 = vdwg.mxu0
        %1903 = vmatpush.bf16.msra.mxu0 %v1843
        %1904 = vmatpush.bf16.msra.mxu0 %v1839
        %1905 = vmatpush.bf16.msra.mxu0 %v1835
        %1906 = vmatpush.bf16.msra.mxu0 %v1831
        %1907 = vmatpush.bf16.msra.mxu0 %v1827
        %1908 = vmatpush.bf16.msra.mxu0 %v1823
        %1909 = vmatpush.bf16.msra.mxu0 %v1819
        %1910 = vmatpush.bf16.msra.mxu0 %v1815
        %1911 = vmatmul.bf16.gmra.mxu0 %v1716
        %v1912 = vpop.f32.mrf.mxu0
        %v1913 = vadd.f32 0.0, %v1912
        %v1914 = vpop.f32.mrf.mxu0
        %1915 = vdwg.mxu0
        %1916 = vmatpush.bf16.msra.mxu0 %v1844
        %1917 = vmatpush.bf16.msra.mxu0 %v1840
        %1918 = vmatpush.bf16.msra.mxu0 %v1836
        %1919 = vmatpush.bf16.msra.mxu0 %v1832
        %1920 = vmatpush.bf16.msra.mxu0 %v1828
        %1921 = vmatpush.bf16.msra.mxu0 %v1824
        %1922 = vmatpush.bf16.msra.mxu0 %v1820
        %1923 = vmatpush.bf16.msra.mxu0 %v1816
        %1924 = vmatmul.bf16.gmra.mxu0 %v1716
        %v1925 = vpop.f32.mrf.mxu0
        %v1926 = vadd.f32 0.0, %v1925
        %v1927 = vpop.f32.mrf.mxu0
        %1928 = vdwg.mxu0
        %v1929 = vadd.f32 %v1712, %v1887
        %v1930 = vadd.f32 %v1713, %v1900
        %v1931 = vadd.f32 %v1714, %v1913
        %v1932 = vadd.f32 %v1715, %v1926
        %v1933 = vxor.u32 %v1929, 2147483648
        %v1934 = vmul.f32 %v1933, 1.442695
        %v1935 = vpow.pop %v1934
        %v1936 = vadd.f32 %v1935, 1.0
        %v1937 = vrcp.pop %v1936
        %v1938 = vmul.f32 %v1936, %v1937
        %v1939 = vsub.f32 1.0, %v1938
        %v1940 = vmul.f32 %v1937, %v1939
        %v1941 = vadd.f32 %v1937, %v1940
        %vm1942 = vweird.f32 %v1936
        %vm1943 = vweird.f32 %v1937
        %vm1944 = vmor %vm1942, %vm1943
        %v1945 = vsel %vm1944, %v1937, %v1941
        %v1946 = vand.u32 2147483647, %v1936
        %vm1947 = vcmp.eq.f32.partialorder %v1946, 8.507059e+37
        %v1948 = vand.u32 %v1936, 2147483648
        %v1949 = vor.u32 1.1754944e-38, %v1948
        %v1950 = vsel %vm1947, %v1949, %v1945
        %v1951 = vmul.f32 1.0, %v1950
        %v1952 = vxor.u32 %v1930, 2147483648
        %v1953 = vmul.f32 %v1952, 1.442695
        %v1954 = vpow.pop %v1953
        %v1955 = vadd.f32 %v1954, 1.0
        %v1956 = vrcp.pop %v1955
        %v1957 = vmul.f32 %v1955, %v1956
        %v1958 = vsub.f32 1.0, %v1957
        %v1959 = vmul.f32 %v1956, %v1958
        %v1960 = vadd.f32 %v1956, %v1959
        %vm1961 = vweird.f32 %v1955
        %vm1962 = vweird.f32 %v1956
        %vm1963 = vmor %vm1961, %vm1962
        %v1964 = vsel %vm1963, %v1956, %v1960
        %v1965 = vand.u32 2147483647, %v1955
        %vm1966 = vcmp.eq.f32.partialorder %v1965, 8.507059e+37
        %v1967 = vand.u32 %v1955, 2147483648
        %v1968 = vor.u32 1.1754944e-38, %v1967
        %v1969 = vsel %vm1966, %v1968, %v1964
        %v1970 = vmul.f32 1.0, %v1969
        %v1971 = vtanh.pop %v1931
        %v1972 = vxor.u32 %v1932, 2147483648
        %v1973 = vmul.f32 %v1972, 1.442695
        %v1974 = vpow.pop %v1973
        %v1975 = vadd.f32 %v1974, 1.0
        %v1976 = vrcp.pop %v1975
        %v1977 = vmul.f32 %v1975, %v1976
        %v1978 = vsub.f32 1.0, %v1977
        %v1979 = vmul.f32 %v1976, %v1978
        %v1980 = vadd.f32 %v1976, %v1979
        %vm1981 = vweird.f32 %v1975
        %vm1982 = vweird.f32 %v1976
        %vm1983 = vmor %vm1981, %vm1982
        %v1984 = vsel %vm1983, %v1976, %v1980
        %v1985 = vand.u32 2147483647, %v1975
        %vm1986 = vcmp.eq.f32.partialorder %v1985, 8.507059e+37
        %v1987 = vand.u32 %v1975, 2147483648
        %v1988 = vor.u32 1.1754944e-38, %v1987
        %v1989 = vsel %vm1986, %v1988, %v1984
        %v1990 = vmul.f32 1.0, %v1989
        %s1991 = scalar_lea.vmem [#allocation3], 8
        %v1992 = vld [vmem:[%s1991] sm:$0xff]
        %v1993 = vmul.f32 %v1970, %v1992
        %v1994 = vmul.f32 %v1951, %v1971
        %v1995 = vadd.f32 %v1993, %v1994
        %v1996 = vtanh.pop %v1995
        %v1997 = vmul.f32 %v1990, %v1996
        %1998 = vst [vmem:[%s1991] sm:$0xff] %v1995
        %1999 = vst [vmem:[%s1710] sm:$0xff] %v1997
        %2000 = vst [vmem:[#allocation4] sm:$0xff] %v1997
        %v2001 = vld [vmem:[%s1710] sm:$0xff]
        %v2002 = vld [vmem:[%s984] sm:$0xff]
        %v2003 = vld [vmem:[%s984 + $0x8] sm:$0xff]
        %v2004 = vld [vmem:[%s984 + $0x10] sm:$0xff]
        %v2005 = vld [vmem:[%s984 + $0x18] sm:$0xff]
        %v2006 = vpack.c.bf16 %v2001, %v2001
        %2007 = vmatpush.bf16.msra.mxu0 %v1841
        %2008 = vmatpush.bf16.msra.mxu0 %v1837
        %2009 = vmatpush.bf16.msra.mxu0 %v1833
        %2010 = vmatpush.bf16.msra.mxu0 %v1829
        %2011 = vmatpush.bf16.msra.mxu0 %v1825
        %2012 = vmatpush.bf16.msra.mxu0 %v1821
        %2013 = vmatpush.bf16.msra.mxu0 %v1817
        %2014 = vmatpush.bf16.msra.mxu0 %v1813
        %2015 = vmatmul.bf16.gmra.mxu0 %v2006
        %v2016 = vpop.f32.mrf.mxu0
        %v2017 = vadd.f32 0.0, %v2016
        %v2018 = vpop.f32.mrf.mxu0
        %2019 = vdwg.mxu0
        %2020 = vmatpush.bf16.msra.mxu0 %v1842
        %2021 = vmatpush.bf16.msra.mxu0 %v1838
        %2022 = vmatpush.bf16.msra.mxu0 %v1834
        %2023 = vmatpush.bf16.msra.mxu0 %v1830
        %2024 = vmatpush.bf16.msra.mxu0 %v1826
        %2025 = vmatpush.bf16.msra.mxu0 %v1822
        %2026 = vmatpush.bf16.msra.mxu0 %v1818
        %2027 = vmatpush.bf16.msra.mxu0 %v1814
        %2028 = vmatmul.bf16.gmra.mxu0 %v2006
        %v2029 = vpop.f32.mrf.mxu0
        %v2030 = vadd.f32 0.0, %v2029
        %v2031 = vpop.f32.mrf.mxu0
        %2032 = vdwg.mxu0
        %2033 = vmatpush.bf16.msra.mxu0 %v1843
        %2034 = vmatpush.bf16.msra.mxu0 %v1839
        %2035 = vmatpush.bf16.msra.mxu0 %v1835
        %2036 = vmatpush.bf16.msra.mxu0 %v1831
        %2037 = vmatpush.bf16.msra.mxu0 %v1827
        %2038 = vmatpush.bf16.msra.mxu0 %v1823
        %2039 = vmatpush.bf16.msra.mxu0 %v1819
        %2040 = vmatpush.bf16.msra.mxu0 %v1815
        %2041 = vmatmul.bf16.gmra.mxu0 %v2006
        %v2042 = vpop.f32.mrf.mxu0
        %v2043 = vadd.f32 0.0, %v2042
        %v2044 = vpop.f32.mrf.mxu0
        %2045 = vdwg.mxu0
        %2046 = vmatpush.bf16.msra.mxu0 %v1844
        %2047 = vmatpush.bf16.msra.mxu0 %v1840
        %2048 = vmatpush.bf16.msra.mxu0 %v1836
        %2049 = vmatpush.bf16.msra.mxu0 %v1832
        %2050 = vmatpush.bf16.msra.mxu0 %v1828
        %2051 = vmatpush.bf16.msra.mxu0 %v1824
        %2052 = vmatpush.bf16.msra.mxu0 %v1820
        %2053 = vmatpush.bf16.msra.mxu0 %v1816
        %2054 = vmatmul.bf16.gmra.mxu0 %v2006
        %v2055 = vpop.f32.mrf.mxu0
        %v2056 = vadd.f32 0.0, %v2055
        %v2057 = vpop.f32.mrf.mxu0
        %2058 = vdwg.mxu0
        %v2059 = vadd.f32 %v2002, %v2017
        %v2060 = vadd.f32 %v2003, %v2030
        %v2061 = vadd.f32 %v2004, %v2043
        %v2062 = vadd.f32 %v2005, %v2056
        %v2063 = vxor.u32 %v2059, 2147483648
        %v2064 = vmul.f32 %v2063, 1.442695
        %v2065 = vpow.pop %v2064
        %v2066 = vadd.f32 %v2065, 1.0
        %v2067 = vrcp.pop %v2066
        %v2068 = vmul.f32 %v2066, %v2067
        %v2069 = vsub.f32 1.0, %v2068
        %v2070 = vmul.f32 %v2067, %v2069
        %v2071 = vadd.f32 %v2067, %v2070
        %vm2072 = vweird.f32 %v2066
        %vm2073 = vweird.f32 %v2067
        %vm2074 = vmor %vm2072, %vm2073
        %v2075 = vsel %vm2074, %v2067, %v2071
        %v2076 = vand.u32 2147483647, %v2066
        %vm2077 = vcmp.eq.f32.partialorder %v2076, 8.507059e+37
        %v2078 = vand.u32 %v2066, 2147483648
        %v2079 = vor.u32 1.1754944e-38, %v2078
        %v2080 = vsel %vm2077, %v2079, %v2075
        %v2081 = vmul.f32 1.0, %v2080
        %v2082 = vxor.u32 %v2060, 2147483648
        %v2083 = vmul.f32 %v2082, 1.442695
        %v2084 = vpow.pop %v2083
        %v2085 = vadd.f32 %v2084, 1.0
        %v2086 = vrcp.pop %v2085
        %v2087 = vmul.f32 %v2085, %v2086
        %v2088 = vsub.f32 1.0, %v2087
        %v2089 = vmul.f32 %v2086, %v2088
        %v2090 = vadd.f32 %v2086, %v2089
        %vm2091 = vweird.f32 %v2085
        %vm2092 = vweird.f32 %v2086
        %vm2093 = vmor %vm2091, %vm2092
        %v2094 = vsel %vm2093, %v2086, %v2090
        %v2095 = vand.u32 2147483647, %v2085
        %vm2096 = vcmp.eq.f32.partialorder %v2095, 8.507059e+37
        %v2097 = vand.u32 %v2085, 2147483648
        %v2098 = vor.u32 1.1754944e-38, %v2097
        %v2099 = vsel %vm2096, %v2098, %v2094
        %v2100 = vmul.f32 1.0, %v2099
        %v2101 = vtanh.pop %v2061
        %v2102 = vxor.u32 %v2062, 2147483648
        %v2103 = vmul.f32 %v2102, 1.442695
        %v2104 = vpow.pop %v2103
        %v2105 = vadd.f32 %v2104, 1.0
        %v2106 = vrcp.pop %v2105
        %v2107 = vmul.f32 %v2105, %v2106
        %v2108 = vsub.f32 1.0, %v2107
        %v2109 = vmul.f32 %v2106, %v2108
        %v2110 = vadd.f32 %v2106, %v2109
        %vm2111 = vweird.f32 %v2105
        %vm2112 = vweird.f32 %v2106
        %vm2113 = vmor %vm2111, %vm2112
        %v2114 = vsel %vm2113, %v2106, %v2110
        %v2115 = vand.u32 2147483647, %v2105
        %vm2116 = vcmp.eq.f32.partialorder %v2115, 8.507059e+37
        %v2117 = vand.u32 %v2105, 2147483648
        %v2118 = vor.u32 1.1754944e-38, %v2117
        %v2119 = vsel %vm2116, %v2118, %v2114
        %v2120 = vmul.f32 1.0, %v2119
        %v2121 = vld [vmem:[%s1991] sm:$0xff]
        %v2122 = vmul.f32 %v2100, %v2121
        %v2123 = vmul.f32 %v2081, %v2101
        %v2124 = vadd.f32 %v2122, %v2123
        %v2125 = vtanh.pop %v2124
        %v2126 = vmul.f32 %v2120, %v2125
        %2127 = vst [vmem:[%s1991] sm:$0xff] %v2124
        %2128 = vst [vmem:[%s1710] sm:$0xff] %v2126
        %2129 = vst [vmem:[%s1112] sm:$0xff] %v2126
        %v2130 = vld [vmem:[%s1710] sm:$0xff]
        %v2131 = vld [vmem:[%s1115] sm:$0xff]
        %v2132 = vld [vmem:[%s1115 + $0x8] sm:$0xff]
        %v2133 = vld [vmem:[%s1115 + $0x10] sm:$0xff]
        %v2134 = vld [vmem:[%s1115 + $0x18] sm:$0xff]
        %v2135 = vpack.c.bf16 %v2130, %v2130
        %2136 = vmatpush.bf16.msra.mxu0 %v1841
        %2137 = vmatpush.bf16.msra.mxu0 %v1837
        %2138 = vmatpush.bf16.msra.mxu0 %v1833
        %2139 = vmatpush.bf16.msra.mxu0 %v1829
        %2140 = vmatpush.bf16.msra.mxu0 %v1825
        %2141 = vmatpush.bf16.msra.mxu0 %v1821
        %2142 = vmatpush.bf16.msra.mxu0 %v1817
        %2143 = vmatpush.bf16.msra.mxu0 %v1813
        %2144 = vmatmul.bf16.gmra.mxu0 %v2135
        %v2145 = vpop.f32.mrf.mxu0
        %v2146 = vadd.f32 0.0, %v2145
        %v2147 = vpop.f32.mrf.mxu0
        %2148 = vdwg.mxu0
        %2149 = vmatpush.bf16.msra.mxu0 %v1842
        %2150 = vmatpush.bf16.msra.mxu0 %v1838
        %2151 = vmatpush.bf16.msra.mxu0 %v1834
        %2152 = vmatpush.bf16.msra.mxu0 %v1830
        %2153 = vmatpush.bf16.msra.mxu0 %v1826
        %2154 = vmatpush.bf16.msra.mxu0 %v1822
        %2155 = vmatpush.bf16.msra.mxu0 %v1818
        %2156 = vmatpush.bf16.msra.mxu0 %v1814
        %2157 = vmatmul.bf16.gmra.mxu0 %v2135
        %v2158 = vpop.f32.mrf.mxu0
        %v2159 = vadd.f32 0.0, %v2158
        %v2160 = vpop.f32.mrf.mxu0
        %2161 = vdwg.mxu0
        %2162 = vmatpush.bf16.msra.mxu0 %v1843
        %2163 = vmatpush.bf16.msra.mxu0 %v1839
        %2164 = vmatpush.bf16.msra.mxu0 %v1835
        %2165 = vmatpush.bf16.msra.mxu0 %v1831
        %2166 = vmatpush.bf16.msra.mxu0 %v1827
        %2167 = vmatpush.bf16.msra.mxu0 %v1823
        %2168 = vmatpush.bf16.msra.mxu0 %v1819
        %2169 = vmatpush.bf16.msra.mxu0 %v1815
        %2170 = vmatmul.bf16.gmra.mxu0 %v2135
        %v2171 = vpop.f32.mrf.mxu0
        %v2172 = vadd.f32 0.0, %v2171
        %v2173 = vpop.f32.mrf.mxu0
        %2174 = vdwg.mxu0
        %2175 = vmatpush.bf16.msra.mxu0 %v1844
        %2176 = vmatpush.bf16.msra.mxu0 %v1840
        %2177 = vmatpush.bf16.msra.mxu0 %v1836
        %2178 = vmatpush.bf16.msra.mxu0 %v1832
        %2179 = vmatpush.bf16.msra.mxu0 %v1828
        %2180 = vmatpush.bf16.msra.mxu0 %v1824
        %2181 = vmatpush.bf16.msra.mxu0 %v1820
        %2182 = vmatpush.bf16.msra.mxu0 %v1816
        %2183 = vmatmul.bf16.gmra.mxu0 %v2135
        %v2184 = vpop.f32.mrf.mxu0
        %v2185 = vadd.f32 0.0, %v2184
        %v2186 = vpop.f32.mrf.mxu0
        %2187 = vdwg.mxu0
        %v2188 = vadd.f32 %v2131, %v2146
        %v2189 = vadd.f32 %v2132, %v2159
        %v2190 = vadd.f32 %v2133, %v2172
        %v2191 = vadd.f32 %v2134, %v2185
        %v2192 = vxor.u32 %v2188, 2147483648
        %v2193 = vmul.f32 %v2192, 1.442695
        %v2194 = vpow.pop %v2193
        %v2195 = vadd.f32 %v2194, 1.0
        %v2196 = vrcp.pop %v2195
        %v2197 = vmul.f32 %v2195, %v2196
        %v2198 = vsub.f32 1.0, %v2197
        %v2199 = vmul.f32 %v2196, %v2198
        %v2200 = vadd.f32 %v2196, %v2199
        %vm2201 = vweird.f32 %v2195
        %vm2202 = vweird.f32 %v2196
        %vm2203 = vmor %vm2201, %vm2202
        %v2204 = vsel %vm2203, %v2196, %v2200
        %v2205 = vand.u32 2147483647, %v2195
        %vm2206 = vcmp.eq.f32.partialorder %v2205, 8.507059e+37
        %v2207 = vand.u32 %v2195, 2147483648
        %v2208 = vor.u32 1.1754944e-38, %v2207
        %v2209 = vsel %vm2206, %v2208, %v2204
        %v2210 = vmul.f32 1.0, %v2209
        %v2211 = vxor.u32 %v2189, 2147483648
        %v2212 = vmul.f32 %v2211, 1.442695
        %v2213 = vpow.pop %v2212
        %v2214 = vadd.f32 %v2213, 1.0
        %v2215 = vrcp.pop %v2214
        %v2216 = vmul.f32 %v2214, %v2215
        %v2217 = vsub.f32 1.0, %v2216
        %v2218 = vmul.f32 %v2215, %v2217
        %v2219 = vadd.f32 %v2215, %v2218
        %vm2220 = vweird.f32 %v2214
        %vm2221 = vweird.f32 %v2215
        %vm2222 = vmor %vm2220, %vm2221
        %v2223 = vsel %vm2222, %v2215, %v2219
        %v2224 = vand.u32 2147483647, %v2214
        %vm2225 = vcmp.eq.f32.partialorder %v2224, 8.507059e+37
        %v2226 = vand.u32 %v2214, 2147483648
        %v2227 = vor.u32 1.1754944e-38, %v2226
        %v2228 = vsel %vm2225, %v2227, %v2223
        %v2229 = vmul.f32 1.0, %v2228
        %v2230 = vtanh.pop %v2190
        %v2231 = vxor.u32 %v2191, 2147483648
        %v2232 = vmul.f32 %v2231, 1.442695
        %v2233 = vpow.pop %v2232
        %v2234 = vadd.f32 %v2233, 1.0
        %v2235 = vrcp.pop %v2234
        %v2236 = vmul.f32 %v2234, %v2235
        %v2237 = vsub.f32 1.0, %v2236
        %v2238 = vmul.f32 %v2235, %v2237
        %v2239 = vadd.f32 %v2235, %v2238
        %vm2240 = vweird.f32 %v2234
        %vm2241 = vweird.f32 %v2235
        %vm2242 = vmor %vm2240, %vm2241
        %v2243 = vsel %vm2242, %v2235, %v2239
        %v2244 = vand.u32 2147483647, %v2234
        %vm2245 = vcmp.eq.f32.partialorder %v2244, 8.507059e+37
        %v2246 = vand.u32 %v2234, 2147483648
        %v2247 = vor.u32 1.1754944e-38, %v2246
        %v2248 = vsel %vm2245, %v2247, %v2243
        %v2249 = vmul.f32 1.0, %v2248
        %v2250 = vld [vmem:[%s1991] sm:$0xff]
        %v2251 = vmul.f32 %v2229, %v2250
        %v2252 = vmul.f32 %v2210, %v2230
        %v2253 = vadd.f32 %v2251, %v2252
        %v2254 = vtanh.pop %v2253
        %v2255 = vmul.f32 %v2249, %v2254
        %2256 = vst [vmem:[%s1991] sm:$0xff] %v2253
        %2257 = vst [vmem:[%s1710] sm:$0xff] %v2255
        %2258 = vst [vmem:[%s1243] sm:$0xff] %v2255
        %v2259 = vld [vmem:[%s1710] sm:$0xff]
        %v2260 = vld [vmem:[%s1246] sm:$0xff]
        %v2261 = vld [vmem:[%s1246 + $0x8] sm:$0xff]
        %v2262 = vld [vmem:[%s1246 + $0x10] sm:$0xff]
        %v2263 = vld [vmem:[%s1246 + $0x18] sm:$0xff]
        %v2264 = vpack.c.bf16 %v2259, %v2259
        %2265 = vmatpush.bf16.msra.mxu0 %v1841
        %2266 = vmatpush.bf16.msra.mxu0 %v1837
        %2267 = vmatpush.bf16.msra.mxu0 %v1833
        %2268 = vmatpush.bf16.msra.mxu0 %v1829
        %2269 = vmatpush.bf16.msra.mxu0 %v1825
        %2270 = vmatpush.bf16.msra.mxu0 %v1821
        %2271 = vmatpush.bf16.msra.mxu0 %v1817
        %2272 = vmatpush.bf16.msra.mxu0 %v1813
        %2273 = vmatmul.bf16.gmra.mxu0 %v2264
        %v2274 = vpop.f32.mrf.mxu0
        %v2275 = vadd.f32 0.0, %v2274
        %v2276 = vpop.f32.mrf.mxu0
        %2277 = vdwg.mxu0
        %2278 = vmatpush.bf16.msra.mxu0 %v1842
        %2279 = vmatpush.bf16.msra.mxu0 %v1838
        %2280 = vmatpush.bf16.msra.mxu0 %v1834
        %2281 = vmatpush.bf16.msra.mxu0 %v1830
        %2282 = vmatpush.bf16.msra.mxu0 %v1826
        %2283 = vmatpush.bf16.msra.mxu0 %v1822
        %2284 = vmatpush.bf16.msra.mxu0 %v1818
        %2285 = vmatpush.bf16.msra.mxu0 %v1814
        %2286 = vmatmul.bf16.gmra.mxu0 %v2264
        %v2287 = vpop.f32.mrf.mxu0
        %v2288 = vadd.f32 0.0, %v2287
        %v2289 = vpop.f32.mrf.mxu0
        %2290 = vdwg.mxu0
        %2291 = vmatpush.bf16.msra.mxu0 %v1843
        %2292 = vmatpush.bf16.msra.mxu0 %v1839
        %2293 = vmatpush.bf16.msra.mxu0 %v1835
        %2294 = vmatpush.bf16.msra.mxu0 %v1831
        %2295 = vmatpush.bf16.msra.mxu0 %v1827
        %2296 = vmatpush.bf16.msra.mxu0 %v1823
        %2297 = vmatpush.bf16.msra.mxu0 %v1819
        %2298 = vmatpush.bf16.msra.mxu0 %v1815
        %2299 = vmatmul.bf16.gmra.mxu0 %v2264
        %v2300 = vpop.f32.mrf.mxu0
        %v2301 = vadd.f32 0.0, %v2300
        %v2302 = vpop.f32.mrf.mxu0
        %2303 = vdwg.mxu0
        %2304 = vmatpush.bf16.msra.mxu0 %v1844
        %2305 = vmatpush.bf16.msra.mxu0 %v1840
        %2306 = vmatpush.bf16.msra.mxu0 %v1836
        %2307 = vmatpush.bf16.msra.mxu0 %v1832
        %2308 = vmatpush.bf16.msra.mxu0 %v1828
        %2309 = vmatpush.bf16.msra.mxu0 %v1824
        %2310 = vmatpush.bf16.msra.mxu0 %v1820
        %2311 = vmatpush.bf16.msra.mxu0 %v1816
        %2312 = vmatmul.bf16.gmra.mxu0 %v2264
        %v2313 = vpop.f32.mrf.mxu0
        %v2314 = vadd.f32 0.0, %v2313
        %v2315 = vpop.f32.mrf.mxu0
        %2316 = vdwg.mxu0
        %v2317 = vadd.f32 %v2260, %v2275
        %v2318 = vadd.f32 %v2261, %v2288
        %v2319 = vadd.f32 %v2262, %v2301
        %v2320 = vadd.f32 %v2263, %v2314
        %v2321 = vxor.u32 %v2317, 2147483648
        %v2322 = vmul.f32 %v2321, 1.442695
        %v2323 = vpow.pop %v2322
        %v2324 = vadd.f32 %v2323, 1.0
        %v2325 = vrcp.pop %v2324
        %v2326 = vmul.f32 %v2324, %v2325
        %v2327 = vsub.f32 1.0, %v2326
        %v2328 = vmul.f32 %v2325, %v2327
        %v2329 = vadd.f32 %v2325, %v2328
        %vm2330 = vweird.f32 %v2324
        %vm2331 = vweird.f32 %v2325
        %vm2332 = vmor %vm2330, %vm2331
        %v2333 = vsel %vm2332, %v2325, %v2329
        %v2334 = vand.u32 2147483647, %v2324
        %vm2335 = vcmp.eq.f32.partialorder %v2334, 8.507059e+37
        %v2336 = vand.u32 %v2324, 2147483648
        %v2337 = vor.u32 1.1754944e-38, %v2336
        %v2338 = vsel %vm2335, %v2337, %v2333
        %v2339 = vmul.f32 1.0, %v2338
        %v2340 = vxor.u32 %v2318, 2147483648
        %v2341 = vmul.f32 %v2340, 1.442695
        %v2342 = vpow.pop %v2341
        %v2343 = vadd.f32 %v2342, 1.0
        %v2344 = vrcp.pop %v2343
        %v2345 = vmul.f32 %v2343, %v2344
        %v2346 = vsub.f32 1.0, %v2345
        %v2347 = vmul.f32 %v2344, %v2346
        %v2348 = vadd.f32 %v2344, %v2347
        %vm2349 = vweird.f32 %v2343
        %vm2350 = vweird.f32 %v2344
        %vm2351 = vmor %vm2349, %vm2350
        %v2352 = vsel %vm2351, %v2344, %v2348
        %v2353 = vand.u32 2147483647, %v2343
        %vm2354 = vcmp.eq.f32.partialorder %v2353, 8.507059e+37
        %v2355 = vand.u32 %v2343, 2147483648
        %v2356 = vor.u32 1.1754944e-38, %v2355
        %v2357 = vsel %vm2354, %v2356, %v2352
        %v2358 = vmul.f32 1.0, %v2357
        %v2359 = vtanh.pop %v2319
        %v2360 = vxor.u32 %v2320, 2147483648
        %v2361 = vmul.f32 %v2360, 1.442695
        %v2362 = vpow.pop %v2361
        %v2363 = vadd.f32 %v2362, 1.0
        %v2364 = vrcp.pop %v2363
        %v2365 = vmul.f32 %v2363, %v2364
        %v2366 = vsub.f32 1.0, %v2365
        %v2367 = vmul.f32 %v2364, %v2366
        %v2368 = vadd.f32 %v2364, %v2367
        %vm2369 = vweird.f32 %v2363
        %vm2370 = vweird.f32 %v2364
        %vm2371 = vmor %vm2369, %vm2370
        %v2372 = vsel %vm2371, %v2364, %v2368
        %v2373 = vand.u32 2147483647, %v2363
        %vm2374 = vcmp.eq.f32.partialorder %v2373, 8.507059e+37
        %v2375 = vand.u32 %v2363, 2147483648
        %v2376 = vor.u32 1.1754944e-38, %v2375
        %v2377 = vsel %vm2374, %v2376, %v2372
        %v2378 = vmul.f32 1.0, %v2377
        %v2379 = vld [vmem:[%s1991] sm:$0xff]
        %v2380 = vmul.f32 %v2358, %v2379
        %v2381 = vmul.f32 %v2339, %v2359
        %v2382 = vadd.f32 %v2380, %v2381
        %v2383 = vtanh.pop %v2382
        %v2384 = vmul.f32 %v2378, %v2383
        %2385 = vst [vmem:[%s1991] sm:$0xff] %v2382
        %2386 = vst [vmem:[%s1710] sm:$0xff] %v2384
        %2387 = vst [vmem:[%s1374] sm:$0xff] %v2384
        %s2388 = sld [smem:[#allocation6]]
        %v2389 = vld [vmem:[#allocation4] sm:$0xff]
        %v2390 = vld [vmem:[#allocation4 + $0x8] sm:$0xff]
        %v2391 = vld [vmem:[#allocation4 + $0x10] sm:$0xff]
        %v2392 = vld [vmem:[#allocation4 + $0x18] sm:$0xff]
        %v2393 = vpack.c.bf16 %v2390, %v2389
        %v2394 = vpack.c.bf16 %v2392, %v2391
        %v2395 = vld [vmem:[#allocation16] sm:$0xff]
        %v2396 = vld [vmem:[#allocation16 + $0x8] sm:$0xff]
        %v2397 = vld [vmem:[#allocation16 + $0x10] sm:$0xff]
        %v2398 = vld [vmem:[#allocation16 + $0x18] sm:$0xff]
        %v2399 = vld [vmem:[#allocation16 + $0x20] sm:$0xff]
        %v2400 = vld [vmem:[#allocation16 + $0x28] sm:$0xff]
        %v2401 = vld [vmem:[#allocation16 + $0x30] sm:$0xff]
        %v2402 = vld [vmem:[#allocation16 + $0x38] sm:$0xff]
        %v2403 = vld [vmem:[#allocation16 + $0x40] sm:$0xff]
        %v2404 = vld [vmem:[#allocation16 + $0x48] sm:$0xff]
        %v2405 = vld [vmem:[#allocation16 + $0x50] sm:$0xff]
        %v2406 = vld [vmem:[#allocation16 + $0x58] sm:$0xff]
        %v2407 = vld [vmem:[#allocation16 + $0x60] sm:$0xff]
        %v2408 = vld [vmem:[#allocation16 + $0x68] sm:$0xff]
        %v2409 = vld [vmem:[#allocation16 + $0x70] sm:$0xff]
        %v2410 = vld [vmem:[#allocation16 + $0x78] sm:$0xff]
        %v2411 = vld [vmem:[#allocation16 + $0x80] sm:$0xff]
        %v2412 = vld [vmem:[#allocation16 + $0x88] sm:$0xff]
        %v2413 = vld [vmem:[#allocation16 + $0x90] sm:$0xff]
        %v2414 = vld [vmem:[#allocation16 + $0x98] sm:$0xff]
        %v2415 = vld [vmem:[#allocation16 + $0xa0] sm:$0xff]
        %v2416 = vld [vmem:[#allocation16 + $0xa8] sm:$0xff]
        %v2417 = vld [vmem:[#allocation16 + $0xb0] sm:$0xff]
        %v2418 = vld [vmem:[#allocation16 + $0xb8] sm:$0xff]
        %v2419 = vld [vmem:[#allocation16 + $0xc0] sm:$0xff]
        %v2420 = vld [vmem:[#allocation16 + $0xc8] sm:$0xff]
        %v2421 = vld [vmem:[#allocation16 + $0xd0] sm:$0xff]
        %v2422 = vld [vmem:[#allocation16 + $0xd8] sm:$0xff]
        %v2423 = vld [vmem:[#allocation16 + $0xe0] sm:$0xff]
        %v2424 = vld [vmem:[#allocation16 + $0xe8] sm:$0xff]
        %v2425 = vld [vmem:[#allocation16 + $0xf0] sm:$0xff]
        %v2426 = vld [vmem:[#allocation16 + $0xf8] sm:$0xff]
        %v2427 = vld [vmem:[#allocation16 + $0x100] sm:$0xff]
        %v2428 = vld [vmem:[#allocation16 + $0x108] sm:$0xff]
        %v2429 = vld [vmem:[#allocation16 + $0x110] sm:$0xff]
        %v2430 = vld [vmem:[#allocation16 + $0x118] sm:$0xff]
        %v2431 = vld [vmem:[#allocation16 + $0x120] sm:$0xff]
        %v2432 = vld [vmem:[#allocation16 + $0x128] sm:$0xff]
        %v2433 = vld [vmem:[#allocation16 + $0x130] sm:$0xff]
        %v2434 = vld [vmem:[#allocation16 + $0x138] sm:$0xff]
        %v2435 = vld [vmem:[#allocation16 + $0x140] sm:$0xff]
        %v2436 = vld [vmem:[#allocation16 + $0x148] sm:$0xff]
        %v2437 = vld [vmem:[#allocation16 + $0x150] sm:$0xff]
        %v2438 = vld [vmem:[#allocation16 + $0x158] sm:$0xff]
        %v2439 = vld [vmem:[#allocation16 + $0x160] sm:$0xff]
        %v2440 = vld [vmem:[#allocation16 + $0x168] sm:$0xff]
        %v2441 = vld [vmem:[#allocation16 + $0x170] sm:$0xff]
        %v2442 = vld [vmem:[#allocation16 + $0x178] sm:$0xff]
        %v2443 = vld [vmem:[#allocation16 + $0x180] sm:$0xff]
        %v2444 = vld [vmem:[#allocation16 + $0x188] sm:$0xff]
        %v2445 = vld [vmem:[#allocation16 + $0x190] sm:$0xff]
        %v2446 = vld [vmem:[#allocation16 + $0x198] sm:$0xff]
        %v2447 = vld [vmem:[#allocation16 + $0x1a0] sm:$0xff]
        %v2448 = vld [vmem:[#allocation16 + $0x1a8] sm:$0xff]
        %v2449 = vld [vmem:[#allocation16 + $0x1b0] sm:$0xff]
        %v2450 = vld [vmem:[#allocation16 + $0x1b8] sm:$0xff]
        %v2451 = vld [vmem:[#allocation16 + $0x1c0] sm:$0xff]
        %v2452 = vld [vmem:[#allocation16 + $0x1c8] sm:$0xff]
        %v2453 = vld [vmem:[#allocation16 + $0x1d0] sm:$0xff]
        %v2454 = vld [vmem:[#allocation16 + $0x1d8] sm:$0xff]
        %v2455 = vld [vmem:[#allocation16 + $0x1e0] sm:$0xff]
        %v2456 = vld [vmem:[#allocation16 + $0x1e8] sm:$0xff]
        %v2457 = vld [vmem:[#allocation16 + $0x1f0] sm:$0xff]
        %v2458 = vld [vmem:[#allocation16 + $0x1f8] sm:$0xff]
        %v2459 = vld [vmem:[#allocation18] sm:$0xff]
        %v2461 = vperm.slane %v2459, 0
        %v2462 = vperm.slane %v2459, 1
        %v2463 = vperm.slane %v2459, 2
        %v2464 = vperm.slane %v2459, 3
        %v2465 = vperm.slane %v2459, 4
        %v2466 = vperm.slane %v2459, 5
        %v2467 = vperm.slane %v2459, 6
        %v2468 = vperm.slane %v2459, 7
        %v2541 = vunpack.c.l.b16 %v2395
        %v2542 = vunpack.c.h.b16 %v2395
        %v2543 = vunpack.c.l.b16 %v2396
        %v2544 = vunpack.c.h.b16 %v2396
        %v2545 = vunpack.c.l.b16 %v2397
        %v2546 = vunpack.c.h.b16 %v2397
        %v2547 = vunpack.c.l.b16 %v2398
        %v2548 = vunpack.c.h.b16 %v2398
        %v2549 = vunpack.c.l.b16 %v2399
        %v2550 = vunpack.c.h.b16 %v2399
        %v2551 = vunpack.c.l.b16 %v2400
        %v2552 = vunpack.c.h.b16 %v2400
        %v2553 = vunpack.c.l.b16 %v2401
        %v2554 = vunpack.c.h.b16 %v2401
        %v2555 = vunpack.c.l.b16 %v2402
        %v2556 = vunpack.c.h.b16 %v2402
        %v2557 = vunpack.c.l.b16 %v2403
        %v2558 = vunpack.c.h.b16 %v2403
        %v2559 = vunpack.c.l.b16 %v2404
        %v2560 = vunpack.c.h.b16 %v2404
        %v2561 = vunpack.c.l.b16 %v2405
        %v2562 = vunpack.c.h.b16 %v2405
        %v2563 = vunpack.c.l.b16 %v2406
        %v2564 = vunpack.c.h.b16 %v2406
        %v2565 = vunpack.c.l.b16 %v2407
        %v2566 = vunpack.c.h.b16 %v2407
        %v2567 = vunpack.c.l.b16 %v2408
        %v2568 = vunpack.c.h.b16 %v2408
        %v2569 = vunpack.c.l.b16 %v2409
        %v2570 = vunpack.c.h.b16 %v2409
        %v2571 = vunpack.c.l.b16 %v2410
        %v2572 = vunpack.c.h.b16 %v2410
        %v2573 = vunpack.c.l.b16 %v2411
        %v2574 = vunpack.c.h.b16 %v2411
        %v2575 = vunpack.c.l.b16 %v2412
        %v2576 = vunpack.c.h.b16 %v2412
        %v2577 = vunpack.c.l.b16 %v2413
        %v2578 = vunpack.c.h.b16 %v2413
        %v2579 = vunpack.c.l.b16 %v2414
        %v2580 = vunpack.c.h.b16 %v2414
        %v2581 = vunpack.c.l.b16 %v2415
        %v2582 = vunpack.c.h.b16 %v2415
        %v2583 = vunpack.c.l.b16 %v2416
        %v2584 = vunpack.c.h.b16 %v2416
        %v2585 = vunpack.c.l.b16 %v2417
        %v2586 = vunpack.c.h.b16 %v2417
        %v2587 = vunpack.c.l.b16 %v2418
        %v2588 = vunpack.c.h.b16 %v2418
        %v2589 = vunpack.c.l.b16 %v2419
        %v2590 = vunpack.c.h.b16 %v2419
        %v2591 = vunpack.c.l.b16 %v2420
        %v2592 = vunpack.c.h.b16 %v2420
        %v2593 = vunpack.c.l.b16 %v2421
        %v2594 = vunpack.c.h.b16 %v2421
        %v2595 = vunpack.c.l.b16 %v2422
        %v2596 = vunpack.c.h.b16 %v2422
        %v2597 = vunpack.c.l.b16 %v2423
        %v2598 = vunpack.c.h.b16 %v2423
        %v2599 = vunpack.c.l.b16 %v2424
        %v2600 = vunpack.c.h.b16 %v2424
        %v2601 = vunpack.c.l.b16 %v2425
        %v2602 = vunpack.c.h.b16 %v2425
        %v2603 = vunpack.c.l.b16 %v2426
        %v2604 = vunpack.c.h.b16 %v2426
        %v2605 = vunpack.c.l.b16 %v2427
        %v2606 = vunpack.c.h.b16 %v2427
        %v2607 = vunpack.c.l.b16 %v2428
        %v2608 = vunpack.c.h.b16 %v2428
        %v2609 = vunpack.c.l.b16 %v2429
        %v2610 = vunpack.c.h.b16 %v2429
        %v2611 = vunpack.c.l.b16 %v2430
        %v2612 = vunpack.c.h.b16 %v2430
        %v2613 = vunpack.c.l.b16 %v2431
        %v2614 = vunpack.c.h.b16 %v2431
        %v2615 = vunpack.c.l.b16 %v2432
        %v2616 = vunpack.c.h.b16 %v2432
        %v2617 = vunpack.c.l.b16 %v2433
        %v2618 = vunpack.c.h.b16 %v2433
        %v2619 = vunpack.c.l.b16 %v2434
        %v2620 = vunpack.c.h.b16 %v2434
        %v2621 = vunpack.c.l.b16 %v2435
        %v2622 = vunpack.c.h.b16 %v2435
        %v2623 = vunpack.c.l.b16 %v2436
        %v2624 = vunpack.c.h.b16 %v2436
        %v2625 = vunpack.c.l.b16 %v2437
        %v2626 = vunpack.c.h.b16 %v2437
        %v2627 = vunpack.c.l.b16 %v2438
        %v2628 = vunpack.c.h.b16 %v2438
        %v2629 = vunpack.c.l.b16 %v2439
        %v2630 = vunpack.c.h.b16 %v2439
        %v2631 = vunpack.c.l.b16 %v2440
        %v2632 = vunpack.c.h.b16 %v2440
        %v2633 = vunpack.c.l.b16 %v2441
        %v2634 = vunpack.c.h.b16 %v2441
        %v2635 = vunpack.c.l.b16 %v2442
        %v2636 = vunpack.c.h.b16 %v2442
        %v2637 = vunpack.c.l.b16 %v2443
        %v2638 = vunpack.c.h.b16 %v2443
        %v2639 = vunpack.c.l.b16 %v2444
        %v2640 = vunpack.c.h.b16 %v2444
        %v2641 = vunpack.c.l.b16 %v2445
        %v2642 = vunpack.c.h.b16 %v2445
        %v2643 = vunpack.c.l.b16 %v2446
        %v2644 = vunpack.c.h.b16 %v2446
        %v2645 = vunpack.c.l.b16 %v2447
        %v2646 = vunpack.c.h.b16 %v2447
        %v2647 = vunpack.c.l.b16 %v2448
        %v2648 = vunpack.c.h.b16 %v2448
        %v2649 = vunpack.c.l.b16 %v2449
        %v2650 = vunpack.c.h.b16 %v2449
        %v2651 = vunpack.c.l.b16 %v2450
        %v2652 = vunpack.c.h.b16 %v2450
        %v2653 = vunpack.c.l.b16 %v2451
        %v2654 = vunpack.c.h.b16 %v2451
        %v2655 = vunpack.c.l.b16 %v2452
        %v2656 = vunpack.c.h.b16 %v2452
        %v2657 = vunpack.c.l.b16 %v2453
        %v2658 = vunpack.c.h.b16 %v2453
        %v2659 = vunpack.c.l.b16 %v2454
        %v2660 = vunpack.c.h.b16 %v2454
        %v2661 = vunpack.c.l.b16 %v2455
        %v2662 = vunpack.c.h.b16 %v2455
        %v2663 = vunpack.c.l.b16 %v2456
        %v2664 = vunpack.c.h.b16 %v2456
        %v2665 = vunpack.c.l.b16 %v2457
        %v2666 = vunpack.c.h.b16 %v2457
        %v2667 = vunpack.c.l.b16 %v2458
        %v2668 = vunpack.c.h.b16 %v2458
        %v2669 = vpack.c.b16 %v2549, %v2541
        %v2670 = vpack.c.b16 %v2550, %v2542
        %v2671 = vpack.c.b16 %v2551, %v2543
        %v2672 = vpack.c.b16 %v2552, %v2544
        %v2673 = vpack.c.b16 %v2553, %v2545
        %v2674 = vpack.c.b16 %v2554, %v2546
        %v2675 = vpack.c.b16 %v2555, %v2547
        %v2676 = vpack.c.b16 %v2556, %v2548
        %v2677 = vpack.c.b16 %v2565, %v2557
        %v2678 = vpack.c.b16 %v2566, %v2558
        %v2679 = vpack.c.b16 %v2567, %v2559
        %v2680 = vpack.c.b16 %v2568, %v2560
        %v2681 = vpack.c.b16 %v2569, %v2561
        %v2682 = vpack.c.b16 %v2570, %v2562
        %v2683 = vpack.c.b16 %v2571, %v2563
        %v2684 = vpack.c.b16 %v2572, %v2564
        %v2685 = vpack.c.b16 %v2581, %v2573
        %v2686 = vpack.c.b16 %v2582, %v2574
        %v2687 = vpack.c.b16 %v2583, %v2575
        %v2688 = vpack.c.b16 %v2584, %v2576
        %v2689 = vpack.c.b16 %v2585, %v2577
        %v2690 = vpack.c.b16 %v2586, %v2578
        %v2691 = vpack.c.b16 %v2587, %v2579
        %v2692 = vpack.c.b16 %v2588, %v2580
        %v2693 = vpack.c.b16 %v2597, %v2589
        %v2694 = vpack.c.b16 %v2598, %v2590
        %v2695 = vpack.c.b16 %v2599, %v2591
        %v2696 = vpack.c.b16 %v2600, %v2592
        %v2697 = vpack.c.b16 %v2601, %v2593
        %v2698 = vpack.c.b16 %v2602, %v2594
        %v2699 = vpack.c.b16 %v2603, %v2595
        %v2700 = vpack.c.b16 %v2604, %v2596
        %v2701 = vpack.c.b16 %v2613, %v2605
        %v2702 = vpack.c.b16 %v2614, %v2606
        %v2703 = vpack.c.b16 %v2615, %v2607
        %v2704 = vpack.c.b16 %v2616, %v2608
        %v2705 = vpack.c.b16 %v2617, %v2609
        %v2706 = vpack.c.b16 %v2618, %v2610
        %v2707 = vpack.c.b16 %v2619, %v2611
        %v2708 = vpack.c.b16 %v2620, %v2612
        %v2709 = vpack.c.b16 %v2629, %v2621
        %v2710 = vpack.c.b16 %v2630, %v2622
        %v2711 = vpack.c.b16 %v2631, %v2623
        %v2712 = vpack.c.b16 %v2632, %v2624
        %v2713 = vpack.c.b16 %v2633, %v2625
        %v2714 = vpack.c.b16 %v2634, %v2626
        %v2715 = vpack.c.b16 %v2635, %v2627
        %v2716 = vpack.c.b16 %v2636, %v2628
        %v2717 = vpack.c.b16 %v2645, %v2637
        %v2718 = vpack.c.b16 %v2646, %v2638
        %v2719 = vpack.c.b16 %v2647, %v2639
        %v2720 = vpack.c.b16 %v2648, %v2640
        %v2721 = vpack.c.b16 %v2649, %v2641
        %v2722 = vpack.c.b16 %v2650, %v2642
        %v2723 = vpack.c.b16 %v2651, %v2643
        %v2724 = vpack.c.b16 %v2652, %v2644
        %v2725 = vpack.c.b16 %v2661, %v2653
        %v2726 = vpack.c.b16 %v2662, %v2654
        %v2727 = vpack.c.b16 %v2663, %v2655
        %v2728 = vpack.c.b16 %v2664, %v2656
        %v2729 = vpack.c.b16 %v2665, %v2657
        %v2730 = vpack.c.b16 %v2666, %v2658
        %v2731 = vpack.c.b16 %v2667, %v2659
        %v2732 = vpack.c.b16 %v2668, %v2660
        %2797 = vmatpush.bf16.msra.mxu0 %v2725
        %2798 = vmatpush.bf16.msra.mxu0 %v2717
        %2799 = vmatpush.bf16.msra.mxu0 %v2709
        %2800 = vmatpush.bf16.msra.mxu0 %v2701
        %2801 = vmatpush.bf16.msra.mxu0 %v2693
        %2802 = vmatpush.bf16.msra.mxu0 %v2685
        %2803 = vmatpush.bf16.msra.mxu0 %v2677
        %2804 = vmatpush.bf16.msra.mxu0 %v2669
        %2805 = vmatmul.bf16.gmra.mxu0 %v2393
        %v2806 = vpop.f32.mrf.mxu0
        %v2807 = vadd.f32 %v2461, %v2806
        %v2808 = vpop.f32.mrf.mxu0
        %v2809 = vadd.f32 %v2461, %v2808
        %2810 = vmatmul.bf16.gmra.mxu0 %v2394
        %v2811 = vpop.f32.mrf.mxu0
        %v2812 = vadd.f32 %v2461, %v2811
        %v2813 = vpop.f32.mrf.mxu0
        %v2814 = vadd.f32 %v2461, %v2813
        %2815 = vdwg.mxu0
        %2816 = vmatpush.bf16.msra.mxu0 %v2726
        %2817 = vmatpush.bf16.msra.mxu0 %v2718
        %2818 = vmatpush.bf16.msra.mxu0 %v2710
        %2819 = vmatpush.bf16.msra.mxu0 %v2702
        %2820 = vmatpush.bf16.msra.mxu0 %v2694
        %2821 = vmatpush.bf16.msra.mxu0 %v2686
        %2822 = vmatpush.bf16.msra.mxu0 %v2678
        %2823 = vmatpush.bf16.msra.mxu0 %v2670
        %2824 = vmatmul.bf16.gmra.mxu0 %v2393
        %v2825 = vpop.f32.mrf.mxu0
        %v2826 = vadd.f32 %v2462, %v2825
        %v2827 = vpop.f32.mrf.mxu0
        %v2828 = vadd.f32 %v2462, %v2827
        %2829 = vmatmul.bf16.gmra.mxu0 %v2394
        %v2830 = vpop.f32.mrf.mxu0
        %v2831 = vadd.f32 %v2462, %v2830
        %v2832 = vpop.f32.mrf.mxu0
        %v2833 = vadd.f32 %v2462, %v2832
        %2834 = vdwg.mxu0
        %2835 = vmatpush.bf16.msra.mxu0 %v2727
        %2836 = vmatpush.bf16.msra.mxu0 %v2719
        %2837 = vmatpush.bf16.msra.mxu0 %v2711
        %2838 = vmatpush.bf16.msra.mxu0 %v2703
        %2839 = vmatpush.bf16.msra.mxu0 %v2695
        %2840 = vmatpush.bf16.msra.mxu0 %v2687
        %2841 = vmatpush.bf16.msra.mxu0 %v2679
        %2842 = vmatpush.bf16.msra.mxu0 %v2671
        %2843 = vmatmul.bf16.gmra.mxu0 %v2393
        %v2844 = vpop.f32.mrf.mxu0
        %v2845 = vadd.f32 %v2463, %v2844
        %v2846 = vpop.f32.mrf.mxu0
        %v2847 = vadd.f32 %v2463, %v2846
        %2848 = vmatmul.bf16.gmra.mxu0 %v2394
        %v2849 = vpop.f32.mrf.mxu0
        %v2850 = vadd.f32 %v2463, %v2849
        %v2851 = vpop.f32.mrf.mxu0
        %v2852 = vadd.f32 %v2463, %v2851
        %2853 = vdwg.mxu0
        %2854 = vmatpush.bf16.msra.mxu0 %v2728
        %2855 = vmatpush.bf16.msra.mxu0 %v2720
        %2856 = vmatpush.bf16.msra.mxu0 %v2712
        %2857 = vmatpush.bf16.msra.mxu0 %v2704
        %2858 = vmatpush.bf16.msra.mxu0 %v2696
        %2859 = vmatpush.bf16.msra.mxu0 %v2688
        %2860 = vmatpush.bf16.msra.mxu0 %v2680
        %2861 = vmatpush.bf16.msra.mxu0 %v2672
        %2862 = vmatmul.bf16.gmra.mxu0 %v2393
        %v2863 = vpop.f32.mrf.mxu0
        %v2864 = vadd.f32 %v2464, %v2863
        %v2865 = vpop.f32.mrf.mxu0
        %v2866 = vadd.f32 %v2464, %v2865
        %2867 = vmatmul.bf16.gmra.mxu0 %v2394
        %v2868 = vpop.f32.mrf.mxu0
        %v2869 = vadd.f32 %v2464, %v2868
        %v2870 = vpop.f32.mrf.mxu0
        %v2871 = vadd.f32 %v2464, %v2870
        %2872 = vdwg.mxu0
        %2873 = vmatpush.bf16.msra.mxu0 %v2729
        %2874 = vmatpush.bf16.msra.mxu0 %v2721
        %2875 = vmatpush.bf16.msra.mxu0 %v2713
        %2876 = vmatpush.bf16.msra.mxu0 %v2705
        %2877 = vmatpush.bf16.msra.mxu0 %v2697
        %2878 = vmatpush.bf16.msra.mxu0 %v2689
        %2879 = vmatpush.bf16.msra.mxu0 %v2681
        %2880 = vmatpush.bf16.msra.mxu0 %v2673
        %2881 = vmatmul.bf16.gmra.mxu0 %v2393
        %v2882 = vpop.f32.mrf.mxu0
        %v2883 = vadd.f32 %v2465, %v2882
        %v2884 = vpop.f32.mrf.mxu0
        %v2885 = vadd.f32 %v2465, %v2884
        %2886 = vmatmul.bf16.gmra.mxu0 %v2394
        %v2887 = vpop.f32.mrf.mxu0
        %v2888 = vadd.f32 %v2465, %v2887
        %v2889 = vpop.f32.mrf.mxu0
        %v2890 = vadd.f32 %v2465, %v2889
        %2891 = vdwg.mxu0
        %2892 = vmatpush.bf16.msra.mxu0 %v2730
        %2893 = vmatpush.bf16.msra.mxu0 %v2722
        %2894 = vmatpush.bf16.msra.mxu0 %v2714
        %2895 = vmatpush.bf16.msra.mxu0 %v2706
        %2896 = vmatpush.bf16.msra.mxu0 %v2698
        %2897 = vmatpush.bf16.msra.mxu0 %v2690
        %2898 = vmatpush.bf16.msra.mxu0 %v2682
        %2899 = vmatpush.bf16.msra.mxu0 %v2674
        %2900 = vmatmul.bf16.gmra.mxu0 %v2393
        %v2901 = vpop.f32.mrf.mxu0
        %v2902 = vadd.f32 %v2466, %v2901
        %v2903 = vpop.f32.mrf.mxu0
        %v2904 = vadd.f32 %v2466, %v2903
        %2905 = vmatmul.bf16.gmra.mxu0 %v2394
        %v2906 = vpop.f32.mrf.mxu0
        %v2907 = vadd.f32 %v2466, %v2906
        %v2908 = vpop.f32.mrf.mxu0
        %v2909 = vadd.f32 %v2466, %v2908
        %2910 = vdwg.mxu0
        %2911 = vmatpush.bf16.msra.mxu0 %v2731
        %2912 = vmatpush.bf16.msra.mxu0 %v2723
        %2913 = vmatpush.bf16.msra.mxu0 %v2715
        %2914 = vmatpush.bf16.msra.mxu0 %v2707
        %2915 = vmatpush.bf16.msra.mxu0 %v2699
        %2916 = vmatpush.bf16.msra.mxu0 %v2691
        %2917 = vmatpush.bf16.msra.mxu0 %v2683
        %2918 = vmatpush.bf16.msra.mxu0 %v2675
        %2919 = vmatmul.bf16.gmra.mxu0 %v2393
        %v2920 = vpop.f32.mrf.mxu0
        %v2921 = vadd.f32 %v2467, %v2920
        %v2922 = vpop.f32.mrf.mxu0
        %v2923 = vadd.f32 %v2467, %v2922
        %2924 = vmatmul.bf16.gmra.mxu0 %v2394
        %v2925 = vpop.f32.mrf.mxu0
        %v2926 = vadd.f32 %v2467, %v2925
        %v2927 = vpop.f32.mrf.mxu0
        %v2928 = vadd.f32 %v2467, %v2927
        %2929 = vdwg.mxu0
        %2930 = vmatpush.bf16.msra.mxu0 %v2732
        %2931 = vmatpush.bf16.msra.mxu0 %v2724
        %2932 = vmatpush.bf16.msra.mxu0 %v2716
        %2933 = vmatpush.bf16.msra.mxu0 %v2708
        %2934 = vmatpush.bf16.msra.mxu0 %v2700
        %2935 = vmatpush.bf16.msra.mxu0 %v2692
        %2936 = vmatpush.bf16.msra.mxu0 %v2684
        %2937 = vmatpush.bf16.msra.mxu0 %v2676
        %2938 = vmatmul.bf16.gmra.mxu0 %v2393
        %v2939 = vpop.f32.mrf.mxu0
        %v2940 = vadd.f32 %v2468, %v2939
        %v2941 = vpop.f32.mrf.mxu0
        %v2942 = vadd.f32 %v2468, %v2941
        %2943 = vmatmul.bf16.gmra.mxu0 %v2394
        %v2944 = vpop.f32.mrf.mxu0
        %v2945 = vadd.f32 %v2468, %v2944
        %v2946 = vpop.f32.mrf.mxu0
        %v2947 = vadd.f32 %v2468, %v2946
        %2948 = vdwg.mxu0
        %v2949 = vmax.f32 %v2807, 0.0
        %v2950 = vmax.f32 %v2826, 0.0
        %v2951 = vmax.f32 %v2845, 0.0
        %v2952 = vmax.f32 %v2864, 0.0
        %v2953 = vmax.f32 %v2883, 0.0
        %v2954 = vmax.f32 %v2902, 0.0
        %v2955 = vmax.f32 %v2921, 0.0
        %v2956 = vmax.f32 %v2940, 0.0
        %v2957 = vmax.f32 %v2809, 0.0
        %v2958 = vmax.f32 %v2828, 0.0
        %v2959 = vmax.f32 %v2847, 0.0
        %v2960 = vmax.f32 %v2866, 0.0
        %v2961 = vmax.f32 %v2885, 0.0
        %v2962 = vmax.f32 %v2904, 0.0
        %v2963 = vmax.f32 %v2923, 0.0
        %v2964 = vmax.f32 %v2942, 0.0
        %v2965 = vmax.f32 %v2812, 0.0
        %v2966 = vmax.f32 %v2831, 0.0
        %v2967 = vmax.f32 %v2850, 0.0
        %v2968 = vmax.f32 %v2869, 0.0
        %v2969 = vmax.f32 %v2888, 0.0
        %v2970 = vmax.f32 %v2907, 0.0
        %v2971 = vmax.f32 %v2926, 0.0
        %v2972 = vmax.f32 %v2945, 0.0
        %v2973 = vmax.f32 %v2814, 0.0
        %v2974 = vmax.f32 %v2833, 0.0
        %v2975 = vmax.f32 %v2852, 0.0
        %v2976 = vmax.f32 %v2871, 0.0
        %v2977 = vmax.f32 %v2890, 0.0
        %v2978 = vmax.f32 %v2909, 0.0
        %v2979 = vmax.f32 %v2928, 0.0
        %v2980 = vmax.f32 %v2947, 0.0
        %v2981 = vmin.f32 %v2807, 0.0
        %v2982 = vmin.f32 %v2826, 0.0
        %v2983 = vmin.f32 %v2845, 0.0
        %v2984 = vmin.f32 %v2864, 0.0
        %v2985 = vmin.f32 %v2883, 0.0
        %v2986 = vmin.f32 %v2902, 0.0
        %v2987 = vmin.f32 %v2921, 0.0
        %v2988 = vmin.f32 %v2940, 0.0
        %v2989 = vmin.f32 %v2809, 0.0
        %v2990 = vmin.f32 %v2828, 0.0
        %v2991 = vmin.f32 %v2847, 0.0
        %v2992 = vmin.f32 %v2866, 0.0
        %v2993 = vmin.f32 %v2885, 0.0
        %v2994 = vmin.f32 %v2904, 0.0
        %v2995 = vmin.f32 %v2923, 0.0
        %v2996 = vmin.f32 %v2942, 0.0
        %v2997 = vmin.f32 %v2812, 0.0
        %v2998 = vmin.f32 %v2831, 0.0
        %v2999 = vmin.f32 %v2850, 0.0
        %v3000 = vmin.f32 %v2869, 0.0
        %v3001 = vmin.f32 %v2888, 0.0
        %v3002 = vmin.f32 %v2907, 0.0
        %v3003 = vmin.f32 %v2926, 0.0
        %v3004 = vmin.f32 %v2945, 0.0
        %v3005 = vmin.f32 %v2814, 0.0
        %v3006 = vmin.f32 %v2833, 0.0
        %v3007 = vmin.f32 %v2852, 0.0
        %v3008 = vmin.f32 %v2871, 0.0
        %v3009 = vmin.f32 %v2890, 0.0
        %v3010 = vmin.f32 %v2909, 0.0
        %v3011 = vmin.f32 %v2928, 0.0
        %v3012 = vmin.f32 %v2947, 0.0
        %v3013 = vstv %s2388
        %v3014 = vmul.f32 %v3013, %v2981
        %v3015 = vmul.f32 %v3013, %v2982
        %v3016 = vmul.f32 %v3013, %v2983
        %v3017 = vmul.f32 %v3013, %v2984
        %v3018 = vmul.f32 %v3013, %v2985
        %v3019 = vmul.f32 %v3013, %v2986
        %v3020 = vmul.f32 %v3013, %v2987
        %v3021 = vmul.f32 %v3013, %v2988
        %v3022 = vmul.f32 %v3013, %v2989
        %v3023 = vmul.f32 %v3013, %v2990
        %v3024 = vmul.f32 %v3013, %v2991
        %v3025 = vmul.f32 %v3013, %v2992
        %v3026 = vmul.f32 %v3013, %v2993
        %v3027 = vmul.f32 %v3013, %v2994
        %v3028 = vmul.f32 %v3013, %v2995
        %v3029 = vmul.f32 %v3013, %v2996
        %v3030 = vmul.f32 %v3013, %v2997
        %v3031 = vmul.f32 %v3013, %v2998
        %v3032 = vmul.f32 %v3013, %v2999
        %v3033 = vmul.f32 %v3013, %v3000
        %v3034 = vmul.f32 %v3013, %v3001
        %v3035 = vmul.f32 %v3013, %v3002
        %v3036 = vmul.f32 %v3013, %v3003
        %v3037 = vmul.f32 %v3013, %v3004
        %v3038 = vmul.f32 %v3013, %v3005
        %v3039 = vmul.f32 %v3013, %v3006
        %v3040 = vmul.f32 %v3013, %v3007
        %v3041 = vmul.f32 %v3013, %v3008
        %v3042 = vmul.f32 %v3013, %v3009
        %v3043 = vmul.f32 %v3013, %v3010
        %v3044 = vmul.f32 %v3013, %v3011
        %v3045 = vmul.f32 %v3013, %v3012
        %v3046 = vadd.f32 %v2949, %v3014
        %v3047 = vadd.f32 %v2950, %v3015
        %v3048 = vadd.f32 %v2951, %v3016
        %v3049 = vadd.f32 %v2952, %v3017
        %v3050 = vadd.f32 %v2953, %v3018
        %v3051 = vadd.f32 %v2954, %v3019
        %v3052 = vadd.f32 %v2955, %v3020
        %v3053 = vadd.f32 %v2956, %v3021
        %v3054 = vadd.f32 %v2957, %v3022
        %v3055 = vadd.f32 %v2958, %v3023
        %v3056 = vadd.f32 %v2959, %v3024
        %v3057 = vadd.f32 %v2960, %v3025
        %v3058 = vadd.f32 %v2961, %v3026
        %v3059 = vadd.f32 %v2962, %v3027
        %v3060 = vadd.f32 %v2963, %v3028
        %v3061 = vadd.f32 %v2964, %v3029
        %v3062 = vadd.f32 %v2965, %v3030
        %v3063 = vadd.f32 %v2966, %v3031
        %v3064 = vadd.f32 %v2967, %v3032
        %v3065 = vadd.f32 %v2968, %v3033
        %v3066 = vadd.f32 %v2969, %v3034
        %v3067 = vadd.f32 %v2970, %v3035
        %v3068 = vadd.f32 %v2971, %v3036
        %v3069 = vadd.f32 %v2972, %v3037
        %v3070 = vadd.f32 %v2973, %v3038
        %v3071 = vadd.f32 %v2974, %v3039
        %v3072 = vadd.f32 %v2975, %v3040
        %v3073 = vadd.f32 %v2976, %v3041
        %v3074 = vadd.f32 %v2977, %v3042
        %v3075 = vadd.f32 %v2978, %v3043
        %v3076 = vadd.f32 %v2979, %v3044
        %v3077 = vadd.f32 %v2980, %v3045
        %v3078 = vpack.c.bf16 %v3054, %v3046
        %v3079 = vpack.c.bf16 %v3055, %v3047
        %v3080 = vpack.c.bf16 %v3056, %v3048
        %v3081 = vpack.c.bf16 %v3057, %v3049
        %v3082 = vpack.c.bf16 %v3058, %v3050
        %v3083 = vpack.c.bf16 %v3059, %v3051
        %v3084 = vpack.c.bf16 %v3060, %v3052
        %v3085 = vpack.c.bf16 %v3061, %v3053
        %v3086 = vpack.c.bf16 %v3070, %v3062
        %v3087 = vpack.c.bf16 %v3071, %v3063
        %v3088 = vpack.c.bf16 %v3072, %v3064
        %v3089 = vpack.c.bf16 %v3073, %v3065
        %v3090 = vpack.c.bf16 %v3074, %v3066
        %v3091 = vpack.c.bf16 %v3075, %v3067
        %v3092 = vpack.c.bf16 %v3076, %v3068
        %v3093 = vpack.c.bf16 %v3077, %v3069
        %v3094 = vld [vmem:[#allocation19] sm:$0xf]
        %v3095 = vld [vmem:[#allocation19 + $0x4] sm:$0xf]
        %v3096 = vld [vmem:[#allocation19 + $0x8] sm:$0xf]
        %v3097 = vld [vmem:[#allocation19 + $0xc] sm:$0xf]
        %v3098 = vld [vmem:[#allocation19 + $0x10] sm:$0xf]
        %v3099 = vld [vmem:[#allocation19 + $0x14] sm:$0xf]
        %v3100 = vld [vmem:[#allocation19 + $0x18] sm:$0xf]
        %v3101 = vld [vmem:[#allocation19 + $0x1c] sm:$0xf]
        %v3102 = vld [vmem:[#allocation19 + $0x20] sm:$0xf]
        %v3103 = vld [vmem:[#allocation19 + $0x24] sm:$0xf]
        %v3104 = vld [vmem:[#allocation19 + $0x28] sm:$0xf]
        %v3105 = vld [vmem:[#allocation19 + $0x2c] sm:$0xf]
        %v3106 = vld [vmem:[#allocation19 + $0x30] sm:$0xf]
        %v3107 = vld [vmem:[#allocation19 + $0x34] sm:$0xf]
        %v3108 = vld [vmem:[#allocation19 + $0x38] sm:$0xf]
        %v3109 = vld [vmem:[#allocation19 + $0x3c] sm:$0xf]
        %v3110 = vld [vmem:[#allocation19 + $0x40] sm:$0xf]
        %v3111 = vld [vmem:[#allocation19 + $0x44] sm:$0xf]
        %v3112 = vld [vmem:[#allocation19 + $0x48] sm:$0xf]
        %v3113 = vld [vmem:[#allocation19 + $0x4c] sm:$0xf]
        %v3114 = vld [vmem:[#allocation19 + $0x50] sm:$0xf]
        %v3115 = vld [vmem:[#allocation19 + $0x54] sm:$0xf]
        %v3116 = vld [vmem:[#allocation19 + $0x58] sm:$0xf]
        %v3117 = vld [vmem:[#allocation19 + $0x5c] sm:$0xf]
        %v3118 = vld [vmem:[#allocation19 + $0x60] sm:$0xf]
        %v3119 = vld [vmem:[#allocation19 + $0x64] sm:$0xf]
        %v3120 = vld [vmem:[#allocation19 + $0x68] sm:$0xf]
        %v3121 = vld [vmem:[#allocation19 + $0x6c] sm:$0xf]
        %v3122 = vld [vmem:[#allocation19 + $0x70] sm:$0xf]
        %v3123 = vld [vmem:[#allocation19 + $0x74] sm:$0xf]
        %v3124 = vld [vmem:[#allocation19 + $0x78] sm:$0xf]
        %v3125 = vld [vmem:[#allocation19 + $0x7c] sm:$0xf]
        %v3126 = vld [vmem:[#allocation19 + $0x80] sm:$0xf]
        %v3127 = vld [vmem:[#allocation19 + $0x84] sm:$0xf]
        %v3128 = vld [vmem:[#allocation19 + $0x88] sm:$0xf]
        %v3129 = vld [vmem:[#allocation19 + $0x8c] sm:$0xf]
        %v3130 = vld [vmem:[#allocation19 + $0x90] sm:$0xf]
        %v3131 = vld [vmem:[#allocation19 + $0x94] sm:$0xf]
        %v3132 = vld [vmem:[#allocation19 + $0x98] sm:$0xf]
        %v3133 = vld [vmem:[#allocation19 + $0x9c] sm:$0xf]
        %v3134 = vld [vmem:[#allocation19 + $0xa0] sm:$0xf]
        %v3135 = vld [vmem:[#allocation19 + $0xa4] sm:$0xf]
        %v3136 = vld [vmem:[#allocation19 + $0xa8] sm:$0xf]
        %v3137 = vld [vmem:[#allocation19 + $0xac] sm:$0xf]
        %v3138 = vld [vmem:[#allocation19 + $0xb0] sm:$0xf]
        %v3139 = vld [vmem:[#allocation19 + $0xb4] sm:$0xf]
        %v3140 = vld [vmem:[#allocation19 + $0xb8] sm:$0xf]
        %v3141 = vld [vmem:[#allocation19 + $0xbc] sm:$0xf]
        %v3142 = vld [vmem:[#allocation19 + $0xc0] sm:$0xf]
        %v3143 = vld [vmem:[#allocation19 + $0xc4] sm:$0xf]
        %v3144 = vld [vmem:[#allocation19 + $0xc8] sm:$0xf]
        %v3145 = vld [vmem:[#allocation19 + $0xcc] sm:$0xf]
        %v3146 = vld [vmem:[#allocation19 + $0xd0] sm:$0xf]
        %v3147 = vld [vmem:[#allocation19 + $0xd4] sm:$0xf]
        %v3148 = vld [vmem:[#allocation19 + $0xd8] sm:$0xf]
        %v3149 = vld [vmem:[#allocation19 + $0xdc] sm:$0xf]
        %v3150 = vld [vmem:[#allocation19 + $0xe0] sm:$0xf]
        %v3151 = vld [vmem:[#allocation19 + $0xe4] sm:$0xf]
        %v3152 = vld [vmem:[#allocation19 + $0xe8] sm:$0xf]
        %v3153 = vld [vmem:[#allocation19 + $0xec] sm:$0xf]
        %v3154 = vld [vmem:[#allocation19 + $0xf0] sm:$0xf]
        %v3155 = vld [vmem:[#allocation19 + $0xf4] sm:$0xf]
        %v3156 = vld [vmem:[#allocation19 + $0xf8] sm:$0xf]
        %v3157 = vld [vmem:[#allocation19 + $0xfc] sm:$0xf]
        %v3158 = vld [vmem:[#allocation19 + $0x100] sm:$0xf]
        %v3159 = vld [vmem:[#allocation19 + $0x104] sm:$0xf]
        %v3160 = vld [vmem:[#allocation19 + $0x108] sm:$0xf]
        %v3161 = vld [vmem:[#allocation19 + $0x10c] sm:$0xf]
        %v3162 = vld [vmem:[#allocation19 + $0x110] sm:$0xf]
        %v3163 = vld [vmem:[#allocation19 + $0x114] sm:$0xf]
        %v3164 = vld [vmem:[#allocation19 + $0x118] sm:$0xf]
        %v3165 = vld [vmem:[#allocation19 + $0x11c] sm:$0xf]
        %v3166 = vld [vmem:[#allocation19 + $0x120] sm:$0xf]
        %v3167 = vld [vmem:[#allocation19 + $0x124] sm:$0xf]
        %v3168 = vld [vmem:[#allocation19 + $0x128] sm:$0xf]
        %v3169 = vld [vmem:[#allocation19 + $0x12c] sm:$0xf]
        %v3170 = vld [vmem:[#allocation19 + $0x130] sm:$0xf]
        %v3171 = vld [vmem:[#allocation19 + $0x134] sm:$0xf]
        %v3172 = vld [vmem:[#allocation19 + $0x138] sm:$0xf]
        %v3173 = vld [vmem:[#allocation19 + $0x13c] sm:$0xf]
        %v3174 = vld [vmem:[#allocation19 + $0x140] sm:$0xf]
        %v3175 = vld [vmem:[#allocation19 + $0x144] sm:$0xf]
        %v3176 = vld [vmem:[#allocation19 + $0x148] sm:$0xf]
        %v3177 = vld [vmem:[#allocation19 + $0x14c] sm:$0xf]
        %v3178 = vld [vmem:[#allocation19 + $0x150] sm:$0xf]
        %v3179 = vld [vmem:[#allocation19 + $0x154] sm:$0xf]
        %v3180 = vld [vmem:[#allocation19 + $0x158] sm:$0xf]
        %v3181 = vld [vmem:[#allocation19 + $0x15c] sm:$0xf]
        %v3182 = vld [vmem:[#allocation19 + $0x160] sm:$0xf]
        %v3183 = vld [vmem:[#allocation19 + $0x164] sm:$0xf]
        %v3184 = vld [vmem:[#allocation19 + $0x168] sm:$0xf]
        %v3185 = vld [vmem:[#allocation19 + $0x16c] sm:$0xf]
        %v3186 = vld [vmem:[#allocation19 + $0x170] sm:$0xf]
        %v3187 = vld [vmem:[#allocation19 + $0x174] sm:$0xf]
        %v3188 = vld [vmem:[#allocation19 + $0x178] sm:$0xf]
        %v3189 = vld [vmem:[#allocation19 + $0x17c] sm:$0xf]
        %v3190 = vld [vmem:[#allocation19 + $0x180] sm:$0xf]
        %v3191 = vld [vmem:[#allocation19 + $0x184] sm:$0xf]
        %v3192 = vld [vmem:[#allocation19 + $0x188] sm:$0xf]
        %v3193 = vld [vmem:[#allocation19 + $0x18c] sm:$0xf]
        %v3194 = vld [vmem:[#allocation19 + $0x190] sm:$0xf]
        %v3195 = vld [vmem:[#allocation19 + $0x194] sm:$0xf]
        %v3196 = vld [vmem:[#allocation19 + $0x198] sm:$0xf]
        %v3197 = vld [vmem:[#allocation19 + $0x19c] sm:$0xf]
        %v3198 = vld [vmem:[#allocation19 + $0x1a0] sm:$0xf]
        %v3199 = vld [vmem:[#allocation19 + $0x1a4] sm:$0xf]
        %v3200 = vld [vmem:[#allocation19 + $0x1a8] sm:$0xf]
        %v3201 = vld [vmem:[#allocation19 + $0x1ac] sm:$0xf]
        %v3202 = vld [vmem:[#allocation19 + $0x1b0] sm:$0xf]
        %v3203 = vld [vmem:[#allocation19 + $0x1b4] sm:$0xf]
        %v3204 = vld [vmem:[#allocation19 + $0x1b8] sm:$0xf]
        %v3205 = vld [vmem:[#allocation19 + $0x1bc] sm:$0xf]
        %v3206 = vld [vmem:[#allocation19 + $0x1c0] sm:$0xf]
        %v3207 = vld [vmem:[#allocation19 + $0x1c4] sm:$0xf]
        %v3208 = vld [vmem:[#allocation19 + $0x1c8] sm:$0xf]
        %v3209 = vld [vmem:[#allocation19 + $0x1cc] sm:$0xf]
        %v3210 = vld [vmem:[#allocation19 + $0x1d0] sm:$0xf]
        %v3211 = vld [vmem:[#allocation19 + $0x1d4] sm:$0xf]
        %v3212 = vld [vmem:[#allocation19 + $0x1d8] sm:$0xf]
        %v3213 = vld [vmem:[#allocation19 + $0x1dc] sm:$0xf]
        %v3214 = vld [vmem:[#allocation19 + $0x1e0] sm:$0xf]
        %v3215 = vld [vmem:[#allocation19 + $0x1e4] sm:$0xf]
        %v3216 = vld [vmem:[#allocation19 + $0x1e8] sm:$0xf]
        %v3217 = vld [vmem:[#allocation19 + $0x1ec] sm:$0xf]
        %v3218 = vld [vmem:[#allocation19 + $0x1f0] sm:$0xf]
        %v3219 = vld [vmem:[#allocation19 + $0x1f4] sm:$0xf]
        %v3220 = vld [vmem:[#allocation19 + $0x1f8] sm:$0xf]
        %v3221 = vld [vmem:[#allocation19 + $0x1fc] sm:$0xf]
        %v3222 = vld [vmem:[%s9] sm:$0x1]
        %v3224 = vperm.slane %v3222, 0
        %v3354 = vunpack.c.l.b16 %v3094
        %v3355 = vunpack.c.l.b16 %v3095
        %v3356 = vunpack.c.l.b16 %v3096
        %v3357 = vunpack.c.l.b16 %v3097
        %v3358 = vunpack.c.l.b16 %v3098
        %v3359 = vunpack.c.l.b16 %v3099
        %v3360 = vunpack.c.l.b16 %v3100
        %v3361 = vunpack.c.l.b16 %v3101
        %v3362 = vunpack.c.l.b16 %v3102
        %v3363 = vunpack.c.l.b16 %v3103
        %v3364 = vunpack.c.l.b16 %v3104
        %v3365 = vunpack.c.l.b16 %v3105
        %v3366 = vunpack.c.l.b16 %v3106
        %v3367 = vunpack.c.l.b16 %v3107
        %v3368 = vunpack.c.l.b16 %v3108
        %v3369 = vunpack.c.l.b16 %v3109
        %v3370 = vunpack.c.l.b16 %v3110
        %v3371 = vunpack.c.l.b16 %v3111
        %v3372 = vunpack.c.l.b16 %v3112
        %v3373 = vunpack.c.l.b16 %v3113
        %v3374 = vunpack.c.l.b16 %v3114
        %v3375 = vunpack.c.l.b16 %v3115
        %v3376 = vunpack.c.l.b16 %v3116
        %v3377 = vunpack.c.l.b16 %v3117
        %v3378 = vunpack.c.l.b16 %v3118
        %v3379 = vunpack.c.l.b16 %v3119
        %v3380 = vunpack.c.l.b16 %v3120
        %v3381 = vunpack.c.l.b16 %v3121
        %v3382 = vunpack.c.l.b16 %v3122
        %v3383 = vunpack.c.l.b16 %v3123
        %v3384 = vunpack.c.l.b16 %v3124
        %v3385 = vunpack.c.l.b16 %v3125
        %v3386 = vunpack.c.l.b16 %v3126
        %v3387 = vunpack.c.l.b16 %v3127
        %v3388 = vunpack.c.l.b16 %v3128
        %v3389 = vunpack.c.l.b16 %v3129
        %v3390 = vunpack.c.l.b16 %v3130
        %v3391 = vunpack.c.l.b16 %v3131
        %v3392 = vunpack.c.l.b16 %v3132
        %v3393 = vunpack.c.l.b16 %v3133
        %v3394 = vunpack.c.l.b16 %v3134
        %v3395 = vunpack.c.l.b16 %v3135
        %v3396 = vunpack.c.l.b16 %v3136
        %v3397 = vunpack.c.l.b16 %v3137
        %v3398 = vunpack.c.l.b16 %v3138
        %v3399 = vunpack.c.l.b16 %v3139
        %v3400 = vunpack.c.l.b16 %v3140
        %v3401 = vunpack.c.l.b16 %v3141
        %v3402 = vunpack.c.l.b16 %v3142
        %v3403 = vunpack.c.l.b16 %v3143
        %v3404 = vunpack.c.l.b16 %v3144
        %v3405 = vunpack.c.l.b16 %v3145
        %v3406 = vunpack.c.l.b16 %v3146
        %v3407 = vunpack.c.l.b16 %v3147
        %v3408 = vunpack.c.l.b16 %v3148
        %v3409 = vunpack.c.l.b16 %v3149
        %v3410 = vunpack.c.l.b16 %v3150
        %v3411 = vunpack.c.l.b16 %v3151
        %v3412 = vunpack.c.l.b16 %v3152
        %v3413 = vunpack.c.l.b16 %v3153
        %v3414 = vunpack.c.l.b16 %v3154
        %v3415 = vunpack.c.l.b16 %v3155
        %v3416 = vunpack.c.l.b16 %v3156
        %v3417 = vunpack.c.l.b16 %v3157
        %v3418 = vunpack.c.l.b16 %v3158
        %v3419 = vunpack.c.l.b16 %v3159
        %v3420 = vunpack.c.l.b16 %v3160
        %v3421 = vunpack.c.l.b16 %v3161
        %v3422 = vunpack.c.l.b16 %v3162
        %v3423 = vunpack.c.l.b16 %v3163
        %v3424 = vunpack.c.l.b16 %v3164
        %v3425 = vunpack.c.l.b16 %v3165
        %v3426 = vunpack.c.l.b16 %v3166
        %v3427 = vunpack.c.l.b16 %v3167
        %v3428 = vunpack.c.l.b16 %v3168
        %v3429 = vunpack.c.l.b16 %v3169
        %v3430 = vunpack.c.l.b16 %v3170
        %v3431 = vunpack.c.l.b16 %v3171
        %v3432 = vunpack.c.l.b16 %v3172
        %v3433 = vunpack.c.l.b16 %v3173
        %v3434 = vunpack.c.l.b16 %v3174
        %v3435 = vunpack.c.l.b16 %v3175
        %v3436 = vunpack.c.l.b16 %v3176
        %v3437 = vunpack.c.l.b16 %v3177
        %v3438 = vunpack.c.l.b16 %v3178
        %v3439 = vunpack.c.l.b16 %v3179
        %v3440 = vunpack.c.l.b16 %v3180
        %v3441 = vunpack.c.l.b16 %v3181
        %v3442 = vunpack.c.l.b16 %v3182
        %v3443 = vunpack.c.l.b16 %v3183
        %v3444 = vunpack.c.l.b16 %v3184
        %v3445 = vunpack.c.l.b16 %v3185
        %v3446 = vunpack.c.l.b16 %v3186
        %v3447 = vunpack.c.l.b16 %v3187
        %v3448 = vunpack.c.l.b16 %v3188
        %v3449 = vunpack.c.l.b16 %v3189
        %v3450 = vunpack.c.l.b16 %v3190
        %v3451 = vunpack.c.l.b16 %v3191
        %v3452 = vunpack.c.l.b16 %v3192
        %v3453 = vunpack.c.l.b16 %v3193
        %v3454 = vunpack.c.l.b16 %v3194
        %v3455 = vunpack.c.l.b16 %v3195
        %v3456 = vunpack.c.l.b16 %v3196
        %v3457 = vunpack.c.l.b16 %v3197
        %v3458 = vunpack.c.l.b16 %v3198
        %v3459 = vunpack.c.l.b16 %v3199
        %v3460 = vunpack.c.l.b16 %v3200
        %v3461 = vunpack.c.l.b16 %v3201
        %v3462 = vunpack.c.l.b16 %v3202
        %v3463 = vunpack.c.l.b16 %v3203
        %v3464 = vunpack.c.l.b16 %v3204
        %v3465 = vunpack.c.l.b16 %v3205
        %v3466 = vunpack.c.l.b16 %v3206
        %v3467 = vunpack.c.l.b16 %v3207
        %v3468 = vunpack.c.l.b16 %v3208
        %v3469 = vunpack.c.l.b16 %v3209
        %v3470 = vunpack.c.l.b16 %v3210
        %v3471 = vunpack.c.l.b16 %v3211
        %v3472 = vunpack.c.l.b16 %v3212
        %v3473 = vunpack.c.l.b16 %v3213
        %v3474 = vunpack.c.l.b16 %v3214
        %v3475 = vunpack.c.l.b16 %v3215
        %v3476 = vunpack.c.l.b16 %v3216
        %v3477 = vunpack.c.l.b16 %v3217
        %v3478 = vunpack.c.l.b16 %v3218
        %v3479 = vunpack.c.l.b16 %v3219
        %v3480 = vunpack.c.l.b16 %v3220
        %v3481 = vunpack.c.l.b16 %v3221
        %v3482 = vpack.c.b16 %v3355, %v3354
        %v3483 = vpack.c.b16 %v3357, %v3356
        %v3484 = vpack.c.b16 %v3359, %v3358
        %v3485 = vpack.c.b16 %v3361, %v3360
        %v3486 = vpack.c.b16 %v3363, %v3362
        %v3487 = vpack.c.b16 %v3365, %v3364
        %v3488 = vpack.c.b16 %v3367, %v3366
        %v3489 = vpack.c.b16 %v3369, %v3368
        %v3490 = vpack.c.b16 %v3371, %v3370
        %v3491 = vpack.c.b16 %v3373, %v3372
        %v3492 = vpack.c.b16 %v3375, %v3374
        %v3493 = vpack.c.b16 %v3377, %v3376
        %v3494 = vpack.c.b16 %v3379, %v3378
        %v3495 = vpack.c.b16 %v3381, %v3380
        %v3496 = vpack.c.b16 %v3383, %v3382
        %v3497 = vpack.c.b16 %v3385, %v3384
        %v3498 = vpack.c.b16 %v3387, %v3386
        %v3499 = vpack.c.b16 %v3389, %v3388
        %v3500 = vpack.c.b16 %v3391, %v3390
        %v3501 = vpack.c.b16 %v3393, %v3392
        %v3502 = vpack.c.b16 %v3395, %v3394
        %v3503 = vpack.c.b16 %v3397, %v3396
        %v3504 = vpack.c.b16 %v3399, %v3398
        %v3505 = vpack.c.b16 %v3401, %v3400
        %v3506 = vpack.c.b16 %v3403, %v3402
        %v3507 = vpack.c.b16 %v3405, %v3404
        %v3508 = vpack.c.b16 %v3407, %v3406
        %v3509 = vpack.c.b16 %v3409, %v3408
        %v3510 = vpack.c.b16 %v3411, %v3410
        %v3511 = vpack.c.b16 %v3413, %v3412
        %v3512 = vpack.c.b16 %v3415, %v3414
        %v3513 = vpack.c.b16 %v3417, %v3416
        %v3514 = vpack.c.b16 %v3419, %v3418
        %v3515 = vpack.c.b16 %v3421, %v3420
        %v3516 = vpack.c.b16 %v3423, %v3422
        %v3517 = vpack.c.b16 %v3425, %v3424
        %v3518 = vpack.c.b16 %v3427, %v3426
        %v3519 = vpack.c.b16 %v3429, %v3428
        %v3520 = vpack.c.b16 %v3431, %v3430
        %v3521 = vpack.c.b16 %v3433, %v3432
        %v3522 = vpack.c.b16 %v3435, %v3434
        %v3523 = vpack.c.b16 %v3437, %v3436
        %v3524 = vpack.c.b16 %v3439, %v3438
        %v3525 = vpack.c.b16 %v3441, %v3440
        %v3526 = vpack.c.b16 %v3443, %v3442
        %v3527 = vpack.c.b16 %v3445, %v3444
        %v3528 = vpack.c.b16 %v3447, %v3446
        %v3529 = vpack.c.b16 %v3449, %v3448
        %v3530 = vpack.c.b16 %v3451, %v3450
        %v3531 = vpack.c.b16 %v3453, %v3452
        %v3532 = vpack.c.b16 %v3455, %v3454
        %v3533 = vpack.c.b16 %v3457, %v3456
        %v3534 = vpack.c.b16 %v3459, %v3458
        %v3535 = vpack.c.b16 %v3461, %v3460
        %v3536 = vpack.c.b16 %v3463, %v3462
        %v3537 = vpack.c.b16 %v3465, %v3464
        %v3538 = vpack.c.b16 %v3467, %v3466
        %v3539 = vpack.c.b16 %v3469, %v3468
        %v3540 = vpack.c.b16 %v3471, %v3470
        %v3541 = vpack.c.b16 %v3473, %v3472
        %v3542 = vpack.c.b16 %v3475, %v3474
        %v3543 = vpack.c.b16 %v3477, %v3476
        %v3544 = vpack.c.b16 %v3479, %v3478
        %v3545 = vpack.c.b16 %v3481, %v3480
        %3610 = vmatpush.bf16.msra.mxu0 %v3489
        %3611 = vmatpush.bf16.msra.mxu0 %v3488
        %3612 = vmatpush.bf16.msra.mxu0 %v3487
        %3613 = vmatpush.bf16.msra.mxu0 %v3486
        %3614 = vmatpush.bf16.msra.mxu0 %v3485
        %3615 = vmatpush.bf16.msra.mxu0 %v3484
        %3616 = vmatpush.bf16.msra.mxu0 %v3483
        %3617 = vmatpush.bf16.msra.mxu0 %v3482
        %3618 = vmatmul.bf16.gmra.mxu0 %v3078
        %v3619 = vpop.f32.mrf.mxu0
        %v3620 = vadd.f32 %v3224, %v3619
        %v3621 = vpop.f32.mrf.mxu0
        %v3622 = vadd.f32 %v3224, %v3621
        %3623 = vmatmul.bf16.gmra.mxu0 %v3086
        %v3624 = vpop.f32.mrf.mxu0
        %v3625 = vadd.f32 %v3224, %v3624
        %v3626 = vpop.f32.mrf.mxu0
        %v3627 = vadd.f32 %v3224, %v3626
        %3628 = vdwg.mxu0
        %3629 = vmatpush.bf16.msra.mxu0 %v3497
        %3630 = vmatpush.bf16.msra.mxu0 %v3496
        %3631 = vmatpush.bf16.msra.mxu0 %v3495
        %3632 = vmatpush.bf16.msra.mxu0 %v3494
        %3633 = vmatpush.bf16.msra.mxu0 %v3493
        %3634 = vmatpush.bf16.msra.mxu0 %v3492
        %3635 = vmatpush.bf16.msra.mxu0 %v3491
        %3636 = vmatpush.bf16.msra.mxu0 %v3490
        %3637 = vmatmul.bf16.gmra.mxu0 %v3079
        %v3638 = vpop.f32.mrf.mxu0
        %v3639 = vadd.f32 %v3620, %v3638
        %v3640 = vpop.f32.mrf.mxu0
        %v3641 = vadd.f32 %v3622, %v3640
        %3642 = vmatmul.bf16.gmra.mxu0 %v3087
        %v3643 = vpop.f32.mrf.mxu0
        %v3644 = vadd.f32 %v3625, %v3643
        %v3645 = vpop.f32.mrf.mxu0
        %v3646 = vadd.f32 %v3627, %v3645
        %3647 = vdwg.mxu0
        %3648 = vmatpush.bf16.msra.mxu0 %v3505
        %3649 = vmatpush.bf16.msra.mxu0 %v3504
        %3650 = vmatpush.bf16.msra.mxu0 %v3503
        %3651 = vmatpush.bf16.msra.mxu0 %v3502
        %3652 = vmatpush.bf16.msra.mxu0 %v3501
        %3653 = vmatpush.bf16.msra.mxu0 %v3500
        %3654 = vmatpush.bf16.msra.mxu0 %v3499
        %3655 = vmatpush.bf16.msra.mxu0 %v3498
        %3656 = vmatmul.bf16.gmra.mxu0 %v3080
        %v3657 = vpop.f32.mrf.mxu0
        %v3658 = vadd.f32 %v3639, %v3657
        %v3659 = vpop.f32.mrf.mxu0
        %v3660 = vadd.f32 %v3641, %v3659
        %3661 = vmatmul.bf16.gmra.mxu0 %v3088
        %v3662 = vpop.f32.mrf.mxu0
        %v3663 = vadd.f32 %v3644, %v3662
        %v3664 = vpop.f32.mrf.mxu0
        %v3665 = vadd.f32 %v3646, %v3664
        %3666 = vdwg.mxu0
        %3667 = vmatpush.bf16.msra.mxu0 %v3513
        %3668 = vmatpush.bf16.msra.mxu0 %v3512
        %3669 = vmatpush.bf16.msra.mxu0 %v3511
        %3670 = vmatpush.bf16.msra.mxu0 %v3510
        %3671 = vmatpush.bf16.msra.mxu0 %v3509
        %3672 = vmatpush.bf16.msra.mxu0 %v3508
        %3673 = vmatpush.bf16.msra.mxu0 %v3507
        %3674 = vmatpush.bf16.msra.mxu0 %v3506
        %3675 = vmatmul.bf16.gmra.mxu0 %v3081
        %v3676 = vpop.f32.mrf.mxu0
        %v3677 = vadd.f32 %v3658, %v3676
        %v3678 = vpop.f32.mrf.mxu0
        %v3679 = vadd.f32 %v3660, %v3678
        %3680 = vmatmul.bf16.gmra.mxu0 %v3089
        %v3681 = vpop.f32.mrf.mxu0
        %v3682 = vadd.f32 %v3663, %v3681
        %v3683 = vpop.f32.mrf.mxu0
        %v3684 = vadd.f32 %v3665, %v3683
        %3685 = vdwg.mxu0
        %3686 = vmatpush.bf16.msra.mxu0 %v3521
        %3687 = vmatpush.bf16.msra.mxu0 %v3520
        %3688 = vmatpush.bf16.msra.mxu0 %v3519
        %3689 = vmatpush.bf16.msra.mxu0 %v3518
        %3690 = vmatpush.bf16.msra.mxu0 %v3517
        %3691 = vmatpush.bf16.msra.mxu0 %v3516
        %3692 = vmatpush.bf16.msra.mxu0 %v3515
        %3693 = vmatpush.bf16.msra.mxu0 %v3514
        %3694 = vmatmul.bf16.gmra.mxu0 %v3082
        %v3695 = vpop.f32.mrf.mxu0
        %v3696 = vadd.f32 %v3677, %v3695
        %v3697 = vpop.f32.mrf.mxu0
        %v3698 = vadd.f32 %v3679, %v3697
        %3699 = vmatmul.bf16.gmra.mxu0 %v3090
        %v3700 = vpop.f32.mrf.mxu0
        %v3701 = vadd.f32 %v3682, %v3700
        %v3702 = vpop.f32.mrf.mxu0
        %v3703 = vadd.f32 %v3684, %v3702
        %3704 = vdwg.mxu0
        %3705 = vmatpush.bf16.msra.mxu0 %v3529
        %3706 = vmatpush.bf16.msra.mxu0 %v3528
        %3707 = vmatpush.bf16.msra.mxu0 %v3527
        %3708 = vmatpush.bf16.msra.mxu0 %v3526
        %3709 = vmatpush.bf16.msra.mxu0 %v3525
        %3710 = vmatpush.bf16.msra.mxu0 %v3524
        %3711 = vmatpush.bf16.msra.mxu0 %v3523
        %3712 = vmatpush.bf16.msra.mxu0 %v3522
        %3713 = vmatmul.bf16.gmra.mxu0 %v3083
        %v3714 = vpop.f32.mrf.mxu0
        %v3715 = vadd.f32 %v3696, %v3714
        %v3716 = vpop.f32.mrf.mxu0
        %v3717 = vadd.f32 %v3698, %v3716
        %3718 = vmatmul.bf16.gmra.mxu0 %v3091
        %v3719 = vpop.f32.mrf.mxu0
        %v3720 = vadd.f32 %v3701, %v3719
        %v3721 = vpop.f32.mrf.mxu0
        %v3722 = vadd.f32 %v3703, %v3721
        %3723 = vdwg.mxu0
        %3724 = vmatpush.bf16.msra.mxu0 %v3537
        %3725 = vmatpush.bf16.msra.mxu0 %v3536
        %3726 = vmatpush.bf16.msra.mxu0 %v3535
        %3727 = vmatpush.bf16.msra.mxu0 %v3534
        %3728 = vmatpush.bf16.msra.mxu0 %v3533
        %3729 = vmatpush.bf16.msra.mxu0 %v3532
        %3730 = vmatpush.bf16.msra.mxu0 %v3531
        %3731 = vmatpush.bf16.msra.mxu0 %v3530
        %3732 = vmatmul.bf16.gmra.mxu0 %v3084
        %v3733 = vpop.f32.mrf.mxu0
        %v3734 = vadd.f32 %v3715, %v3733
        %v3735 = vpop.f32.mrf.mxu0
        %v3736 = vadd.f32 %v3717, %v3735
        %3737 = vmatmul.bf16.gmra.mxu0 %v3092
        %v3738 = vpop.f32.mrf.mxu0
        %v3739 = vadd.f32 %v3720, %v3738
        %v3740 = vpop.f32.mrf.mxu0
        %v3741 = vadd.f32 %v3722, %v3740
        %3742 = vdwg.mxu0
        %3743 = vmatpush.bf16.msra.mxu0 %v3545
        %3744 = vmatpush.bf16.msra.mxu0 %v3544
        %3745 = vmatpush.bf16.msra.mxu0 %v3543
        %3746 = vmatpush.bf16.msra.mxu0 %v3542
        %3747 = vmatpush.bf16.msra.mxu0 %v3541
        %3748 = vmatpush.bf16.msra.mxu0 %v3540
        %3749 = vmatpush.bf16.msra.mxu0 %v3539
        %3750 = vmatpush.bf16.msra.mxu0 %v3538
        %3751 = vmatmul.bf16.gmra.mxu0 %v3085
        %v3752 = vpop.f32.mrf.mxu0
        %v3753 = vadd.f32 %v3734, %v3752
        %v3754 = vpop.f32.mrf.mxu0
        %v3755 = vadd.f32 %v3736, %v3754
        %3756 = vmatmul.bf16.gmra.mxu0 %v3093
        %v3757 = vpop.f32.mrf.mxu0
        %v3758 = vadd.f32 %v3739, %v3757
        %v3759 = vpop.f32.mrf.mxu0
        %v3760 = vadd.f32 %v3741, %v3759
        %3761 = vdwg.mxu0
        %v3762 = vmax.f32 %v3753, 0.0
        %v3763 = vmax.f32 %v3755, 0.0
        %v3764 = vmax.f32 %v3758, 0.0
        %v3765 = vmax.f32 %v3760, 0.0
        %v3766 = vmin.f32 %v3753, 0.0
        %v3767 = vmin.f32 %v3755, 0.0
        %v3768 = vmin.f32 %v3758, 0.0
        %v3769 = vmin.f32 %v3760, 0.0
        %v3770 = vmul.f32 %v3013, %v3766
        %v3771 = vmul.f32 %v3013, %v3767
        %v3772 = vmul.f32 %v3013, %v3768
        %v3773 = vmul.f32 %v3013, %v3769
        %v3774 = vadd.f32 %v3762, %v3770
        %v3775 = vadd.f32 %v3763, %v3771
        %v3776 = vadd.f32 %v3764, %v3772
        %v3777 = vadd.f32 %v3765, %v3773
        %3778 = vst [vmem:[%s511] sm:$0xff] %v3774
        %3779 = vst [vmem:[%s511 + $0x8] sm:$0xff] %v3775
        %3780 = vst [vmem:[%s511 + $0x10] sm:$0xff] %v3776
        %3781 = vst [vmem:[%s511 + $0x18] sm:$0xff] %v3777
        %s3782 = sand.u32 %s271, 1
        %s3783 = scalar_lea.sflag [#allocation9], %s3782
        %s3784 = sand.u32 %s271, 1
        %s3785 = smul.addr %s3784, 32
        %s3786 = scalar_lea.vmem [#allocation21], %s3785
        // Predicated region
        $region97: #{tpu_custom_call.1} parent=59 // pred_check
          %p3787 = pneg %p281
        $region98: #{tpu_custom_call.1} parent=59 // pred_check_branch
          %3789 = sbr.rel (%p3787) target = $region100
        $region99: #{tpu_custom_call.1} parent=59 // pred_region
          %s3790 = smul.u32 4, %s37
          %3792 = vsyncadd %s3783, 0
          %s3793 = sadd.s32 %s36, %s3790
          %s3794 = smul.addr %s3793, 8
          %s3795 = scalar_lea.hbm %s10, %s3794
          %s3796 = sshll.u32 %s3786, 4
          %s3797 = int_to_ptr.vmem [resolvable:$true] %s3796
          %s3798 = sshll.u32 %s3795, 4
          %s3799 = int_to_ptr.hbm [resolvable:$true] %s3798
          %3804 = dma.vmem_to_hbm [thread:$0]  %s3797, 512, %s3799, %s3783, 128, 128, 8
        $region100: #{tpu_custom_call.1} parent=59 // pred_fallthru
          _
      $region60: #{tpu_custom_call.1} parent=5 // pred_fallthru
        _
      %p3805 = scmp.le.s32.totalorder 2, %s27
      // Predicated region
      $region101: #{tpu_custom_call.1} parent=5 // pred_check
        %p3806 = pneg %p3805
      $region102: #{tpu_custom_call.1} parent=5 // pred_check_branch
        %3808 = sbr.rel (%p3806) target = $region104
      $region103: #{tpu_custom_call.1} parent=5 // pred_region
        %s3809 = ssub.s32 %s27, 2
        // Predicated region
        $region105: #{tpu_custom_call.1} parent=103 // pred_check
          %p3810 = pneg %p287
        $region106: #{tpu_custom_call.1} parent=103 // pred_check_branch
          %3812 = sbr.rel (%p3810) target = $region108
        $region107: #{tpu_custom_call.1} parent=103 // pred_region
          %s3813 = sand.u32 %s272, 1
          %s3814 = scalar_lea.sflag [#allocation9], %s3813
          %s3815 = sand.u32 %s272, 1
          %s3816 = smul.addr %s3815, 32
          %s3817 = scalar_lea.vmem [#allocation21], %s3816
          %3819 = dma.done %s3814, 512
        $region108: #{tpu_custom_call.1} parent=103 // pred_fallthru
          _
      $region104: #{tpu_custom_call.1} parent=5 // pred_fallthru
        _
    $region6: #{tpu_custom_call.1} parent=1 // loop_footer
      %s31 = sadd.s32 1, %s27
    $region7: #{tpu_custom_call.1} parent=1 // loop_footer_branch
      %26 = sbr.rel target = $region3
    $region8: #{tpu_custom_call.1} parent=1 // loop_exit
      _
    %3820 = vsyncpa [#allocation8], 1
    %s3821 = scalar_lea.sflag [#allocation8], 1
    %3822 = vsyncpa %s3821, 1
    %3823 = vsyncpa [#allocation11], 1
    %3824 = vsyncpa [#allocation14], 1
    %3825 = vsyncpa [#allocation17], 1
    %3826 = vsyncpa [#allocation20], 1
    %3827 = vsyncpa [#allocation9], 1
    %s3828 = scalar_lea.sflag [#allocation9], 1
    %3829 = vsyncpa %s3828, 1

</llo_original>
